<compile_context>
chip_gen: v6e
topology: v6e:2x2x1
jax: 0.10.0
libtpu: 0.0.40
codegen_flags: <defaults>
</compile_context>

<pallas_src>
import functools
import math

import jax
import jax.numpy as jnp
from jax.experimental import pallas as pl
from jax.experimental.pallas import tpu as pltpu


# ----------------------------------------------------------------------------
# small helpers
# ----------------------------------------------------------------------------
def _round_up(x, m):
    return ((x + m - 1) // m) * m


def _const_spec(a):
    # full-array block, constant block index -> resident across the grid
    nd = a.ndim
    return pl.BlockSpec(a.shape, lambda i, _nd=nd: (0,) * _nd)


def _vmem_budget():
    """(vmem_limit_bytes, multi_tensorcore?) for the current chip."""
    cap = 128 * 1024 * 1024
    try:
        cap = int(pltpu.get_tpu_info().vmem_capacity_bytes)
    except Exception:
        pass
    multi_tc = cap <= 64 * 1024 * 1024          # v7x-like: 64 MiB per TC
    try:
        if "v7" in jax.devices()[0].device_kind.lower():
            multi_tc = True
    except Exception:
        pass
    vlim = int(min(cap * 3 // 4, 100 * 1024 * 1024))
    return vlim, multi_tc


def _choose_tb(B, L, Dp, H, NB, vmem_limit, multi_tc):
    """Batch tile per grid step, sized against the chip's VMEM budget.

    Constraints: B % TB == 0 and (TB == B or TB % 8 == 0) so the (TB, L)
    logits output block keeps a legal second-minor size.  Single-TC chips
    (v5e/v6e) want the LARGEST TB that fits (the grid is a serial loop);
    dual-TC low-VMEM chips (v7x) additionally prefer >= 2 grid steps so the
    "parallel" batch axis can be sharded across TensorCores.
    """
    cands = [tb for tb in range(1, B + 1)
             if B % tb == 0 and (tb == B or tb % 8 == 0)]
    budget = int(vmem_limit * 0.75)
    # resident constants (double-buffered by default) + causal mask
    wts = NB * (5 * Dp * Dp * 2 + 12 * Dp * 4) * 2 + L * L * 4 * 2

    def est(tb):
        m = tb * L
        io = (3 * tb * L * Dp * 4 + 2 * tb * L * 4) * 2     # pipelined act/logits
        act = 10 * m * Dp * 4                                # live f32 temporaries
        attn = 3 * tb * L * L * 4 + tb * L * Dp * 4          # softmax intermediates
        return io + act + attn + wts

    fits = [tb for tb in cands if est(tb) <= budget and tb * L <= 16384]
    if multi_tc:
        two_step = [tb for tb in fits if B // tb >= 2]
        if two_step:
            fits = two_step
    return max(fits) if fits else min(cands)


# ----------------------------------------------------------------------------
# Pallas kernel: ALL transformer blocks + final layernorm + pos/neg logits
# ----------------------------------------------------------------------------
def sasrec_fused_kernel(x_ref, pos_ref, neg_ref, causal_ref,
                        ln1g_ref, ln1b_ref, wq_ref, wk_ref, wv_ref,
                        bq_ref, bk_ref, bv_ref, wo_ref, bo_ref,
                        ln2g_ref, ln2b_ref, w1t_ref, b1_ref, w2t_ref, b2_ref,
                        lastg_ref, lastb_ref,
                        plog_ref, nlog_ref,
                        *, num_heads, num_blocks, true_d):
    f32, bf16 = jnp.float32, jnp.bfloat16

    x = x_ref[...]                                   # (TB, L, Dp) f32, pad lanes == 0
    TB, L, Dp = x.shape
    H = num_heads
    hd = true_d // H
    M = TB * L
    inv_d = 1.0 / float(true_d)

    # lane mask so LayerNorm statistics use the TRUE hidden dim (pad lanes
    # stay exactly zero end-to-end: weights/gains/biases are zero-padded).
    lane = jax.lax.broadcasted_iota(jnp.int32, (1, Dp), 1)
    dmask = (lane < true_d).astype(f32)

    def layernorm(v, g, b, eps=1e-8):
        mu = jnp.sum(v, axis=-1, keepdims=True) * inv_d
        vc = (v - mu) * dmask
        var = jnp.sum(vc * vc, axis=-1, keepdims=True) * inv_d
        return vc * jax.lax.rsqrt(var + eps) * g + b

    causal = causal_ref[...][None, :, :]             # (1, L, L) additive mask
    x2 = x.reshape(M, Dp)

    for i in range(num_blocks):
        q_ln = layernorm(x2, ln1g_ref[i], ln1b_ref[i])

        # Full-width in-projections (N = Dp); 1/sqrt(hd) already folded into
        # wq/bq in the wrapper.  Q uses the layernormed input, K/V the raw
        # input (exactly as in the PyTorch code).
        q = jnp.dot(q_ln.astype(bf16), wq_ref[i],
                    preferred_element_type=f32) + bq_ref[i]
        k = jnp.dot(x2.astype(bf16), wk_ref[i],
                    preferred_element_type=f32) + bk_ref[i]
        v = jnp.dot(x2.astype(bf16), wv_ref[i],
                    preferred_element_type=f32) + bv_ref[i]

        attn = None
        for h in range(H):                           # static per-head loop
            lo, hi = h * hd, (h + 1) * hd
            qh = q[:, lo:hi].reshape(TB, L, hd).astype(bf16)
            kh = k[:, lo:hi].reshape(TB, L, hd).astype(bf16)
            vh = v[:, lo:hi].reshape(TB, L, hd).astype(bf16)

            s = jnp.einsum('bqd,bkd->bqk', qh, kh,
                           preferred_element_type=f32) + causal   # (TB, L, L)
            m = jnp.max(s, axis=-1, keepdims=True)
            e = jnp.exp(s - m)
            p = e * pl.reciprocal(jnp.sum(e, axis=-1, keepdims=True), approx=True)

            ctx = jnp.einsum('bqk,bkd->bqd', p.astype(bf16), vh,
                             preferred_element_type=f32)          # (TB, L, hd)
            # per-head slice of the out-projection, full output width (Dp)
            proj = jnp.dot(ctx.reshape(M, hd).astype(bf16), wo_ref[i, h],
                           preferred_element_type=f32)            # (M, Dp)
            attn = proj if attn is None else attn + proj
        attn = attn + bo_ref[i]

        # residual uses the layernormed query (as in the PyTorch code)
        h1 = q_ln + attn

        # forward layernorm + point-wise feed-forward (Conv1d k=1 == linear)
        y = layernorm(h1, ln2g_ref[i], ln2b_ref[i])
        z = jnp.dot(y.astype(bf16), w1t_ref[i],
                    preferred_element_type=f32) + b1_ref[i]
        z = jnp.maximum(z, 0.0)
        z = jnp.dot(z.astype(bf16), w2t_ref[i],
                    preferred_element_type=f32) + b2_ref[i]
        x2 = z + y                                   # PWFF residual adds its own input

    # fused epilogue: last layernorm + pos/neg logits (dot over hidden dim)
    feats = layernorm(x2, lastg_ref[...], lastb_ref[...]).reshape(TB, L, Dp)
    plog_ref[...] = jnp.sum(feats * pos_ref[...], axis=-1)
    nlog_ref[...] = jnp.sum(feats * neg_ref[...], axis=-1)


# ----------------------------------------------------------------------------
# one-time layout prep (hoisted out of the forward path)
# ----------------------------------------------------------------------------
def prepare_params(params, num_heads):
    item_emb = params["item_emb"]
    pos_emb = params["pos_emb"]
    D = int(item_emb.shape[1])
    Dp = _round_up(D, 128)
    H = num_heads
    hd = D // H
    scale = 1.0 / math.sqrt(hd)
    f32, bf16 = jnp.float32, jnp.bfloat16

    def pad_cols(a):                     # zero-pad last dim to Dp
        return jnp.pad(a, [(0, 0)] * (a.ndim - 1) + [(0, Dp - a.shape[-1])])

    def pad_mat(a):                      # (D, D) -> (Dp, Dp), zero padded
        return jnp.pad(a, ((0, Dp - a.shape[0]), (0, Dp - a.shape[1])))

    cols = {n: [] for n in ("ln1g", "ln1b", "wq", "wk", "wv", "bq", "bk", "bv",
                            "wo", "bo", "ln2g", "ln2b", "w1t", "b1", "w2t", "b2")}
    for p in params["blocks"]:
        ipw = p["in_proj_w"]                         # (3D, D): rows = out features
        ipb = p["in_proj_b"].reshape(-1)             # (3D,)
        cols["ln1g"].append(pad_cols(p["ln1_g"].reshape(1, D)))
        cols["ln1b"].append(pad_cols(p["ln1_b"].reshape(1, D)))
        cols["wq"].append(pad_mat(ipw[0:D].T * scale))        # scale folded in
        cols["wk"].append(pad_mat(ipw[D:2 * D].T))
        cols["wv"].append(pad_mat(ipw[2 * D:3 * D].T))
        cols["bq"].append(pad_cols((ipb[0:D] * scale).reshape(1, D)))
        cols["bk"].append(pad_cols(ipb[D:2 * D].reshape(1, D)))
        cols["bv"].append(pad_cols(ipb[2 * D:3 * D].reshape(1, D)))
        # out-projection: per-head rows of Wo^T, output columns padded to Dp
        cols["wo"].append(pad_cols(p["out_proj_w"].T).reshape(H, hd, Dp))
        cols["bo"].append(pad_cols(p["out_proj_b"].reshape(1, D)))
        cols["ln2g"].append(pad_cols(p["ln2_g"].reshape(1, D)))
        cols["ln2b"].append(pad_cols(p["ln2_b"].reshape(1, D)))
        cols["w1t"].append(pad_mat(p["w1"].T))
        cols["b1"].append(pad_cols(p["b1"].reshape(1, D)))
        cols["w2t"].append(pad_mat(p["w2"].T))
        cols["b2"].append(pad_cols(p["b2"].reshape(1, D)))

    def st(name, dt):
        return jnp.stack(cols[name], axis=0).astype(dt)

    consts = (
        st("ln1g", f32), st("ln1b", f32),
        st("wq", bf16), st("wk", bf16), st("wv", bf16),
        st("bq", f32), st("bk", f32), st("bv", f32),
        st("wo", bf16), st("bo", f32),
        st("ln2g", f32), st("ln2b", f32),
        st("w1t", bf16), st("b1", f32),
        st("w2t", bf16), st("b2", f32),
        pad_cols(params["last_ln_g"].reshape(1, D)).astype(f32),
        pad_cols(params["last_ln_b"].reshape(1, D)).astype(f32),
    )
    return consts, item_emb, pos_emb, D


# ----------------------------------------------------------------------------
# forward wrapper (embedding gathers + single fused pallas_call)
# ----------------------------------------------------------------------------
def sasrec_forward(consts, item_emb, pos_emb, log_seqs, pos_seqs, neg_seqs,
                   *, num_heads, true_d):
    D = true_d
    Dp = int(consts[0].shape[-1])
    NB = int(consts[0].shape[0])
    H = num_heads
    B, L = log_seqs.shape

    seqs = jnp.take(item_emb, log_seqs, axis=0) * math.sqrt(D)
    poss = jnp.arange(1, L + 1, dtype=jnp.int32)[None, :] * (log_seqs != 0)
    seqs = seqs + jnp.take(pos_emb, poss, axis=0)
    # emb_dropout: eval mode -> identity
    # (this spec's log2feats has no timeline/padding mask, so none is applied)

    pad = [(0, 0), (0, 0), (0, Dp - D)]
    seqs = jnp.pad(seqs.astype(jnp.float32), pad)
    pos_e = jnp.pad(jnp.take(item_emb, pos_seqs, axis=0).astype(jnp.float32), pad)
    neg_e = jnp.pad(jnp.take(item_emb, neg_seqs, axis=0).astype(jnp.float32), pad)

    # precomputed additive causal mask, shared across heads / blocks / steps
    row = jnp.arange(L, dtype=jnp.int32)[:, None]
    col = jnp.arange(L, dtype=jnp.int32)[None, :]
    causal = jnp.where(col <= row, 0.0, -1e30).astype(jnp.float32)

    vlim, multi_tc = _vmem_budget()
    tb = _choose_tb(B, L, Dp, H, NB, vlim, multi_tc)

    x_spec = pl.BlockSpec((tb, L, Dp), lambda i: (i, 0, 0))
    o_spec = pl.BlockSpec((tb, L), lambda i: (i, 0))
    in_specs = ([x_spec, x_spec, x_spec, _const_spec(causal)]
                + [_const_spec(c) for c in consts])

    kernel = functools.partial(sasrec_fused_kernel,
                               num_heads=H, num_blocks=NB, true_d=D)
    plog, nlog = pl.pallas_call(
        kernel,
        out_shape=(jax.ShapeDtypeStruct((B, L), jnp.float32),
                   jax.ShapeDtypeStruct((B, L), jnp.float32)),
        grid=(B // tb,),
        in_specs=in_specs,
        out_specs=(o_spec, o_spec),
        compiler_params=pltpu.CompilerParams(
            dimension_semantics=("parallel",),
            vmem_limit_bytes=vlim),
    )(seqs, pos_e, neg_e, causal, *consts)
    return plog, nlog


# ----------------------------------------------------------------------------
# deterministic parameter init (PyTorch-layout weights)
# ----------------------------------------------------------------------------
def init_params(key, item_num, maxlen, hidden, num_blocks):
    keys = iter(jax.random.split(key, 8 + 8 * num_blocks))
    D = hidden

    item_emb = 0.02 * jax.random.normal(next(keys), (item_num + 1, D), jnp.float32)
    item_emb = item_emb.at[0].set(0.0)                    # padding_idx=0
    pos_emb = 0.02 * jax.random.normal(next(keys), (maxlen + 1, D), jnp.float32)
    pos_emb = pos_emb.at[0].set(0.0)                      # padding_idx=0

    blocks = []
    for _ in range(num_blocks):
        blocks.append({
            "ln1_g": jnp.ones((1, D), jnp.float32),
            "ln1_b": jnp.zeros((1, D), jnp.float32),
            "in_proj_w": 0.05 * jax.random.normal(next(keys), (3 * D, D), jnp.float32),
            "in_proj_b": 0.01 * jax.random.normal(next(keys), (1, 3 * D), jnp.float32),
            "out_proj_w": 0.05 * jax.random.normal(next(keys), (D, D), jnp.float32),
            "out_proj_b": 0.01 * jax.random.normal(next(keys), (1, D), jnp.float32),
            "ln2_g": jnp.ones((1, D), jnp.float32),
            "ln2_b": jnp.zeros((1, D), jnp.float32),
            "w1": 0.05 * jax.random.normal(next(keys), (D, D), jnp.float32),
            "b1": 0.01 * jax.random.normal(next(keys), (1, D), jnp.float32),
            "w2": 0.05 * jax.random.normal(next(keys), (D, D), jnp.float32),
            "b2": 0.01 * jax.random.normal(next(keys), (1, D), jnp.float32),
        })

    return {
        "item_emb": item_emb,
        "pos_emb": pos_emb,
        "blocks": blocks,
        "last_ln_g": jnp.ones((1, D), jnp.float32),
        "last_ln_b": jnp.zeros((1, D), jnp.float32),
    }


# ----------------------------------------------------------------------------
if __name__ == "__main__":
    B, L, D, H, NB = 2, 8, 32, 2, 2          # batch, maxlen, hidden, heads, blocks
    item_num = 50

    params = init_params(jax.random.PRNGKey(0), item_num, L, D, NB)
    # one-time layout prep (hoisted out of the forward path)
    consts, item_emb, pos_emb, true_d = prepare_params(params, num_heads=H)

    k1, k2, k3 = jax.random.split(jax.random.PRNGKey(0), 3)
    log_seqs = jax.random.randint(k1, (B, L), 0, item_num + 1, dtype=jnp.int32)
    pos_seqs = jax.random.randint(k2, (B, L), 1, item_num + 1, dtype=jnp.int32)
    neg_seqs = jax.random.randint(k3, (B, L), 1, item_num + 1, dtype=jnp.int32)

    fwd = jax.jit(functools.partial(sasrec_forward, num_heads=H, true_d=true_d))
    pos_logits, neg_logits = fwd(consts, item_emb, pos_emb,
                                 log_seqs, pos_seqs, neg_seqs)
    jax.block_until_ready((pos_logits, neg_logits))

    assert pos_logits.shape == (B, L) and neg_logits.shape == (B, L)
    assert bool(jnp.all(jnp.isfinite(pos_logits)))
    assert bool(jnp.all(jnp.isfinite(neg_logits)))
    print("KERNEL_OK")
</pallas_src>

<mosaic_0001>
module attributes {stable_mosaic.version = 11 : i64} {
  func.func @sasrec_fused_kernel(%arg0: i32, %arg1: memref<2x8x128xf32, #tpu.memory_space<vmem>>, %arg2: memref<2x8x128xf32, #tpu.memory_space<vmem>>, %arg3: memref<2x8x128xf32, #tpu.memory_space<vmem>>, %arg4: memref<8x8xf32, #tpu.memory_space<vmem>>, %arg5: memref<2x1x128xf32, #tpu.memory_space<vmem>>, %arg6: memref<2x1x128xf32, #tpu.memory_space<vmem>>, %arg7: memref<2x128x128xbf16, #tpu.memory_space<vmem>>, %arg8: memref<2x128x128xbf16, #tpu.memory_space<vmem>>, %arg9: memref<2x128x128xbf16, #tpu.memory_space<vmem>>, %arg10: memref<2x1x128xf32, #tpu.memory_space<vmem>>, %arg11: memref<2x1x128xf32, #tpu.memory_space<vmem>>, %arg12: memref<2x1x128xf32, #tpu.memory_space<vmem>>, %arg13: memref<2x2x16x128xbf16, #tpu.memory_space<vmem>>, %arg14: memref<2x1x128xf32, #tpu.memory_space<vmem>>, %arg15: memref<2x1x128xf32, #tpu.memory_space<vmem>>, %arg16: memref<2x1x128xf32, #tpu.memory_space<vmem>>, %arg17: memref<2x128x128xbf16, #tpu.memory_space<vmem>>, %arg18: memref<2x1x128xf32, #tpu.memory_space<vmem>>, %arg19: memref<2x128x128xbf16, #tpu.memory_space<vmem>>, %arg20: memref<2x1x128xf32, #tpu.memory_space<vmem>>, %arg21: memref<1x128xf32, #tpu.memory_space<vmem>>, %arg22: memref<1x128xf32, #tpu.memory_space<vmem>>, %arg23: memref<2x8xf32, #tpu.memory_space<vmem>>, %arg24: memref<2x8xf32, #tpu.memory_space<vmem>>) attributes {dimension_semantics = [#tpu.dimension_semantics<parallel>], iteration_bounds = array<i64: 1>, scalar_prefetch = 0 : i64, scratch_operands = 0 : i64, tpu.core_type = #tpu.core_type<tc>, window_params = [{transform_indices = @transform_0, window_bounds = array<i64: 2, 8, 128>}, {transform_indices = @transform_1, window_bounds = array<i64: 2, 8, 128>}, {transform_indices = @transform_2, window_bounds = array<i64: 2, 8, 128>}, {pipeline_mode = #tpu.pipeline_mode<synchronous>, transform_indices = @transform_3, window_bounds = array<i64: 8, 8>}, {pipeline_mode = #tpu.pipeline_mode<synchronous>, transform_indices = @transform_4, window_bounds = array<i64: 2, 1, 128>}, {pipeline_mode = #tpu.pipeline_mode<synchronous>, transform_indices = @transform_5, window_bounds = array<i64: 2, 1, 128>}, {pipeline_mode = #tpu.pipeline_mode<synchronous>, transform_indices = @transform_6, window_bounds = array<i64: 2, 128, 128>}, {pipeline_mode = #tpu.pipeline_mode<synchronous>, transform_indices = @transform_7, window_bounds = array<i64: 2, 128, 128>}, {pipeline_mode = #tpu.pipeline_mode<synchronous>, transform_indices = @transform_8, window_bounds = array<i64: 2, 128, 128>}, {pipeline_mode = #tpu.pipeline_mode<synchronous>, transform_indices = @transform_9, window_bounds = array<i64: 2, 1, 128>}, {pipeline_mode = #tpu.pipeline_mode<synchronous>, transform_indices = @transform_10, window_bounds = array<i64: 2, 1, 128>}, {pipeline_mode = #tpu.pipeline_mode<synchronous>, transform_indices = @transform_11, window_bounds = array<i64: 2, 1, 128>}, {pipeline_mode = #tpu.pipeline_mode<synchronous>, transform_indices = @transform_12, window_bounds = array<i64: 2, 2, 16, 128>}, {pipeline_mode = #tpu.pipeline_mode<synchronous>, transform_indices = @transform_13, window_bounds = array<i64: 2, 1, 128>}, {pipeline_mode = #tpu.pipeline_mode<synchronous>, transform_indices = @transform_14, window_bounds = array<i64: 2, 1, 128>}, {pipeline_mode = #tpu.pipeline_mode<synchronous>, transform_indices = @transform_15, window_bounds = array<i64: 2, 1, 128>}, {pipeline_mode = #tpu.pipeline_mode<synchronous>, transform_indices = @transform_16, window_bounds = array<i64: 2, 128, 128>}, {pipeline_mode = #tpu.pipeline_mode<synchronous>, transform_indices = @transform_17, window_bounds = array<i64: 2, 1, 128>}, {pipeline_mode = #tpu.pipeline_mode<synchronous>, transform_indices = @transform_18, window_bounds = array<i64: 2, 128, 128>}, {pipeline_mode = #tpu.pipeline_mode<synchronous>, transform_indices = @transform_19, window_bounds = array<i64: 2, 1, 128>}, {pipeline_mode = #tpu.pipeline_mode<synchronous>, transform_indices = @transform_20, window_bounds = array<i64: 1, 128>}, {pipeline_mode = #tpu.pipeline_mode<synchronous>, transform_indices = @transform_21, window_bounds = array<i64: 1, 128>}, {transform_indices = @transform_22, window_bounds = array<i64: 2, 8>}, {transform_indices = @transform_23, window_bounds = array<i64: 2, 8>}]} {
    %c0 = arith.constant 0 : index
    %c0_0 = arith.constant 0 : index
    %c0_1 = arith.constant 0 : index
    %0 = vector.load %arg1[%c0, %c0_0, %c0_1] : memref<2x8x128xf32, #tpu.memory_space<vmem>>, vector<2x8x128xf32>
    %1 = tpu.iota {dimensions = array<i32: 1>} : vector<1x128xi32>
    %c32_i32 = arith.constant 32 : i32
    %2 = vector.broadcast %c32_i32 : i32 to vector<1x128xi32>
    %3 = arith.cmpi slt, %1, %2 : vector<1x128xi32>
    %4 = arith.extui %3 : vector<1x128xi1> to vector<1x128xi32>
    %5 = arith.sitofp %4 : vector<1x128xi32> to vector<1x128xf32>
    %c0_2 = arith.constant 0 : index
    %c0_3 = arith.constant 0 : index
    %6 = vector.load %arg4[%c0_2, %c0_3] : memref<8x8xf32, #tpu.memory_space<vmem>>, vector<8x8xf32>
    %7 = vector.shape_cast %6 : vector<8x8xf32> to vector<1x8x8xf32>
    %8 = vector.shape_cast %0 : vector<2x8x128xf32> to vector<16x128xf32>
    %c0_4 = arith.constant 0 : index
    %c0_5 = arith.constant 0 : index
    %c0_6 = arith.constant 0 : index
    %9 = vector.load %arg5[%c0_4, %c0_5, %c0_6] : memref<2x1x128xf32, #tpu.memory_space<vmem>>, vector<1x1x128xf32>
    %10 = vector.shape_cast %9 : vector<1x1x128xf32> to vector<1x128xf32>
    %c0_7 = arith.constant 0 : index
    %c0_8 = arith.constant 0 : index
    %c0_9 = arith.constant 0 : index
    %11 = vector.load %arg6[%c0_7, %c0_8, %c0_9] : memref<2x1x128xf32, #tpu.memory_space<vmem>>, vector<1x1x128xf32>
    %12 = vector.shape_cast %11 : vector<1x1x128xf32> to vector<1x128xf32>
    %cst = arith.constant dense<0.000000e+00> : vector<16xf32>
    %13 = vector.multi_reduction <add>, %8, %cst [1] : vector<16x128xf32> to vector<16xf32>
    %14 = vector.shape_cast %13 : vector<16xf32> to vector<16x1xf32>
    %cst_10 = arith.constant 3.125000e-02 : f32
    %15 = vector.broadcast %cst_10 : f32 to vector<16x1xf32>
    %16 = arith.mulf %14, %15 : vector<16x1xf32>
    %17 = vector.broadcast %16 : vector<16x1xf32> to vector<16x128xf32>
    %18 = arith.subf %8, %17 : vector<16x128xf32>
    %19 = vector.broadcast %5 : vector<1x128xf32> to vector<16x128xf32>
    %20 = arith.mulf %18, %19 : vector<16x128xf32>
    %21 = arith.mulf %20, %20 : vector<16x128xf32>
    %cst_11 = arith.constant dense<0.000000e+00> : vector<16xf32>
    %22 = vector.multi_reduction <add>, %21, %cst_11 [1] : vector<16x128xf32> to vector<16xf32>
    %23 = vector.shape_cast %22 : vector<16xf32> to vector<16x1xf32>
    %cst_12 = arith.constant 3.125000e-02 : f32
    %24 = vector.broadcast %cst_12 : f32 to vector<16x1xf32>
    %25 = arith.mulf %23, %24 : vector<16x1xf32>
    %cst_13 = arith.constant 9.99999993E-9 : f32
    %26 = vector.broadcast %cst_13 : f32 to vector<16x1xf32>
    %27 = arith.addf %25, %26 : vector<16x1xf32>
    %28 = math.rsqrt %27 : vector<16x1xf32>
    %29 = vector.broadcast %28 : vector<16x1xf32> to vector<16x128xf32>
    %30 = arith.mulf %20, %29 : vector<16x128xf32>
    %31 = vector.broadcast %10 : vector<1x128xf32> to vector<16x128xf32>
    %32 = arith.mulf %30, %31 : vector<16x128xf32>
    %33 = vector.broadcast %12 : vector<1x128xf32> to vector<16x128xf32>
    %34 = arith.addf %32, %33 : vector<16x128xf32>
    %35 = arith.truncf %34 : vector<16x128xf32> to vector<16x128xbf16>
    %c0_14 = arith.constant 0 : index
    %c0_15 = arith.constant 0 : index
    %c0_16 = arith.constant 0 : index
    %36 = vector.load %arg7[%c0_14, %c0_15, %c0_16] : memref<2x128x128xbf16, #tpu.memory_space<vmem>>, vector<1x128x128xbf16>
    %37 = vector.shape_cast %36 : vector<1x128x128xbf16> to vector<128x128xbf16>
    %cst_17 = arith.constant dense<0.000000e+00> : vector<16x128xf32>
    %38 = tpu.matmul %35, %37, %cst_17 {dimension_numbers = #tpu.dot_dimension_numbers<[1], [0], [0], [1], [0, 0, 1, 1], [], []>} : vector<16x128xbf16>, vector<128x128xbf16>, vector<16x128xf32> -> vector<16x128xf32>
    %c0_18 = arith.constant 0 : index
    %c0_19 = arith.constant 0 : index
    %c0_20 = arith.constant 0 : index
    %39 = vector.load %arg10[%c0_18, %c0_19, %c0_20] : memref<2x1x128xf32, #tpu.memory_space<vmem>>, vector<1x1x128xf32>
    %40 = vector.shape_cast %39 : vector<1x1x128xf32> to vector<1x128xf32>
    %41 = vector.broadcast %40 : vector<1x128xf32> to vector<16x128xf32>
    %42 = arith.addf %38, %41 : vector<16x128xf32>
    %43 = arith.truncf %8 : vector<16x128xf32> to vector<16x128xbf16>
    %c0_21 = arith.constant 0 : index
    %c0_22 = arith.constant 0 : index
    %c0_23 = arith.constant 0 : index
    %44 = vector.load %arg8[%c0_21, %c0_22, %c0_23] : memref<2x128x128xbf16, #tpu.memory_space<vmem>>, vector<1x128x128xbf16>
    %45 = vector.shape_cast %44 : vector<1x128x128xbf16> to vector<128x128xbf16>
    %cst_24 = arith.constant dense<0.000000e+00> : vector<16x128xf32>
    %46 = tpu.matmul %43, %45, %cst_24 {dimension_numbers = #tpu.dot_dimension_numbers<[1], [0], [0], [1], [0, 0, 1, 1], [], []>} : vector<16x128xbf16>, vector<128x128xbf16>, vector<16x128xf32> -> vector<16x128xf32>
    %c0_25 = arith.constant 0 : index
    %c0_26 = arith.constant 0 : index
    %c0_27 = arith.constant 0 : index
    %47 = vector.load %arg11[%c0_25, %c0_26, %c0_27] : memref<2x1x128xf32, #tpu.memory_space<vmem>>, vector<1x1x128xf32>
    %48 = vector.shape_cast %47 : vector<1x1x128xf32> to vector<1x128xf32>
    %49 = vector.broadcast %48 : vector<1x128xf32> to vector<16x128xf32>
    %50 = arith.addf %46, %49 : vector<16x128xf32>
    %51 = arith.truncf %8 : vector<16x128xf32> to vector<16x128xbf16>
    %c0_28 = arith.constant 0 : index
    %c0_29 = arith.constant 0 : index
    %c0_30 = arith.constant 0 : index
    %52 = vector.load %arg9[%c0_28, %c0_29, %c0_30] : memref<2x128x128xbf16, #tpu.memory_space<vmem>>, vector<1x128x128xbf16>
    %53 = vector.shape_cast %52 : vector<1x128x128xbf16> to vector<128x128xbf16>
    %cst_31 = arith.constant dense<0.000000e+00> : vector<16x128xf32>
    %54 = tpu.matmul %51, %53, %cst_31 {dimension_numbers = #tpu.dot_dimension_numbers<[1], [0], [0], [1], [0, 0, 1, 1], [], []>} : vector<16x128xbf16>, vector<128x128xbf16>, vector<16x128xf32> -> vector<16x128xf32>
    %c0_32 = arith.constant 0 : index
    %c0_33 = arith.constant 0 : index
    %c0_34 = arith.constant 0 : index
    %55 = vector.load %arg12[%c0_32, %c0_33, %c0_34] : memref<2x1x128xf32, #tpu.memory_space<vmem>>, vector<1x1x128xf32>
    %56 = vector.shape_cast %55 : vector<1x1x128xf32> to vector<1x128xf32>
    %57 = vector.broadcast %56 : vector<1x128xf32> to vector<16x128xf32>
    %58 = arith.addf %54, %57 : vector<16x128xf32>
    %59 = vector.extract_strided_slice %42 {offsets = [0, 0], sizes = [16, 16], strides = [1, 1]} : vector<16x128xf32> to vector<16x16xf32>
    %60 = vector.shape_cast %59 : vector<16x16xf32> to vector<2x8x16xf32>
    %61 = arith.truncf %60 : vector<2x8x16xf32> to vector<2x8x16xbf16>
    %62 = vector.extract_strided_slice %50 {offsets = [0, 0], sizes = [16, 16], strides = [1, 1]} : vector<16x128xf32> to vector<16x16xf32>
    %63 = vector.shape_cast %62 : vector<16x16xf32> to vector<2x8x16xf32>
    %64 = arith.truncf %63 : vector<2x8x16xf32> to vector<2x8x16xbf16>
    %65 = vector.extract_strided_slice %58 {offsets = [0, 0], sizes = [16, 16], strides = [1, 1]} : vector<16x128xf32> to vector<16x16xf32>
    %66 = vector.shape_cast %65 : vector<16x16xf32> to vector<2x8x16xf32>
    %67 = arith.truncf %66 : vector<2x8x16xf32> to vector<2x8x16xbf16>
    "tpu.trace_start"() <{level = 10 : i32, message = "bqd,bkd->bqk"}> : () -> ()
    %cst_35 = arith.constant dense<0.000000e+00> : vector<2x8x8xf32>
    %68 = tpu.matmul %61, %64, %cst_35 {dimension_numbers = #tpu.dot_dimension_numbers<[2], [2], [1], [1], [0, 0, 0, 1, 1, 1], [0], [0]>} : vector<2x8x16xbf16>, vector<2x8x16xbf16>, vector<2x8x8xf32> -> vector<2x8x8xf32>
    "tpu.trace_stop"() : () -> ()
    %69 = vector.broadcast %7 : vector<1x8x8xf32> to vector<2x8x8xf32>
    %70 = arith.addf %68, %69 : vector<2x8x8xf32>
    %cst_36 = arith.constant dense<0xFF800000> : vector<2x8xf32>
    %71 = vector.multi_reduction <maximumf>, %70, %cst_36 [2] : vector<2x8x8xf32> to vector<2x8xf32>
    %72 = vector.shape_cast %71 : vector<2x8xf32> to vector<2x8x1xf32>
    %73 = vector.broadcast %72 : vector<2x8x1xf32> to vector<2x8x8xf32>
    %74 = arith.subf %70, %73 : vector<2x8x8xf32>
    %75 = math.exp %74 : vector<2x8x8xf32>
    %cst_37 = arith.constant dense<0.000000e+00> : vector<2x8xf32>
    %76 = vector.multi_reduction <add>, %75, %cst_37 [2] : vector<2x8x8xf32> to vector<2x8xf32>
    %77 = vector.shape_cast %76 : vector<2x8xf32> to vector<2x8x1xf32>
    %78 = tpu.reciprocal %77 {approx = true} : vector<2x8x1xf32> -> vector<2x8x1xf32>
    %79 = vector.broadcast %78 : vector<2x8x1xf32> to vector<2x8x8xf32>
    %80 = arith.mulf %75, %79 : vector<2x8x8xf32>
    %81 = arith.truncf %80 : vector<2x8x8xf32> to vector<2x8x8xbf16>
    "tpu.trace_start"() <{level = 10 : i32, message = "bqk,bkd->bqd"}> : () -> ()
    %cst_38 = arith.constant dense<0.000000e+00> : vector<2x8x16xf32>
    %82 = tpu.matmul %81, %67, %cst_38 {dimension_numbers = #tpu.dot_dimension_numbers<[2], [1], [1], [2], [0, 0, 0, 1, 1, 2], [0], [0]>} : vector<2x8x8xbf16>, vector<2x8x16xbf16>, vector<2x8x16xf32> -> vector<2x8x16xf32>
    "tpu.trace_stop"() : () -> ()
    %83 = vector.shape_cast %82 : vector<2x8x16xf32> to vector<16x16xf32>
    %84 = arith.truncf %83 : vector<16x16xf32> to vector<16x16xbf16>
    %c0_39 = arith.constant 0 : index
    %c0_40 = arith.constant 0 : index
    %c0_41 = arith.constant 0 : index
    %c0_42 = arith.constant 0 : index
    %85 = vector.load %arg13[%c0_39, %c0_40, %c0_41, %c0_42] : memref<2x2x16x128xbf16, #tpu.memory_space<vmem>>, vector<1x1x16x128xbf16>
    %86 = vector.shape_cast %85 : vector<1x1x16x128xbf16> to vector<16x128xbf16>
    %cst_43 = arith.constant dense<0.000000e+00> : vector<16x128xf32>
    %87 = tpu.matmul %84, %86, %cst_43 {dimension_numbers = #tpu.dot_dimension_numbers<[1], [0], [0], [1], [0, 0, 1, 1], [], []>} : vector<16x16xbf16>, vector<16x128xbf16>, vector<16x128xf32> -> vector<16x128xf32>
    %88 = vector.extract_strided_slice %42 {offsets = [0, 16], sizes = [16, 16], strides = [1, 1]} : vector<16x128xf32> to vector<16x16xf32>
    %89 = vector.shape_cast %88 : vector<16x16xf32> to vector<2x8x16xf32>
    %90 = arith.truncf %89 : vector<2x8x16xf32> to vector<2x8x16xbf16>
    %91 = vector.extract_strided_slice %50 {offsets = [0, 16], sizes = [16, 16], strides = [1, 1]} : vector<16x128xf32> to vector<16x16xf32>
    %92 = vector.shape_cast %91 : vector<16x16xf32> to vector<2x8x16xf32>
    %93 = arith.truncf %92 : vector<2x8x16xf32> to vector<2x8x16xbf16>
    %94 = vector.extract_strided_slice %58 {offsets = [0, 16], sizes = [16, 16], strides = [1, 1]} : vector<16x128xf32> to vector<16x16xf32>
    %95 = vector.shape_cast %94 : vector<16x16xf32> to vector<2x8x16xf32>
    %96 = arith.truncf %95 : vector<2x8x16xf32> to vector<2x8x16xbf16>
    "tpu.trace_start"() <{level = 10 : i32, message = "bqd,bkd->bqk"}> : () -> ()
    %cst_44 = arith.constant dense<0.000000e+00> : vector<2x8x8xf32>
    %97 = tpu.matmul %90, %93, %cst_44 {dimension_numbers = #tpu.dot_dimension_numbers<[2], [2], [1], [1], [0, 0, 0, 1, 1, 1], [0], [0]>} : vector<2x8x16xbf16>, vector<2x8x16xbf16>, vector<2x8x8xf32> -> vector<2x8x8xf32>
    "tpu.trace_stop"() : () -> ()
    %98 = vector.broadcast %7 : vector<1x8x8xf32> to vector<2x8x8xf32>
    %99 = arith.addf %97, %98 : vector<2x8x8xf32>
    %cst_45 = arith.constant dense<0xFF800000> : vector<2x8xf32>
    %100 = vector.multi_reduction <maximumf>, %99, %cst_45 [2] : vector<2x8x8xf32> to vector<2x8xf32>
    %101 = vector.shape_cast %100 : vector<2x8xf32> to vector<2x8x1xf32>
    %102 = vector.broadcast %101 : vector<2x8x1xf32> to vector<2x8x8xf32>
    %103 = arith.subf %99, %102 : vector<2x8x8xf32>
    %104 = math.exp %103 : vector<2x8x8xf32>
    %cst_46 = arith.constant dense<0.000000e+00> : vector<2x8xf32>
    %105 = vector.multi_reduction <add>, %104, %cst_46 [2] : vector<2x8x8xf32> to vector<2x8xf32>
    %106 = vector.shape_cast %105 : vector<2x8xf32> to vector<2x8x1xf32>
    %107 = tpu.reciprocal %106 {approx = true} : vector<2x8x1xf32> -> vector<2x8x1xf32>
    %108 = vector.broadcast %107 : vector<2x8x1xf32> to vector<2x8x8xf32>
    %109 = arith.mulf %104, %108 : vector<2x8x8xf32>
    %110 = arith.truncf %109 : vector<2x8x8xf32> to vector<2x8x8xbf16>
    "tpu.trace_start"() <{level = 10 : i32, message = "bqk,bkd->bqd"}> : () -> ()
    %cst_47 = arith.constant dense<0.000000e+00> : vector<2x8x16xf32>
    %111 = tpu.matmul %110, %96, %cst_47 {dimension_numbers = #tpu.dot_dimension_numbers<[2], [1], [1], [2], [0, 0, 0, 1, 1, 2], [0], [0]>} : vector<2x8x8xbf16>, vector<2x8x16xbf16>, vector<2x8x16xf32> -> vector<2x8x16xf32>
    "tpu.trace_stop"() : () -> ()
    %112 = vector.shape_cast %111 : vector<2x8x16xf32> to vector<16x16xf32>
    %113 = arith.truncf %112 : vector<16x16xf32> to vector<16x16xbf16>
    %c0_48 = arith.constant 0 : index
    %c1 = arith.constant 1 : index
    %c0_49 = arith.constant 0 : index
    %c0_50 = arith.constant 0 : index
    %114 = vector.load %arg13[%c0_48, %c1, %c0_49, %c0_50] : memref<2x2x16x128xbf16, #tpu.memory_space<vmem>>, vector<1x1x16x128xbf16>
    %115 = vector.shape_cast %114 : vector<1x1x16x128xbf16> to vector<16x128xbf16>
    %cst_51 = arith.constant dense<0.000000e+00> : vector<16x128xf32>
    %116 = tpu.matmul %113, %115, %cst_51 {dimension_numbers = #tpu.dot_dimension_numbers<[1], [0], [0], [1], [0, 0, 1, 1], [], []>} : vector<16x16xbf16>, vector<16x128xbf16>, vector<16x128xf32> -> vector<16x128xf32>
    %117 = arith.addf %87, %116 : vector<16x128xf32>
    %c0_52 = arith.constant 0 : index
    %c0_53 = arith.constant 0 : index
    %c0_54 = arith.constant 0 : index
    %118 = vector.load %arg14[%c0_52, %c0_53, %c0_54] : memref<2x1x128xf32, #tpu.memory_space<vmem>>, vector<1x1x128xf32>
    %119 = vector.shape_cast %118 : vector<1x1x128xf32> to vector<1x128xf32>
    %120 = vector.broadcast %119 : vector<1x128xf32> to vector<16x128xf32>
    %121 = arith.addf %117, %120 : vector<16x128xf32>
    %122 = arith.addf %34, %121 : vector<16x128xf32>
    %c0_55 = arith.constant 0 : index
    %c0_56 = arith.constant 0 : index
    %c0_57 = arith.constant 0 : index
    %123 = vector.load %arg15[%c0_55, %c0_56, %c0_57] : memref<2x1x128xf32, #tpu.memory_space<vmem>>, vector<1x1x128xf32>
    %124 = vector.shape_cast %123 : vector<1x1x128xf32> to vector<1x128xf32>
    %c0_58 = arith.constant 0 : index
    %c0_59 = arith.constant 0 : index
    %c0_60 = arith.constant 0 : index
    %125 = vector.load %arg16[%c0_58, %c0_59, %c0_60] : memref<2x1x128xf32, #tpu.memory_space<vmem>>, vector<1x1x128xf32>
    %126 = vector.shape_cast %125 : vector<1x1x128xf32> to vector<1x128xf32>
    %cst_61 = arith.constant dense<0.000000e+00> : vector<16xf32>
    %127 = vector.multi_reduction <add>, %122, %cst_61 [1] : vector<16x128xf32> to vector<16xf32>
    %128 = vector.shape_cast %127 : vector<16xf32> to vector<16x1xf32>
    %cst_62 = arith.constant 3.125000e-02 : f32
    %129 = vector.broadcast %cst_62 : f32 to vector<16x1xf32>
    %130 = arith.mulf %128, %129 : vector<16x1xf32>
    %131 = vector.broadcast %130 : vector<16x1xf32> to vector<16x128xf32>
    %132 = arith.subf %122, %131 : vector<16x128xf32>
    %133 = vector.broadcast %5 : vector<1x128xf32> to vector<16x128xf32>
    %134 = arith.mulf %132, %133 : vector<16x128xf32>
    %135 = arith.mulf %134, %134 : vector<16x128xf32>
    %cst_63 = arith.constant dense<0.000000e+00> : vector<16xf32>
    %136 = vector.multi_reduction <add>, %135, %cst_63 [1] : vector<16x128xf32> to vector<16xf32>
    %137 = vector.shape_cast %136 : vector<16xf32> to vector<16x1xf32>
    %cst_64 = arith.constant 3.125000e-02 : f32
    %138 = vector.broadcast %cst_64 : f32 to vector<16x1xf32>
    %139 = arith.mulf %137, %138 : vector<16x1xf32>
    %cst_65 = arith.constant 9.99999993E-9 : f32
    %140 = vector.broadcast %cst_65 : f32 to vector<16x1xf32>
    %141 = arith.addf %139, %140 : vector<16x1xf32>
    %142 = math.rsqrt %141 : vector<16x1xf32>
    %143 = vector.broadcast %142 : vector<16x1xf32> to vector<16x128xf32>
    %144 = arith.mulf %134, %143 : vector<16x128xf32>
    %145 = vector.broadcast %124 : vector<1x128xf32> to vector<16x128xf32>
    %146 = arith.mulf %144, %145 : vector<16x128xf32>
    %147 = vector.broadcast %126 : vector<1x128xf32> to vector<16x128xf32>
    %148 = arith.addf %146, %147 : vector<16x128xf32>
    %149 = arith.truncf %148 : vector<16x128xf32> to vector<16x128xbf16>
    %c0_66 = arith.constant 0 : index
    %c0_67 = arith.constant 0 : index
    %c0_68 = arith.constant 0 : index
    %150 = vector.load %arg17[%c0_66, %c0_67, %c0_68] : memref<2x128x128xbf16, #tpu.memory_space<vmem>>, vector<1x128x128xbf16>
    %151 = vector.shape_cast %150 : vector<1x128x128xbf16> to vector<128x128xbf16>
    %cst_69 = arith.constant dense<0.000000e+00> : vector<16x128xf32>
    %152 = tpu.matmul %149, %151, %cst_69 {dimension_numbers = #tpu.dot_dimension_numbers<[1], [0], [0], [1], [0, 0, 1, 1], [], []>} : vector<16x128xbf16>, vector<128x128xbf16>, vector<16x128xf32> -> vector<16x128xf32>
    %c0_70 = arith.constant 0 : index
    %c0_71 = arith.constant 0 : index
    %c0_72 = arith.constant 0 : index
    %153 = vector.load %arg18[%c0_70, %c0_71, %c0_72] : memref<2x1x128xf32, #tpu.memory_space<vmem>>, vector<1x1x128xf32>
    %154 = vector.shape_cast %153 : vector<1x1x128xf32> to vector<1x128xf32>
    %155 = vector.broadcast %154 : vector<1x128xf32> to vector<16x128xf32>
    %156 = arith.addf %152, %155 : vector<16x128xf32>
    %cst_73 = arith.constant 0.000000e+00 : f32
    %157 = vector.broadcast %cst_73 : f32 to vector<16x128xf32>
    %158 = arith.maximumf %156, %157 : vector<16x128xf32>
    %159 = arith.truncf %158 : vector<16x128xf32> to vector<16x128xbf16>
    %c0_74 = arith.constant 0 : index
    %c0_75 = arith.constant 0 : index
    %c0_76 = arith.constant 0 : index
    %160 = vector.load %arg19[%c0_74, %c0_75, %c0_76] : memref<2x128x128xbf16, #tpu.memory_space<vmem>>, vector<1x128x128xbf16>
    %161 = vector.shape_cast %160 : vector<1x128x128xbf16> to vector<128x128xbf16>
    %cst_77 = arith.constant dense<0.000000e+00> : vector<16x128xf32>
    %162 = tpu.matmul %159, %161, %cst_77 {dimension_numbers = #tpu.dot_dimension_numbers<[1], [0], [0], [1], [0, 0, 1, 1], [], []>} : vector<16x128xbf16>, vector<128x128xbf16>, vector<16x128xf32> -> vector<16x128xf32>
    %c0_78 = arith.constant 0 : index
    %c0_79 = arith.constant 0 : index
    %c0_80 = arith.constant 0 : index
    %163 = vector.load %arg20[%c0_78, %c0_79, %c0_80] : memref<2x1x128xf32, #tpu.memory_space<vmem>>, vector<1x1x128xf32>
    %164 = vector.shape_cast %163 : vector<1x1x128xf32> to vector<1x128xf32>
    %165 = vector.broadcast %164 : vector<1x128xf32> to vector<16x128xf32>
    %166 = arith.addf %162, %165 : vector<16x128xf32>
    %167 = arith.addf %166, %148 : vector<16x128xf32>
    %c1_81 = arith.constant 1 : index
    %c0_82 = arith.constant 0 : index
    %c0_83 = arith.constant 0 : index
    %168 = vector.load %arg5[%c1_81, %c0_82, %c0_83] : memref<2x1x128xf32, #tpu.memory_space<vmem>>, vector<1x1x128xf32>
    %169 = vector.shape_cast %168 : vector<1x1x128xf32> to vector<1x128xf32>
    %c1_84 = arith.constant 1 : index
    %c0_85 = arith.constant 0 : index
    %c0_86 = arith.constant 0 : index
    %170 = vector.load %arg6[%c1_84, %c0_85, %c0_86] : memref<2x1x128xf32, #tpu.memory_space<vmem>>, vector<1x1x128xf32>
    %171 = vector.shape_cast %170 : vector<1x1x128xf32> to vector<1x128xf32>
    %cst_87 = arith.constant dense<0.000000e+00> : vector<16xf32>
    %172 = vector.multi_reduction <add>, %167, %cst_87 [1] : vector<16x128xf32> to vector<16xf32>
    %173 = vector.shape_cast %172 : vector<16xf32> to vector<16x1xf32>
    %cst_88 = arith.constant 3.125000e-02 : f32
    %174 = vector.broadcast %cst_88 : f32 to vector<16x1xf32>
    %175 = arith.mulf %173, %174 : vector<16x1xf32>
    %176 = vector.broadcast %175 : vector<16x1xf32> to vector<16x128xf32>
    %177 = arith.subf %167, %176 : vector<16x128xf32>
    %178 = vector.broadcast %5 : vector<1x128xf32> to vector<16x128xf32>
    %179 = arith.mulf %177, %178 : vector<16x128xf32>
    %180 = arith.mulf %179, %179 : vector<16x128xf32>
    %cst_89 = arith.constant dense<0.000000e+00> : vector<16xf32>
    %181 = vector.multi_reduction <add>, %180, %cst_89 [1] : vector<16x128xf32> to vector<16xf32>
    %182 = vector.shape_cast %181 : vector<16xf32> to vector<16x1xf32>
    %cst_90 = arith.constant 3.125000e-02 : f32
    %183 = vector.broadcast %cst_90 : f32 to vector<16x1xf32>
    %184 = arith.mulf %182, %183 : vector<16x1xf32>
    %cst_91 = arith.constant 9.99999993E-9 : f32
    %185 = vector.broadcast %cst_91 : f32 to vector<16x1xf32>
    %186 = arith.addf %184, %185 : vector<16x1xf32>
    %187 = math.rsqrt %186 : vector<16x1xf32>
    %188 = vector.broadcast %187 : vector<16x1xf32> to vector<16x128xf32>
    %189 = arith.mulf %179, %188 : vector<16x128xf32>
    %190 = vector.broadcast %169 : vector<1x128xf32> to vector<16x128xf32>
    %191 = arith.mulf %189, %190 : vector<16x128xf32>
    %192 = vector.broadcast %171 : vector<1x128xf32> to vector<16x128xf32>
    %193 = arith.addf %191, %192 : vector<16x128xf32>
    %194 = arith.truncf %193 : vector<16x128xf32> to vector<16x128xbf16>
    %c1_92 = arith.constant 1 : index
    %c0_93 = arith.constant 0 : index
    %c0_94 = arith.constant 0 : index
    %195 = vector.load %arg7[%c1_92, %c0_93, %c0_94] : memref<2x128x128xbf16, #tpu.memory_space<vmem>>, vector<1x128x128xbf16>
    %196 = vector.shape_cast %195 : vector<1x128x128xbf16> to vector<128x128xbf16>
    %cst_95 = arith.constant dense<0.000000e+00> : vector<16x128xf32>
    %197 = tpu.matmul %194, %196, %cst_95 {dimension_numbers = #tpu.dot_dimension_numbers<[1], [0], [0], [1], [0, 0, 1, 1], [], []>} : vector<16x128xbf16>, vector<128x128xbf16>, vector<16x128xf32> -> vector<16x128xf32>
    %c1_96 = arith.constant 1 : index
    %c0_97 = arith.constant 0 : index
    %c0_98 = arith.constant 0 : index
    %198 = vector.load %arg10[%c1_96, %c0_97, %c0_98] : memref<2x1x128xf32, #tpu.memory_space<vmem>>, vector<1x1x128xf32>
    %199 = vector.shape_cast %198 : vector<1x1x128xf32> to vector<1x128xf32>
    %200 = vector.broadcast %199 : vector<1x128xf32> to vector<16x128xf32>
    %201 = arith.addf %197, %200 : vector<16x128xf32>
    %202 = arith.truncf %167 : vector<16x128xf32> to vector<16x128xbf16>
    %c1_99 = arith.constant 1 : index
    %c0_100 = arith.constant 0 : index
    %c0_101 = arith.constant 0 : index
    %203 = vector.load %arg8[%c1_99, %c0_100, %c0_101] : memref<2x128x128xbf16, #tpu.memory_space<vmem>>, vector<1x128x128xbf16>
    %204 = vector.shape_cast %203 : vector<1x128x128xbf16> to vector<128x128xbf16>
    %cst_102 = arith.constant dense<0.000000e+00> : vector<16x128xf32>
    %205 = tpu.matmul %202, %204, %cst_102 {dimension_numbers = #tpu.dot_dimension_numbers<[1], [0], [0], [1], [0, 0, 1, 1], [], []>} : vector<16x128xbf16>, vector<128x128xbf16>, vector<16x128xf32> -> vector<16x128xf32>
    %c1_103 = arith.constant 1 : index
    %c0_104 = arith.constant 0 : index
    %c0_105 = arith.constant 0 : index
    %206 = vector.load %arg11[%c1_103, %c0_104, %c0_105] : memref<2x1x128xf32, #tpu.memory_space<vmem>>, vector<1x1x128xf32>
    %207 = vector.shape_cast %206 : vector<1x1x128xf32> to vector<1x128xf32>
    %208 = vector.broadcast %207 : vector<1x128xf32> to vector<16x128xf32>
    %209 = arith.addf %205, %208 : vector<16x128xf32>
    %210 = arith.truncf %167 : vector<16x128xf32> to vector<16x128xbf16>
    %c1_106 = arith.constant 1 : index
    %c0_107 = arith.constant 0 : index
    %c0_108 = arith.constant 0 : index
    %211 = vector.load %arg9[%c1_106, %c0_107, %c0_108] : memref<2x128x128xbf16, #tpu.memory_space<vmem>>, vector<1x128x128xbf16>
    %212 = vector.shape_cast %211 : vector<1x128x128xbf16> to vector<128x128xbf16>
    %cst_109 = arith.constant dense<0.000000e+00> : vector<16x128xf32>
    %213 = tpu.matmul %210, %212, %cst_109 {dimension_numbers = #tpu.dot_dimension_numbers<[1], [0], [0], [1], [0, 0, 1, 1], [], []>} : vector<16x128xbf16>, vector<128x128xbf16>, vector<16x128xf32> -> vector<16x128xf32>
    %c1_110 = arith.constant 1 : index
    %c0_111 = arith.constant 0 : index
    %c0_112 = arith.constant 0 : index
    %214 = vector.load %arg12[%c1_110, %c0_111, %c0_112] : memref<2x1x128xf32, #tpu.memory_space<vmem>>, vector<1x1x128xf32>
    %215 = vector.shape_cast %214 : vector<1x1x128xf32> to vector<1x128xf32>
    %216 = vector.broadcast %215 : vector<1x128xf32> to vector<16x128xf32>
    %217 = arith.addf %213, %216 : vector<16x128xf32>
    %218 = vector.extract_strided_slice %201 {offsets = [0, 0], sizes = [16, 16], strides = [1, 1]} : vector<16x128xf32> to vector<16x16xf32>
    %219 = vector.shape_cast %218 : vector<16x16xf32> to vector<2x8x16xf32>
    %220 = arith.truncf %219 : vector<2x8x16xf32> to vector<2x8x16xbf16>
    %221 = vector.extract_strided_slice %209 {offsets = [0, 0], sizes = [16, 16], strides = [1, 1]} : vector<16x128xf32> to vector<16x16xf32>
    %222 = vector.shape_cast %221 : vector<16x16xf32> to vector<2x8x16xf32>
    %223 = arith.truncf %222 : vector<2x8x16xf32> to vector<2x8x16xbf16>
    %224 = vector.extract_strided_slice %217 {offsets = [0, 0], sizes = [16, 16], strides = [1, 1]} : vector<16x128xf32> to vector<16x16xf32>
    %225 = vector.shape_cast %224 : vector<16x16xf32> to vector<2x8x16xf32>
    %226 = arith.truncf %225 : vector<2x8x16xf32> to vector<2x8x16xbf16>
    "tpu.trace_start"() <{level = 10 : i32, message = "bqd,bkd->bqk"}> : () -> ()
    %cst_113 = arith.constant dense<0.000000e+00> : vector<2x8x8xf32>
    %227 = tpu.matmul %220, %223, %cst_113 {dimension_numbers = #tpu.dot_dimension_numbers<[2], [2], [1], [1], [0, 0, 0, 1, 1, 1], [0], [0]>} : vector<2x8x16xbf16>, vector<2x8x16xbf16>, vector<2x8x8xf32> -> vector<2x8x8xf32>
    "tpu.trace_stop"() : () -> ()
    %228 = vector.broadcast %7 : vector<1x8x8xf32> to vector<2x8x8xf32>
    %229 = arith.addf %227, %228 : vector<2x8x8xf32>
    %cst_114 = arith.constant dense<0xFF800000> : vector<2x8xf32>
    %230 = vector.multi_reduction <maximumf>, %229, %cst_114 [2] : vector<2x8x8xf32> to vector<2x8xf32>
    %231 = vector.shape_cast %230 : vector<2x8xf32> to vector<2x8x1xf32>
    %232 = vector.broadcast %231 : vector<2x8x1xf32> to vector<2x8x8xf32>
    %233 = arith.subf %229, %232 : vector<2x8x8xf32>
    %234 = math.exp %233 : vector<2x8x8xf32>
    %cst_115 = arith.constant dense<0.000000e+00> : vector<2x8xf32>
    %235 = vector.multi_reduction <add>, %234, %cst_115 [2] : vector<2x8x8xf32> to vector<2x8xf32>
    %236 = vector.shape_cast %235 : vector<2x8xf32> to vector<2x8x1xf32>
    %237 = tpu.reciprocal %236 {approx = true} : vector<2x8x1xf32> -> vector<2x8x1xf32>
    %238 = vector.broadcast %237 : vector<2x8x1xf32> to vector<2x8x8xf32>
    %239 = arith.mulf %234, %238 : vector<2x8x8xf32>
    %240 = arith.truncf %239 : vector<2x8x8xf32> to vector<2x8x8xbf16>
    "tpu.trace_start"() <{level = 10 : i32, message = "bqk,bkd->bqd"}> : () -> ()
    %cst_116 = arith.constant dense<0.000000e+00> : vector<2x8x16xf32>
    %241 = tpu.matmul %240, %226, %cst_116 {dimension_numbers = #tpu.dot_dimension_numbers<[2], [1], [1], [2], [0, 0, 0, 1, 1, 2], [0], [0]>} : vector<2x8x8xbf16>, vector<2x8x16xbf16>, vector<2x8x16xf32> -> vector<2x8x16xf32>
    "tpu.trace_stop"() : () -> ()
    %242 = vector.shape_cast %241 : vector<2x8x16xf32> to vector<16x16xf32>
    %243 = arith.truncf %242 : vector<16x16xf32> to vector<16x16xbf16>
    %c1_117 = arith.constant 1 : index
    %c0_118 = arith.constant 0 : index
    %c0_119 = arith.constant 0 : index
    %c0_120 = arith.constant 0 : index
    %244 = vector.load %arg13[%c1_117, %c0_118, %c0_119, %c0_120] : memref<2x2x16x128xbf16, #tpu.memory_space<vmem>>, vector<1x1x16x128xbf16>
    %245 = vector.shape_cast %244 : vector<1x1x16x128xbf16> to vector<16x128xbf16>
    %cst_121 = arith.constant dense<0.000000e+00> : vector<16x128xf32>
    %246 = tpu.matmul %243, %245, %cst_121 {dimension_numbers = #tpu.dot_dimension_numbers<[1], [0], [0], [1], [0, 0, 1, 1], [], []>} : vector<16x16xbf16>, vector<16x128xbf16>, vector<16x128xf32> -> vector<16x128xf32>
    %247 = vector.extract_strided_slice %201 {offsets = [0, 16], sizes = [16, 16], strides = [1, 1]} : vector<16x128xf32> to vector<16x16xf32>
    %248 = vector.shape_cast %247 : vector<16x16xf32> to vector<2x8x16xf32>
    %249 = arith.truncf %248 : vector<2x8x16xf32> to vector<2x8x16xbf16>
    %250 = vector.extract_strided_slice %209 {offsets = [0, 16], sizes = [16, 16], strides = [1, 1]} : vector<16x128xf32> to vector<16x16xf32>
    %251 = vector.shape_cast %250 : vector<16x16xf32> to vector<2x8x16xf32>
    %252 = arith.truncf %251 : vector<2x8x16xf32> to vector<2x8x16xbf16>
    %253 = vector.extract_strided_slice %217 {offsets = [0, 16], sizes = [16, 16], strides = [1, 1]} : vector<16x128xf32> to vector<16x16xf32>
    %254 = vector.shape_cast %253 : vector<16x16xf32> to vector<2x8x16xf32>
    %255 = arith.truncf %254 : vector<2x8x16xf32> to vector<2x8x16xbf16>
    "tpu.trace_start"() <{level = 10 : i32, message = "bqd,bkd->bqk"}> : () -> ()
    %cst_122 = arith.constant dense<0.000000e+00> : vector<2x8x8xf32>
    %256 = tpu.matmul %249, %252, %cst_122 {dimension_numbers = #tpu.dot_dimension_numbers<[2], [2], [1], [1], [0, 0, 0, 1, 1, 1], [0], [0]>} : vector<2x8x16xbf16>, vector<2x8x16xbf16>, vector<2x8x8xf32> -> vector<2x8x8xf32>
    "tpu.trace_stop"() : () -> ()
    %257 = vector.broadcast %7 : vector<1x8x8xf32> to vector<2x8x8xf32>
    %258 = arith.addf %256, %257 : vector<2x8x8xf32>
    %cst_123 = arith.constant dense<0xFF800000> : vector<2x8xf32>
    %259 = vector.multi_reduction <maximumf>, %258, %cst_123 [2] : vector<2x8x8xf32> to vector<2x8xf32>
    %260 = vector.shape_cast %259 : vector<2x8xf32> to vector<2x8x1xf32>
    %261 = vector.broadcast %260 : vector<2x8x1xf32> to vector<2x8x8xf32>
    %262 = arith.subf %258, %261 : vector<2x8x8xf32>
    %263 = math.exp %262 : vector<2x8x8xf32>
    %cst_124 = arith.constant dense<0.000000e+00> : vector<2x8xf32>
    %264 = vector.multi_reduction <add>, %263, %cst_124 [2] : vector<2x8x8xf32> to vector<2x8xf32>
    %265 = vector.shape_cast %264 : vector<2x8xf32> to vector<2x8x1xf32>
    %266 = tpu.reciprocal %265 {approx = true} : vector<2x8x1xf32> -> vector<2x8x1xf32>
    %267 = vector.broadcast %266 : vector<2x8x1xf32> to vector<2x8x8xf32>
    %268 = arith.mulf %263, %267 : vector<2x8x8xf32>
    %269 = arith.truncf %268 : vector<2x8x8xf32> to vector<2x8x8xbf16>
    "tpu.trace_start"() <{level = 10 : i32, message = "bqk,bkd->bqd"}> : () -> ()
    %cst_125 = arith.constant dense<0.000000e+00> : vector<2x8x16xf32>
    %270 = tpu.matmul %269, %255, %cst_125 {dimension_numbers = #tpu.dot_dimension_numbers<[2], [1], [1], [2], [0, 0, 0, 1, 1, 2], [0], [0]>} : vector<2x8x8xbf16>, vector<2x8x16xbf16>, vector<2x8x16xf32> -> vector<2x8x16xf32>
    "tpu.trace_stop"() : () -> ()
    %271 = vector.shape_cast %270 : vector<2x8x16xf32> to vector<16x16xf32>
    %272 = arith.truncf %271 : vector<16x16xf32> to vector<16x16xbf16>
    %c1_126 = arith.constant 1 : index
    %c1_127 = arith.constant 1 : index
    %c0_128 = arith.constant 0 : index
    %c0_129 = arith.constant 0 : index
    %273 = vector.load %arg13[%c1_126, %c1_127, %c0_128, %c0_129] : memref<2x2x16x128xbf16, #tpu.memory_space<vmem>>, vector<1x1x16x128xbf16>
    %274 = vector.shape_cast %273 : vector<1x1x16x128xbf16> to vector<16x128xbf16>
    %cst_130 = arith.constant dense<0.000000e+00> : vector<16x128xf32>
    %275 = tpu.matmul %272, %274, %cst_130 {dimension_numbers = #tpu.dot_dimension_numbers<[1], [0], [0], [1], [0, 0, 1, 1], [], []>} : vector<16x16xbf16>, vector<16x128xbf16>, vector<16x128xf32> -> vector<16x128xf32>
    %276 = arith.addf %246, %275 : vector<16x128xf32>
    %c1_131 = arith.constant 1 : index
    %c0_132 = arith.constant 0 : index
    %c0_133 = arith.constant 0 : index
    %277 = vector.load %arg14[%c1_131, %c0_132, %c0_133] : memref<2x1x128xf32, #tpu.memory_space<vmem>>, vector<1x1x128xf32>
    %278 = vector.shape_cast %277 : vector<1x1x128xf32> to vector<1x128xf32>
    %279 = vector.broadcast %278 : vector<1x128xf32> to vector<16x128xf32>
    %280 = arith.addf %276, %279 : vector<16x128xf32>
    %281 = arith.addf %193, %280 : vector<16x128xf32>
    %c1_134 = arith.constant 1 : index
    %c0_135 = arith.constant 0 : index
    %c0_136 = arith.constant 0 : index
    %282 = vector.load %arg15[%c1_134, %c0_135, %c0_136] : memref<2x1x128xf32, #tpu.memory_space<vmem>>, vector<1x1x128xf32>
    %283 = vector.shape_cast %282 : vector<1x1x128xf32> to vector<1x128xf32>
    %c1_137 = arith.constant 1 : index
    %c0_138 = arith.constant 0 : index
    %c0_139 = arith.constant 0 : index
    %284 = vector.load %arg16[%c1_137, %c0_138, %c0_139] : memref<2x1x128xf32, #tpu.memory_space<vmem>>, vector<1x1x128xf32>
    %285 = vector.shape_cast %284 : vector<1x1x128xf32> to vector<1x128xf32>
    %cst_140 = arith.constant dense<0.000000e+00> : vector<16xf32>
    %286 = vector.multi_reduction <add>, %281, %cst_140 [1] : vector<16x128xf32> to vector<16xf32>
    %287 = vector.shape_cast %286 : vector<16xf32> to vector<16x1xf32>
    %cst_141 = arith.constant 3.125000e-02 : f32
    %288 = vector.broadcast %cst_141 : f32 to vector<16x1xf32>
    %289 = arith.mulf %287, %288 : vector<16x1xf32>
    %290 = vector.broadcast %289 : vector<16x1xf32> to vector<16x128xf32>
    %291 = arith.subf %281, %290 : vector<16x128xf32>
    %292 = vector.broadcast %5 : vector<1x128xf32> to vector<16x128xf32>
    %293 = arith.mulf %291, %292 : vector<16x128xf32>
    %294 = arith.mulf %293, %293 : vector<16x128xf32>
    %cst_142 = arith.constant dense<0.000000e+00> : vector<16xf32>
    %295 = vector.multi_reduction <add>, %294, %cst_142 [1] : vector<16x128xf32> to vector<16xf32>
    %296 = vector.shape_cast %295 : vector<16xf32> to vector<16x1xf32>
    %cst_143 = arith.constant 3.125000e-02 : f32
    %297 = vector.broadcast %cst_143 : f32 to vector<16x1xf32>
    %298 = arith.mulf %296, %297 : vector<16x1xf32>
    %cst_144 = arith.constant 9.99999993E-9 : f32
    %299 = vector.broadcast %cst_144 : f32 to vector<16x1xf32>
    %300 = arith.addf %298, %299 : vector<16x1xf32>
    %301 = math.rsqrt %300 : vector<16x1xf32>
    %302 = vector.broadcast %301 : vector<16x1xf32> to vector<16x128xf32>
    %303 = arith.mulf %293, %302 : vector<16x128xf32>
    %304 = vector.broadcast %283 : vector<1x128xf32> to vector<16x128xf32>
    %305 = arith.mulf %303, %304 : vector<16x128xf32>
    %306 = vector.broadcast %285 : vector<1x128xf32> to vector<16x128xf32>
    %307 = arith.addf %305, %306 : vector<16x128xf32>
    %308 = arith.truncf %307 : vector<16x128xf32> to vector<16x128xbf16>
    %c1_145 = arith.constant 1 : index
    %c0_146 = arith.constant 0 : index
    %c0_147 = arith.constant 0 : index
    %309 = vector.load %arg17[%c1_145, %c0_146, %c0_147] : memref<2x128x128xbf16, #tpu.memory_space<vmem>>, vector<1x128x128xbf16>
    %310 = vector.shape_cast %309 : vector<1x128x128xbf16> to vector<128x128xbf16>
    %cst_148 = arith.constant dense<0.000000e+00> : vector<16x128xf32>
    %311 = tpu.matmul %308, %310, %cst_148 {dimension_numbers = #tpu.dot_dimension_numbers<[1], [0], [0], [1], [0, 0, 1, 1], [], []>} : vector<16x128xbf16>, vector<128x128xbf16>, vector<16x128xf32> -> vector<16x128xf32>
    %c1_149 = arith.constant 1 : index
    %c0_150 = arith.constant 0 : index
    %c0_151 = arith.constant 0 : index
    %312 = vector.load %arg18[%c1_149, %c0_150, %c0_151] : memref<2x1x128xf32, #tpu.memory_space<vmem>>, vector<1x1x128xf32>
    %313 = vector.shape_cast %312 : vector<1x1x128xf32> to vector<1x128xf32>
    %314 = vector.broadcast %313 : vector<1x128xf32> to vector<16x128xf32>
    %315 = arith.addf %311, %314 : vector<16x128xf32>
    %cst_152 = arith.constant 0.000000e+00 : f32
    %316 = vector.broadcast %cst_152 : f32 to vector<16x128xf32>
    %317 = arith.maximumf %315, %316 : vector<16x128xf32>
    %318 = arith.truncf %317 : vector<16x128xf32> to vector<16x128xbf16>
    %c1_153 = arith.constant 1 : index
    %c0_154 = arith.constant 0 : index
    %c0_155 = arith.constant 0 : index
    %319 = vector.load %arg19[%c1_153, %c0_154, %c0_155] : memref<2x128x128xbf16, #tpu.memory_space<vmem>>, vector<1x128x128xbf16>
    %320 = vector.shape_cast %319 : vector<1x128x128xbf16> to vector<128x128xbf16>
    %cst_156 = arith.constant dense<0.000000e+00> : vector<16x128xf32>
    %321 = tpu.matmul %318, %320, %cst_156 {dimension_numbers = #tpu.dot_dimension_numbers<[1], [0], [0], [1], [0, 0, 1, 1], [], []>} : vector<16x128xbf16>, vector<128x128xbf16>, vector<16x128xf32> -> vector<16x128xf32>
    %c1_157 = arith.constant 1 : index
    %c0_158 = arith.constant 0 : index
    %c0_159 = arith.constant 0 : index
    %322 = vector.load %arg20[%c1_157, %c0_158, %c0_159] : memref<2x1x128xf32, #tpu.memory_space<vmem>>, vector<1x1x128xf32>
    %323 = vector.shape_cast %322 : vector<1x1x128xf32> to vector<1x128xf32>
    %324 = vector.broadcast %323 : vector<1x128xf32> to vector<16x128xf32>
    %325 = arith.addf %321, %324 : vector<16x128xf32>
    %326 = arith.addf %325, %307 : vector<16x128xf32>
    %c0_160 = arith.constant 0 : index
    %c0_161 = arith.constant 0 : index
    %327 = vector.load %arg21[%c0_160, %c0_161] : memref<1x128xf32, #tpu.memory_space<vmem>>, vector<1x128xf32>
    %c0_162 = arith.constant 0 : index
    %c0_163 = arith.constant 0 : index
    %328 = vector.load %arg22[%c0_162, %c0_163] : memref<1x128xf32, #tpu.memory_space<vmem>>, vector<1x128xf32>
    %cst_164 = arith.constant dense<0.000000e+00> : vector<16xf32>
    %329 = vector.multi_reduction <add>, %326, %cst_164 [1] : vector<16x128xf32> to vector<16xf32>
    %330 = vector.shape_cast %329 : vector<16xf32> to vector<16x1xf32>
    %cst_165 = arith.constant 3.125000e-02 : f32
    %331 = vector.broadcast %cst_165 : f32 to vector<16x1xf32>
    %332 = arith.mulf %330, %331 : vector<16x1xf32>
    %333 = vector.broadcast %332 : vector<16x1xf32> to vector<16x128xf32>
    %334 = arith.subf %326, %333 : vector<16x128xf32>
    %335 = vector.broadcast %5 : vector<1x128xf32> to vector<16x128xf32>
    %336 = arith.mulf %334, %335 : vector<16x128xf32>
    %337 = arith.mulf %336, %336 : vector<16x128xf32>
    %cst_166 = arith.constant dense<0.000000e+00> : vector<16xf32>
    %338 = vector.multi_reduction <add>, %337, %cst_166 [1] : vector<16x128xf32> to vector<16xf32>
    %339 = vector.shape_cast %338 : vector<16xf32> to vector<16x1xf32>
    %cst_167 = arith.constant 3.125000e-02 : f32
    %340 = vector.broadcast %cst_167 : f32 to vector<16x1xf32>
    %341 = arith.mulf %339, %340 : vector<16x1xf32>
    %cst_168 = arith.constant 9.99999993E-9 : f32
    %342 = vector.broadcast %cst_168 : f32 to vector<16x1xf32>
    %343 = arith.addf %341, %342 : vector<16x1xf32>
    %344 = math.rsqrt %343 : vector<16x1xf32>
    %345 = vector.broadcast %344 : vector<16x1xf32> to vector<16x128xf32>
    %346 = arith.mulf %336, %345 : vector<16x128xf32>
    %347 = vector.broadcast %327 : vector<1x128xf32> to vector<16x128xf32>
    %348 = arith.mulf %346, %347 : vector<16x128xf32>
    %349 = vector.broadcast %328 : vector<1x128xf32> to vector<16x128xf32>
    %350 = arith.addf %348, %349 : vector<16x128xf32>
    %351 = vector.shape_cast %350 : vector<16x128xf32> to vector<2x8x128xf32>
    %c0_169 = arith.constant 0 : index
    %c0_170 = arith.constant 0 : index
    %c0_171 = arith.constant 0 : index
    %352 = vector.load %arg2[%c0_169, %c0_170, %c0_171] : memref<2x8x128xf32, #tpu.memory_space<vmem>>, vector<2x8x128xf32>
    %353 = arith.mulf %351, %352 : vector<2x8x128xf32>
    %cst_172 = arith.constant dense<0.000000e+00> : vector<2x8xf32>
    %354 = vector.multi_reduction <add>, %353, %cst_172 [2] : vector<2x8x128xf32> to vector<2x8xf32>
    %c0_173 = arith.constant 0 : index
    %c0_174 = arith.constant 0 : index
    %355 = vector.load %arg23[%c0_173, %c0_174] : memref<2x8xf32, #tpu.memory_space<vmem>>, vector<2x8xf32>
    tpu.vector_store %arg23[%c0_173, %c0_174], %354 {strides = array<i32>} : memref<2x8xf32, #tpu.memory_space<vmem>>, vector<2x8xf32>,
    %c0_175 = arith.constant 0 : index
    %c0_176 = arith.constant 0 : index
    %c0_177 = arith.constant 0 : index
    %356 = vector.load %arg3[%c0_175, %c0_176, %c0_177] : memref<2x8x128xf32, #tpu.memory_space<vmem>>, vector<2x8x128xf32>
    %357 = arith.mulf %351, %356 : vector<2x8x128xf32>
    %cst_178 = arith.constant dense<0.000000e+00> : vector<2x8xf32>
    %358 = vector.multi_reduction <add>, %357, %cst_178 [2] : vector<2x8x128xf32> to vector<2x8xf32>
    %c0_179 = arith.constant 0 : index
    %c0_180 = arith.constant 0 : index
    %359 = vector.load %arg24[%c0_179, %c0_180] : memref<2x8xf32, #tpu.memory_space<vmem>>, vector<2x8xf32>
    tpu.vector_store %arg24[%c0_179, %c0_180], %358 {strides = array<i32>} : memref<2x8xf32, #tpu.memory_space<vmem>>, vector<2x8xf32>,
    return
  }
  func.func @transform_0(%arg0: i32) -> (i32, i32, i32) {
    %c0_i32 = arith.constant 0 : i32
    %c0_i32_0 = arith.constant 0 : i32
    %c0_i32_1 = arith.constant 0 : i32
    return %arg0, %c0_i32, %c0_i32_0 : i32, i32, i32
  }
  func.func @transform_1(%arg0: i32) -> (i32, i32, i32) {
    %c0_i32 = arith.constant 0 : i32
    %c0_i32_0 = arith.constant 0 : i32
    %c0_i32_1 = arith.constant 0 : i32
    return %arg0, %c0_i32, %c0_i32_0 : i32, i32, i32
  }
  func.func @transform_2(%arg0: i32) -> (i32, i32, i32) {
    %c0_i32 = arith.constant 0 : i32
    %c0_i32_0 = arith.constant 0 : i32
    %c0_i32_1 = arith.constant 0 : i32
    return %arg0, %c0_i32, %c0_i32_0 : i32, i32, i32
  }
  func.func @transform_3(%arg0: i32) -> (i32, i32) {
    %c0_i32 = arith.constant 0 : i32
    %c0_i32_0 = arith.constant 0 : i32
    %c0_i32_1 = arith.constant 0 : i32
    return %c0_i32, %c0_i32_0 : i32, i32
  }
  func.func @transform_4(%arg0: i32) -> (i32, i32, i32) {
    %c0_i32 = arith.constant 0 : i32
    %c0_i32_0 = arith.constant 0 : i32
    %c0_i32_1 = arith.constant 0 : i32
    %c0_i32_2 = arith.constant 0 : i32
    return %c0_i32, %c0_i32_0, %c0_i32_1 : i32, i32, i32
  }
  func.func @transform_5(%arg0: i32) -> (i32, i32, i32) {
    %c0_i32 = arith.constant 0 : i32
    %c0_i32_0 = arith.constant 0 : i32
    %c0_i32_1 = arith.constant 0 : i32
    %c0_i32_2 = arith.constant 0 : i32
    return %c0_i32, %c0_i32_0, %c0_i32_1 : i32, i32, i32
  }
  func.func @transform_6(%arg0: i32) -> (i32, i32, i32) {
    %c0_i32 = arith.constant 0 : i32
    %c0_i32_0 = arith.constant 0 : i32
    %c0_i32_1 = arith.constant 0 : i32
    %c0_i32_2 = arith.constant 0 : i32
    return %c0_i32, %c0_i32_0, %c0_i32_1 : i32, i32, i32
  }
  func.func @transform_7(%arg0: i32) -> (i32, i32, i32) {
    %c0_i32 = arith.constant 0 : i32
    %c0_i32_0 = arith.constant 0 : i32
    %c0_i32_1 = arith.constant 0 : i32
    %c0_i32_2 = arith.constant 0 : i32
    return %c0_i32, %c0_i32_0, %c0_i32_1 : i32, i32, i32
  }
  func.func @transform_8(%arg0: i32) -> (i32, i32, i32) {
    %c0_i32 = arith.constant 0 : i32
    %c0_i32_0 = arith.constant 0 : i32
    %c0_i32_1 = arith.constant 0 : i32
    %c0_i32_2 = arith.constant 0 : i32
    return %c0_i32, %c0_i32_0, %c0_i32_1 : i32, i32, i32
  }
  func.func @transform_9(%arg0: i32) -> (i32, i32, i32) {
    %c0_i32 = arith.constant 0 : i32
    %c0_i32_0 = arith.constant 0 : i32
    %c0_i32_1 = arith.constant 0 : i32
    %c0_i32_2 = arith.constant 0 : i32
    return %c0_i32, %c0_i32_0, %c0_i32_1 : i32, i32, i32
  }
  func.func @transform_10(%arg0: i32) -> (i32, i32, i32) {
    %c0_i32 = arith.constant 0 : i32
    %c0_i32_0 = arith.constant 0 : i32
    %c0_i32_1 = arith.constant 0 : i32
    %c0_i32_2 = arith.constant 0 : i32
    return %c0_i32, %c0_i32_0, %c0_i32_1 : i32, i32, i32
  }
  func.func @transform_11(%arg0: i32) -> (i32, i32, i32) {
    %c0_i32 = arith.constant 0 : i32
    %c0_i32_0 = arith.constant 0 : i32
    %c0_i32_1 = arith.constant 0 : i32
    %c0_i32_2 = arith.constant 0 : i32
    return %c0_i32, %c0_i32_0, %c0_i32_1 : i32, i32, i32
  }
  func.func @transform_12(%arg0: i32) -> (i32, i32, i32, i32) {
    %c0_i32 = arith.constant 0 : i32
    %c0_i32_0 = arith.constant 0 : i32
    %c0_i32_1 = arith.constant 0 : i32
    %c0_i32_2 = arith.constant 0 : i32
    %c0_i32_3 = arith.constant 0 : i32
    return %c0_i32, %c0_i32_0, %c0_i32_1, %c0_i32_2 : i32, i32, i32, i32
  }
  func.func @transform_13(%arg0: i32) -> (i32, i32, i32) {
    %c0_i32 = arith.constant 0 : i32
    %c0_i32_0 = arith.constant 0 : i32
    %c0_i32_1 = arith.constant 0 : i32
    %c0_i32_2 = arith.constant 0 : i32
    return %c0_i32, %c0_i32_0, %c0_i32_1 : i32, i32, i32
  }
  func.func @transform_14(%arg0: i32) -> (i32, i32, i32) {
    %c0_i32 = arith.constant 0 : i32
    %c0_i32_0 = arith.constant 0 : i32
    %c0_i32_1 = arith.constant 0 : i32
    %c0_i32_2 = arith.constant 0 : i32
    return %c0_i32, %c0_i32_0, %c0_i32_1 : i32, i32, i32
  }
  func.func @transform_15(%arg0: i32) -> (i32, i32, i32) {
    %c0_i32 = arith.constant 0 : i32
    %c0_i32_0 = arith.constant 0 : i32
    %c0_i32_1 = arith.constant 0 : i32
    %c0_i32_2 = arith.constant 0 : i32
    return %c0_i32, %c0_i32_0, %c0_i32_1 : i32, i32, i32
  }
  func.func @transform_16(%arg0: i32) -> (i32, i32, i32) {
    %c0_i32 = arith.constant 0 : i32
    %c0_i32_0 = arith.constant 0 : i32
    %c0_i32_1 = arith.constant 0 : i32
    %c0_i32_2 = arith.constant 0 : i32
    return %c0_i32, %c0_i32_0, %c0_i32_1 : i32, i32, i32
  }
  func.func @transform_17(%arg0: i32) -> (i32, i32, i32) {
    %c0_i32 = arith.constant 0 : i32
    %c0_i32_0 = arith.constant 0 : i32
    %c0_i32_1 = arith.constant 0 : i32
    %c0_i32_2 = arith.constant 0 : i32
    return %c0_i32, %c0_i32_0, %c0_i32_1 : i32, i32, i32
  }
  func.func @transform_18(%arg0: i32) -> (i32, i32, i32) {
    %c0_i32 = arith.constant 0 : i32
    %c0_i32_0 = arith.constant 0 : i32
    %c0_i32_1 = arith.constant 0 : i32
    %c0_i32_2 = arith.constant 0 : i32
    return %c0_i32, %c0_i32_0, %c0_i32_1 : i32, i32, i32
  }
  func.func @transform_19(%arg0: i32) -> (i32, i32, i32) {
    %c0_i32 = arith.constant 0 : i32
    %c0_i32_0 = arith.constant 0 : i32
    %c0_i32_1 = arith.constant 0 : i32
    %c0_i32_2 = arith.constant 0 : i32
    return %c0_i32, %c0_i32_0, %c0_i32_1 : i32, i32, i32
  }
  func.func @transform_20(%arg0: i32) -> (i32, i32) {
    %c0_i32 = arith.constant 0 : i32
    %c0_i32_0 = arith.constant 0 : i32
    %c0_i32_1 = arith.constant 0 : i32
    return %c0_i32, %c0_i32_0 : i32, i32
  }
  func.func @transform_21(%arg0: i32) -> (i32, i32) {
    %c0_i32 = arith.constant 0 : i32
    %c0_i32_0 = arith.constant 0 : i32
    %c0_i32_1 = arith.constant 0 : i32
    return %c0_i32, %c0_i32_0 : i32, i32
  }
  func.func @transform_22(%arg0: i32) -> (i32, i32) {
    %c0_i32 = arith.constant 0 : i32
    %c0_i32_0 = arith.constant 0 : i32
    return %arg0, %c0_i32 : i32, i32
  }
  func.func @transform_23(%arg0: i32) -> (i32, i32) {
    %c0_i32 = arith.constant 0 : i32
    %c0_i32_0 = arith.constant 0 : i32
    return %arg0, %c0_i32 : i32, i32
  }
}

</mosaic_0001>

<llo_original>
// kernel: sasrec_forward.1
$region0: #{sasrec_forward.1}
  #allocation0 [shape = 'u32[]', space=smem, size = 0x4, offset = 0x4, fixed_abs, tag = 'smem constant byte address 0x4 - core index']
  #allocation1 [shape = 'u32[144,128]{1,0:T(1,128)}', space=vmem, size = 0x12000, scoped, tag = 'internal scratch']
  %s0 = inlined_call_operand.vmem [shape: f32[2,8,128], index: 0, kind: input, shape index: {}]
  %s1 = inlined_call_operand.vmem [shape: f32[2,8,128], index: 1, kind: input, shape index: {}]
  %s2 = inlined_call_operand.vmem [shape: f32[2,8,128], index: 2, kind: input, shape index: {}]
  %s3 = inlined_call_operand.vmem [shape: f32[8,8], index: 3, kind: input, shape index: {}]
  %s4 = inlined_call_operand.vmem [shape: f32[2,1,128], index: 4, kind: input, shape index: {}]
  %s5 = inlined_call_operand.vmem [shape: f32[2,1,128], index: 5, kind: input, shape index: {}]
  %s6 = inlined_call_operand.vmem [shape: bf16[2,128,128], index: 6, kind: input, shape index: {}]
  %s7 = inlined_call_operand.vmem [shape: bf16[2,128,128], index: 7, kind: input, shape index: {}]
  %s8 = inlined_call_operand.vmem [shape: bf16[2,128,128], index: 8, kind: input, shape index: {}]
  %s9 = inlined_call_operand.vmem [shape: f32[2,1,128], index: 9, kind: input, shape index: {}]
  %s10 = inlined_call_operand.vmem [shape: f32[2,1,128], index: 10, kind: input, shape index: {}]
  %s11 = inlined_call_operand.vmem [shape: f32[2,1,128], index: 11, kind: input, shape index: {}]
  %s12 = inlined_call_operand.vmem [shape: bf16[2,2,16,128], index: 12, kind: input, shape index: {}]
  %s13 = inlined_call_operand.vmem [shape: f32[2,1,128], index: 13, kind: input, shape index: {}]
  %s14 = inlined_call_operand.vmem [shape: f32[2,1,128], index: 14, kind: input, shape index: {}]
  %s15 = inlined_call_operand.vmem [shape: f32[2,1,128], index: 15, kind: input, shape index: {}]
  %s16 = inlined_call_operand.vmem [shape: bf16[2,128,128], index: 16, kind: input, shape index: {}]
  %s17 = inlined_call_operand.vmem [shape: f32[2,1,128], index: 17, kind: input, shape index: {}]
  %s18 = inlined_call_operand.vmem [shape: bf16[2,128,128], index: 18, kind: input, shape index: {}]
  %s19 = inlined_call_operand.vmem [shape: f32[2,1,128], index: 19, kind: input, shape index: {}]
  %s20 = inlined_call_operand.vmem [shape: f32[1,128], index: 20, kind: input, shape index: {}]
  %s21 = inlined_call_operand.vmem [shape: f32[1,128], index: 21, kind: input, shape index: {}]
  %s22 = inlined_call_operand.hbm [shape: f32[2,8], index: 22, kind: output, shape index: {0}]
  %s23 = inlined_call_operand.hbm [shape: f32[2,8], index: 23, kind: output, shape index: {1}]
  %24 = xla_tuple %s22, %s23
  %s25 = sld [smem:[#allocation0]]
  $region106: #{sasrec_forward.1} parent=0
    _
  %s27 = ssub.s32 1, %s25
  %s28 = scalar_select 0, %s27, %s25
  $region1: #{sasrec_forward.1} parent=0
    #allocation2 [shape = 'u8[1024]{0}', space=vmem, size = 0x400, scoped, tag = 'output window, operand 0, single buffered']
    #allocation3 [shape = 's32[1]{0}', space=sflag, size = 0x4, scoped, tag = 'scoped memory for sasrec_forward.1']
    #allocation4 [shape = 'u8[1024]{0}', space=vmem, size = 0x400, scoped, tag = 'output window, operand 1, single buffered']
    #allocation5 [shape = 's32[1]{0}', space=sflag, size = 0x4, scoped, tag = 'scoped memory for sasrec_forward.1']
    %29 = vsyncpa [#allocation3], 0
    %30 = vsyncpa [#allocation5], 0
    // Predicated region
    $region2: #{sasrec_forward.1} parent=1 // pred_check
      _
    $region3: #{sasrec_forward.1} parent=1 // pred_check_branch
      %32 = sbr.rel (0) target = $region5
    $region4: #{sasrec_forward.1} parent=1 // pred_region
      _
    $region5: #{sasrec_forward.1} parent=1 // pred_fallthru
      _
    // Predicated region
    $region6: #{sasrec_forward.1} parent=1 // pred_check
      _
    $region7: #{sasrec_forward.1} parent=1 // pred_check_branch
      %34 = sbr.rel (0) target = $region9
    $region8: #{sasrec_forward.1} parent=1 // pred_region
      _
    $region9: #{sasrec_forward.1} parent=1 // pred_fallthru
      _
    // Predicated region
    $region10: #{sasrec_forward.1} parent=1 // pred_check
      _
    $region11: #{sasrec_forward.1} parent=1 // pred_check_branch
      %36 = sbr.rel (0) target = $region13
    $region12: #{sasrec_forward.1} parent=1 // pred_region
      _
    $region13: #{sasrec_forward.1} parent=1 // pred_fallthru
      _
    // Predicated region
    $region14: #{sasrec_forward.1} parent=1 // pred_check
      _
    $region15: #{sasrec_forward.1} parent=1 // pred_check_branch
      %38 = sbr.rel (0) target = $region17
    $region16: #{sasrec_forward.1} parent=1 // pred_region
      _
    $region17: #{sasrec_forward.1} parent=1 // pred_fallthru
      _
    // Predicated region
    $region18: #{sasrec_forward.1} parent=1 // pred_check
      _
    $region19: #{sasrec_forward.1} parent=1 // pred_check_branch
      %40 = sbr.rel (0) target = $region21
    $region20: #{sasrec_forward.1} parent=1 // pred_region
      _
    $region21: #{sasrec_forward.1} parent=1 // pred_fallthru
      _
    // Predicated region
    $region22: #{sasrec_forward.1} parent=1 // pred_check
      _
    $region23: #{sasrec_forward.1} parent=1 // pred_check_branch
      %42 = sbr.rel (0) target = $region25
    $region24: #{sasrec_forward.1} parent=1 // pred_region
      _
    $region25: #{sasrec_forward.1} parent=1 // pred_fallthru
      _
    // Predicated region
    $region26: #{sasrec_forward.1} parent=1 // pred_check
      _
    $region27: #{sasrec_forward.1} parent=1 // pred_check_branch
      %44 = sbr.rel (0) target = $region29
    $region28: #{sasrec_forward.1} parent=1 // pred_region
      _
    $region29: #{sasrec_forward.1} parent=1 // pred_fallthru
      _
    // Predicated region
    $region30: #{sasrec_forward.1} parent=1 // pred_check
      _
    $region31: #{sasrec_forward.1} parent=1 // pred_check_branch
      %46 = sbr.rel (0) target = $region33
    $region32: #{sasrec_forward.1} parent=1 // pred_region
      _
    $region33: #{sasrec_forward.1} parent=1 // pred_fallthru
      _
    // Predicated region
    $region34: #{sasrec_forward.1} parent=1 // pred_check
      _
    $region35: #{sasrec_forward.1} parent=1 // pred_check_branch
      %48 = sbr.rel (0) target = $region37
    $region36: #{sasrec_forward.1} parent=1 // pred_region
      _
    $region37: #{sasrec_forward.1} parent=1 // pred_fallthru
      _
    // Predicated region
    $region38: #{sasrec_forward.1} parent=1 // pred_check
      _
    $region39: #{sasrec_forward.1} parent=1 // pred_check_branch
      %50 = sbr.rel (0) target = $region41
    $region40: #{sasrec_forward.1} parent=1 // pred_region
      _
    $region41: #{sasrec_forward.1} parent=1 // pred_fallthru
      _
    // Predicated region
    $region42: #{sasrec_forward.1} parent=1 // pred_check
      _
    $region43: #{sasrec_forward.1} parent=1 // pred_check_branch
      %52 = sbr.rel (0) target = $region45
    $region44: #{sasrec_forward.1} parent=1 // pred_region
      _
    $region45: #{sasrec_forward.1} parent=1 // pred_fallthru
      _
    // Predicated region
    $region46: #{sasrec_forward.1} parent=1 // pred_check
      _
    $region47: #{sasrec_forward.1} parent=1 // pred_check_branch
      %54 = sbr.rel (0) target = $region49
    $region48: #{sasrec_forward.1} parent=1 // pred_region
      _
    $region49: #{sasrec_forward.1} parent=1 // pred_fallthru
      _
    // Predicated region
    $region50: #{sasrec_forward.1} parent=1 // pred_check
      _
    $region51: #{sasrec_forward.1} parent=1 // pred_check_branch
      %56 = sbr.rel (0) target = $region53
    $region52: #{sasrec_forward.1} parent=1 // pred_region
      _
    $region53: #{sasrec_forward.1} parent=1 // pred_fallthru
      _
    // Predicated region
    $region54: #{sasrec_forward.1} parent=1 // pred_check
      _
    $region55: #{sasrec_forward.1} parent=1 // pred_check_branch
      %58 = sbr.rel (0) target = $region57
    $region56: #{sasrec_forward.1} parent=1 // pred_region
      _
    $region57: #{sasrec_forward.1} parent=1 // pred_fallthru
      _
    // Predicated region
    $region58: #{sasrec_forward.1} parent=1 // pred_check
      _
    $region59: #{sasrec_forward.1} parent=1 // pred_check_branch
      %60 = sbr.rel (0) target = $region61
    $region60: #{sasrec_forward.1} parent=1 // pred_region
      _
    $region61: #{sasrec_forward.1} parent=1 // pred_fallthru
      _
    // Predicated region
    $region62: #{sasrec_forward.1} parent=1 // pred_check
      _
    $region63: #{sasrec_forward.1} parent=1 // pred_check_branch
      %62 = sbr.rel (0) target = $region65
    $region64: #{sasrec_forward.1} parent=1 // pred_region
      _
    $region65: #{sasrec_forward.1} parent=1 // pred_fallthru
      _
    // Predicated region
    $region66: #{sasrec_forward.1} parent=1 // pred_check
      _
    $region67: #{sasrec_forward.1} parent=1 // pred_check_branch
      %64 = sbr.rel (0) target = $region69
    $region68: #{sasrec_forward.1} parent=1 // pred_region
      _
    $region69: #{sasrec_forward.1} parent=1 // pred_fallthru
      _
    // Predicated region
    $region70: #{sasrec_forward.1} parent=1 // pred_check
      _
    $region71: #{sasrec_forward.1} parent=1 // pred_check_branch
      %66 = sbr.rel (0) target = $region73
    $region72: #{sasrec_forward.1} parent=1 // pred_region
      _
    $region73: #{sasrec_forward.1} parent=1 // pred_fallthru
      _
    // Predicated region
    $region74: #{sasrec_forward.1} parent=1 // pred_check
      _
    $region75: #{sasrec_forward.1} parent=1 // pred_check_branch
      %68 = sbr.rel (0) target = $region77
    $region76: #{sasrec_forward.1} parent=1 // pred_region
      _
    $region77: #{sasrec_forward.1} parent=1 // pred_fallthru
      _
    // Predicated region
    $region78: #{sasrec_forward.1} parent=1 // pred_check
      _
    $region79: #{sasrec_forward.1} parent=1 // pred_check_branch
      %70 = sbr.rel (0) target = $region81
    $region80: #{sasrec_forward.1} parent=1 // pred_region
      _
    $region81: #{sasrec_forward.1} parent=1 // pred_fallthru
      _
    // Predicated region
    $region82: #{sasrec_forward.1} parent=1 // pred_check
      _
    $region83: #{sasrec_forward.1} parent=1 // pred_check_branch
      %72 = sbr.rel (0) target = $region85
    $region84: #{sasrec_forward.1} parent=1 // pred_region
      _
    $region85: #{sasrec_forward.1} parent=1 // pred_fallthru
      _
    // Predicated region
    $region86: #{sasrec_forward.1} parent=1 // pred_check
      _
    $region87: #{sasrec_forward.1} parent=1 // pred_check_branch
      %74 = sbr.rel (0) target = $region89
    $region88: #{sasrec_forward.1} parent=1 // pred_region
      _
    $region89: #{sasrec_forward.1} parent=1 // pred_fallthru
      _
    %v76 = vld [vmem:[%s0] sm:$0xff]
    %v77 = vld [vmem:[%s0 + $0x8] sm:$0xff]
    %v78 = vlaneseq
    %v79 = vand.u32 %v78, 127
    %vm80 = vcmp.lt.s32.totalorder %v79, 32
    %v81 = vsel %vm80, 1, 0
    %v82 = vcvt.s32.f32 %v81
    %v83 = vld [vmem:[%s3] sm:$0xff]
    %v84 = vld [vmem:[%s4] sm:$0x1]
    %v85 = vld [vmem:[%s5] sm:$0x1]
    %86 = vadd.xlane.f32.xlu0 %v76
    %v87 = vpop.xlane.xlu0 %86
    %88 = vadd.xlane.f32.xlu0 %v77
    %v89 = vpop.xlane.xlu0 %88
    %v90 = vmul.f32 %v87, 0.03125
    %v91 = vmul.f32 %v89, 0.03125
    %v92 = vsub.f32 %v76, %v90
    %v93 = vsub.f32 %v77, %v91
    %v94 = vmul.f32 %v92, %v82
    %v95 = vmul.f32 %v93, %v82
    %v96 = vmul.f32 %v94, %v94
    %v97 = vmul.f32 %v95, %v95
    %98 = vadd.xlane.f32.xlu0 %v96
    %v99 = vpop.xlane.xlu0 %98
    %100 = vadd.xlane.f32.xlu0 %v97
    %v101 = vpop.xlane.xlu0 %100
    %v102 = vmul.f32 %v99, 0.03125
    %v103 = vmul.f32 %v101, 0.03125
    %v104 = vadd.f32 %v102, 1e-08
    %v105 = vadd.f32 %v103, 1e-08
    %v106 = vrsqrt.pop %v104
    %v107 = vrsqrt.pop %v105
    %v108 = vmul.f32 %v94, %v106
    %v109 = vmul.f32 %v95, %v107
    %v111 = vlaneseq
    %v112 = vshrl.u32 %v111, 7
    %v113 = vsub.s32 0, %v112
    %v114 = vrot.slane %v84, %v113
    %v116 = vmul.f32 %v108, %v114
    %v117 = vmul.f32 %v109, %v114
    %v119 = vlaneseq
    %v120 = vshrl.u32 %v119, 7
    %v121 = vsub.s32 0, %v120
    %v122 = vrot.slane %v85, %v121
    %v124 = vadd.f32 %v116, %v122
    %v125 = vadd.f32 %v117, %v122
    %v126 = vpack.c.bf16 %v125, %v124
    %v127 = vld [vmem:[%s6] sm:$0xf]
    %v128 = vld [vmem:[%s6 + $0x4] sm:$0xf]
    %v129 = vld [vmem:[%s6 + $0x8] sm:$0xf]
    %v130 = vld [vmem:[%s6 + $0xc] sm:$0xf]
    %v131 = vld [vmem:[%s6 + $0x10] sm:$0xf]
    %v132 = vld [vmem:[%s6 + $0x14] sm:$0xf]
    %v133 = vld [vmem:[%s6 + $0x18] sm:$0xf]
    %v134 = vld [vmem:[%s6 + $0x1c] sm:$0xf]
    %v135 = vld [vmem:[%s6 + $0x20] sm:$0xf]
    %v136 = vld [vmem:[%s6 + $0x24] sm:$0xf]
    %v137 = vld [vmem:[%s6 + $0x28] sm:$0xf]
    %v138 = vld [vmem:[%s6 + $0x2c] sm:$0xf]
    %v139 = vld [vmem:[%s6 + $0x30] sm:$0xf]
    %v140 = vld [vmem:[%s6 + $0x34] sm:$0xf]
    %v141 = vld [vmem:[%s6 + $0x38] sm:$0xf]
    %v142 = vld [vmem:[%s6 + $0x3c] sm:$0xf]
    %v143 = vld [vmem:[%s9] sm:$0x1]
    %v145 = vlaneseq
    %v146 = vshrl.u32 %v145, 7
    %v147 = vsub.s32 0, %v146
    %v148 = vrot.slane %v143, %v147
    %v166 = vunpack.c.l.b16 %v127
    %v167 = vunpack.c.l.b16 %v128
    %v168 = vunpack.c.l.b16 %v129
    %v169 = vunpack.c.l.b16 %v130
    %v170 = vunpack.c.l.b16 %v131
    %v171 = vunpack.c.l.b16 %v132
    %v172 = vunpack.c.l.b16 %v133
    %v173 = vunpack.c.l.b16 %v134
    %v174 = vunpack.c.l.b16 %v135
    %v175 = vunpack.c.l.b16 %v136
    %v176 = vunpack.c.l.b16 %v137
    %v177 = vunpack.c.l.b16 %v138
    %v178 = vunpack.c.l.b16 %v139
    %v179 = vunpack.c.l.b16 %v140
    %v180 = vunpack.c.l.b16 %v141
    %v181 = vunpack.c.l.b16 %v142
    %v182 = vpack.c.b16 %v167, %v166
    %v183 = vpack.c.b16 %v169, %v168
    %v184 = vpack.c.b16 %v171, %v170
    %v185 = vpack.c.b16 %v173, %v172
    %v186 = vpack.c.b16 %v175, %v174
    %v187 = vpack.c.b16 %v177, %v176
    %v188 = vpack.c.b16 %v179, %v178
    %v189 = vpack.c.b16 %v181, %v180
    %198 = vmatprep.subr.bf16.mxu0 0
    %199 = vmatpush1.bf16.msra.mxu0 %v189
    %200 = vmatprep.subr.bf16.mxu0 0
    %201 = vmatpush1.bf16.msra.mxu0 %v188
    %202 = vmatprep.subr.bf16.mxu0 0
    %203 = vmatpush1.bf16.msra.mxu0 %v187
    %204 = vmatprep.subr.bf16.mxu0 0
    %205 = vmatpush1.bf16.msra.mxu0 %v186
    %206 = vmatprep.subr.bf16.mxu0 0
    %207 = vmatpush1.bf16.msra.mxu0 %v185
    %208 = vmatprep.subr.bf16.mxu0 0
    %209 = vmatpush1.bf16.msra.mxu0 %v184
    %210 = vmatprep.subr.bf16.mxu0 0
    %211 = vmatpush1.bf16.msra.mxu0 %v183
    %212 = vmatprep.subr.bf16.mxu0 0
    %213 = vmatpush1.bf16.msra.mxu0 %v182
    %214 = vmatprep.subr.bf16.mxu0 0
    %215 = vmatpush2.bf16.msra.mxu0 0
    %216 = vmatprep.subr.bf16.mxu0 0
    %217 = vmatpush2.bf16.msra.mxu0 0
    %218 = vmatprep.subr.bf16.mxu0 0
    %219 = vmatpush2.bf16.msra.mxu0 0
    %220 = vmatprep.subr.bf16.mxu0 0
    %221 = vmatpush2.bf16.msra.mxu0 0
    %222 = vmatprep.subr.bf16.mxu0 0
    %223 = vmatpush2.bf16.msra.mxu0 0
    %224 = vmatprep.subr.bf16.mxu0 0
    %225 = vmatpush2.bf16.msra.mxu0 0
    %226 = vmatprep.subr.bf16.mxu0 0
    %227 = vmatpush2.bf16.msra.mxu0 0
    %228 = vmatprep.subr.bf16.mxu0 0
    %229 = vmatpush2.bf16.msra.mxu0 0
    %230 = vmatprep.mubr.bf16.mxu0 0
    %231 = vmatmul.mubr.bf16.gmra.mxu0 %v126
    %v232 = vpop.f32.mrf.mxu0
    %v233 = vadd.f32 %v148, %v232
    %v234 = vpop.f32.mrf.mxu0
    %v235 = vpop.f32.mrf.mxu0
    %v236 = vadd.f32 %v148, %v235
    %v237 = vpop.f32.mrf.mxu0
    %238 = vdwg.mxu0
    %v239 = vpack.c.bf16 %v77, %v76
    %v240 = vld [vmem:[%s7] sm:$0xf]
    %v241 = vld [vmem:[%s7 + $0x4] sm:$0xf]
    %v242 = vld [vmem:[%s7 + $0x8] sm:$0xf]
    %v243 = vld [vmem:[%s7 + $0xc] sm:$0xf]
    %v244 = vld [vmem:[%s7 + $0x10] sm:$0xf]
    %v245 = vld [vmem:[%s7 + $0x14] sm:$0xf]
    %v246 = vld [vmem:[%s7 + $0x18] sm:$0xf]
    %v247 = vld [vmem:[%s7 + $0x1c] sm:$0xf]
    %v248 = vld [vmem:[%s7 + $0x20] sm:$0xf]
    %v249 = vld [vmem:[%s7 + $0x24] sm:$0xf]
    %v250 = vld [vmem:[%s7 + $0x28] sm:$0xf]
    %v251 = vld [vmem:[%s7 + $0x2c] sm:$0xf]
    %v252 = vld [vmem:[%s7 + $0x30] sm:$0xf]
    %v253 = vld [vmem:[%s7 + $0x34] sm:$0xf]
    %v254 = vld [vmem:[%s7 + $0x38] sm:$0xf]
    %v255 = vld [vmem:[%s7 + $0x3c] sm:$0xf]
    %v256 = vld [vmem:[%s10] sm:$0x1]
    %v258 = vlaneseq
    %v259 = vshrl.u32 %v258, 7
    %v260 = vsub.s32 0, %v259
    %v261 = vrot.slane %v256, %v260
    %v279 = vunpack.c.l.b16 %v240
    %v280 = vunpack.c.l.b16 %v241
    %v281 = vunpack.c.l.b16 %v242
    %v282 = vunpack.c.l.b16 %v243
    %v283 = vunpack.c.l.b16 %v244
    %v284 = vunpack.c.l.b16 %v245
    %v285 = vunpack.c.l.b16 %v246
    %v286 = vunpack.c.l.b16 %v247
    %v287 = vunpack.c.l.b16 %v248
    %v288 = vunpack.c.l.b16 %v249
    %v289 = vunpack.c.l.b16 %v250
    %v290 = vunpack.c.l.b16 %v251
    %v291 = vunpack.c.l.b16 %v252
    %v292 = vunpack.c.l.b16 %v253
    %v293 = vunpack.c.l.b16 %v254
    %v294 = vunpack.c.l.b16 %v255
    %v295 = vpack.c.b16 %v280, %v279
    %v296 = vpack.c.b16 %v282, %v281
    %v297 = vpack.c.b16 %v284, %v283
    %v298 = vpack.c.b16 %v286, %v285
    %v299 = vpack.c.b16 %v288, %v287
    %v300 = vpack.c.b16 %v290, %v289
    %v301 = vpack.c.b16 %v292, %v291
    %v302 = vpack.c.b16 %v294, %v293
    %311 = vmatprep.subr.bf16.mxu0 0
    %312 = vmatpush1.bf16.msra.mxu0 %v302
    %313 = vmatprep.subr.bf16.mxu0 0
    %314 = vmatpush1.bf16.msra.mxu0 %v301
    %315 = vmatprep.subr.bf16.mxu0 0
    %316 = vmatpush1.bf16.msra.mxu0 %v300
    %317 = vmatprep.subr.bf16.mxu0 0
    %318 = vmatpush1.bf16.msra.mxu0 %v299
    %319 = vmatprep.subr.bf16.mxu0 0
    %320 = vmatpush1.bf16.msra.mxu0 %v298
    %321 = vmatprep.subr.bf16.mxu0 0
    %322 = vmatpush1.bf16.msra.mxu0 %v297
    %323 = vmatprep.subr.bf16.mxu0 0
    %324 = vmatpush1.bf16.msra.mxu0 %v296
    %325 = vmatprep.subr.bf16.mxu0 0
    %326 = vmatpush1.bf16.msra.mxu0 %v295
    %327 = vmatprep.subr.bf16.mxu0 0
    %328 = vmatpush2.bf16.msra.mxu0 0
    %329 = vmatprep.subr.bf16.mxu0 0
    %330 = vmatpush2.bf16.msra.mxu0 0
    %331 = vmatprep.subr.bf16.mxu0 0
    %332 = vmatpush2.bf16.msra.mxu0 0
    %333 = vmatprep.subr.bf16.mxu0 0
    %334 = vmatpush2.bf16.msra.mxu0 0
    %335 = vmatprep.subr.bf16.mxu0 0
    %336 = vmatpush2.bf16.msra.mxu0 0
    %337 = vmatprep.subr.bf16.mxu0 0
    %338 = vmatpush2.bf16.msra.mxu0 0
    %339 = vmatprep.subr.bf16.mxu0 0
    %340 = vmatpush2.bf16.msra.mxu0 0
    %341 = vmatprep.subr.bf16.mxu0 0
    %342 = vmatpush2.bf16.msra.mxu0 0
    %343 = vmatprep.mubr.bf16.mxu0 0
    %344 = vmatmul.mubr.bf16.gmra.mxu0 %v239
    %v345 = vpop.f32.mrf.mxu0
    %v346 = vadd.f32 %v261, %v345
    %v347 = vpop.f32.mrf.mxu0
    %v348 = vpop.f32.mrf.mxu0
    %v349 = vadd.f32 %v261, %v348
    %v350 = vpop.f32.mrf.mxu0
    %351 = vdwg.mxu0
    %v352 = vld [vmem:[%s8] sm:$0xf]
    %v353 = vld [vmem:[%s8 + $0x4] sm:$0xf]
    %v354 = vld [vmem:[%s8 + $0x8] sm:$0xf]
    %v355 = vld [vmem:[%s8 + $0xc] sm:$0xf]
    %v356 = vld [vmem:[%s8 + $0x10] sm:$0xf]
    %v357 = vld [vmem:[%s8 + $0x14] sm:$0xf]
    %v358 = vld [vmem:[%s8 + $0x18] sm:$0xf]
    %v359 = vld [vmem:[%s8 + $0x1c] sm:$0xf]
    %v360 = vld [vmem:[%s8 + $0x20] sm:$0xf]
    %v361 = vld [vmem:[%s8 + $0x24] sm:$0xf]
    %v362 = vld [vmem:[%s8 + $0x28] sm:$0xf]
    %v363 = vld [vmem:[%s8 + $0x2c] sm:$0xf]
    %v364 = vld [vmem:[%s8 + $0x30] sm:$0xf]
    %v365 = vld [vmem:[%s8 + $0x34] sm:$0xf]
    %v366 = vld [vmem:[%s8 + $0x38] sm:$0xf]
    %v367 = vld [vmem:[%s8 + $0x3c] sm:$0xf]
    %v368 = vld [vmem:[%s11] sm:$0x1]
    %v370 = vlaneseq
    %v371 = vshrl.u32 %v370, 7
    %v372 = vsub.s32 0, %v371
    %v373 = vrot.slane %v368, %v372
    %v391 = vunpack.c.l.b16 %v352
    %v392 = vunpack.c.l.b16 %v353
    %v393 = vunpack.c.l.b16 %v354
    %v394 = vunpack.c.l.b16 %v355
    %v395 = vunpack.c.l.b16 %v356
    %v396 = vunpack.c.l.b16 %v357
    %v397 = vunpack.c.l.b16 %v358
    %v398 = vunpack.c.l.b16 %v359
    %v399 = vunpack.c.l.b16 %v360
    %v400 = vunpack.c.l.b16 %v361
    %v401 = vunpack.c.l.b16 %v362
    %v402 = vunpack.c.l.b16 %v363
    %v403 = vunpack.c.l.b16 %v364
    %v404 = vunpack.c.l.b16 %v365
    %v405 = vunpack.c.l.b16 %v366
    %v406 = vunpack.c.l.b16 %v367
    %v407 = vpack.c.b16 %v392, %v391
    %v408 = vpack.c.b16 %v394, %v393
    %v409 = vpack.c.b16 %v396, %v395
    %v410 = vpack.c.b16 %v398, %v397
    %v411 = vpack.c.b16 %v400, %v399
    %v412 = vpack.c.b16 %v402, %v401
    %v413 = vpack.c.b16 %v404, %v403
    %v414 = vpack.c.b16 %v406, %v405
    %423 = vmatprep.subr.bf16.mxu0 0
    %424 = vmatpush1.bf16.msra.mxu0 %v414
    %425 = vmatprep.subr.bf16.mxu0 0
    %426 = vmatpush1.bf16.msra.mxu0 %v413
    %427 = vmatprep.subr.bf16.mxu0 0
    %428 = vmatpush1.bf16.msra.mxu0 %v412
    %429 = vmatprep.subr.bf16.mxu0 0
    %430 = vmatpush1.bf16.msra.mxu0 %v411
    %431 = vmatprep.subr.bf16.mxu0 0
    %432 = vmatpush1.bf16.msra.mxu0 %v410
    %433 = vmatprep.subr.bf16.mxu0 0
    %434 = vmatpush1.bf16.msra.mxu0 %v409
    %435 = vmatprep.subr.bf16.mxu0 0
    %436 = vmatpush1.bf16.msra.mxu0 %v408
    %437 = vmatprep.subr.bf16.mxu0 0
    %438 = vmatpush1.bf16.msra.mxu0 %v407
    %439 = vmatprep.subr.bf16.mxu0 0
    %440 = vmatpush2.bf16.msra.mxu0 0
    %441 = vmatprep.subr.bf16.mxu0 0
    %442 = vmatpush2.bf16.msra.mxu0 0
    %443 = vmatprep.subr.bf16.mxu0 0
    %444 = vmatpush2.bf16.msra.mxu0 0
    %445 = vmatprep.subr.bf16.mxu0 0
    %446 = vmatpush2.bf16.msra.mxu0 0
    %447 = vmatprep.subr.bf16.mxu0 0
    %448 = vmatpush2.bf16.msra.mxu0 0
    %449 = vmatprep.subr.bf16.mxu0 0
    %450 = vmatpush2.bf16.msra.mxu0 0
    %451 = vmatprep.subr.bf16.mxu0 0
    %452 = vmatpush2.bf16.msra.mxu0 0
    %453 = vmatprep.subr.bf16.mxu0 0
    %454 = vmatpush2.bf16.msra.mxu0 0
    %455 = vmatprep.mubr.bf16.mxu0 0
    %456 = vmatmul.mubr.bf16.gmra.mxu0 %v239
    %v457 = vpop.f32.mrf.mxu0
    %v458 = vadd.f32 %v373, %v457
    %v459 = vpop.f32.mrf.mxu0
    %v460 = vpop.f32.mrf.mxu0
    %v461 = vadd.f32 %v373, %v460
    %v462 = vpop.f32.mrf.mxu0
    %463 = vdwg.mxu0
    %v464 = vpack.c.bf16 %v233, %v233
    %v465 = vpack.c.bf16 %v236, %v236
    %v466 = vpack.c.bf16 %v346, %v346
    %v467 = vpack.c.bf16 %v349, %v349
    %v468 = vpack.c.bf16 %v458, %v458
    %v469 = vpack.c.bf16 %v461, %v461
    %vm470 = vcmask 130048
    %v472 = vsel %vm470, %v464, 0
    %v475 = vsel %vm470, %v466, 0
    %477 = vmatprep.subr.bf16.mxu0 0
    %478 = vmatpush1.bf16.xpose.msra.mxu0 0
    %479 = vmatprep.subr.bf16.mxu0 0
    %480 = vmatpush1.bf16.xpose.msra.mxu0 0
    %481 = vmatprep.subr.bf16.mxu0 0
    %482 = vmatpush1.bf16.xpose.msra.mxu0 0
    %483 = vmatprep.subr.bf16.mxu0 0
    %484 = vmatpush1.bf16.xpose.msra.mxu0 0
    %485 = vmatprep.subr.bf16.mxu0 0
    %486 = vmatpush1.bf16.xpose.msra.mxu0 0
    %487 = vmatprep.subr.bf16.mxu0 0
    %488 = vmatpush1.bf16.xpose.msra.mxu0 0
    %489 = vmatprep.subr.bf16.mxu0 0
    %490 = vmatpush1.bf16.xpose.msra.mxu0 0
    %491 = vmatprep.subr.bf16.mxu0 0
    %492 = vmatpush1.bf16.xpose.msra.mxu0 %v475
    %493 = vmatprep.subr.bf16.mxu0 0
    %494 = vmatpush2.bf16.xpose.msra.mxu0 0
    %495 = vmatprep.subr.bf16.mxu0 0
    %496 = vmatpush2.bf16.xpose.msra.mxu0 0
    %497 = vmatprep.subr.bf16.mxu0 0
    %498 = vmatpush2.bf16.xpose.msra.mxu0 0
    %499 = vmatprep.subr.bf16.mxu0 0
    %500 = vmatpush2.bf16.xpose.msra.mxu0 0
    %501 = vmatprep.subr.bf16.mxu0 0
    %502 = vmatpush2.bf16.xpose.msra.mxu0 0
    %503 = vmatprep.subr.bf16.mxu0 0
    %504 = vmatpush2.bf16.xpose.msra.mxu0 0
    %505 = vmatprep.subr.bf16.mxu0 0
    %506 = vmatpush2.bf16.xpose.msra.mxu0 0
    %507 = vmatprep.subr.bf16.mxu0 0
    %508 = vmatpush2.bf16.xpose.msra.mxu0 0
    %509 = vmatprep.mubr.bf16.mxu0 0
    %510 = vmatmul.mubr.bf16.gmra.mxu0 %v472
    %v511 = vpop.f32.mrf.mxu0
    %v512 = vadd.f32 %v83, %v511
    %v513 = vpop.f32.mrf.mxu0
    %v514 = vpop.f32.mrf.mxu0
    %v515 = vpop.f32.mrf.mxu0
    %516 = vdwg.mxu0
    %v518 = vsel %vm470, %v465, 0
    %v521 = vsel %vm470, %v467, 0
    %523 = vmatprep.subr.bf16.mxu0 0
    %524 = vmatpush1.bf16.xpose.msra.mxu0 0
    %525 = vmatprep.subr.bf16.mxu0 0
    %526 = vmatpush1.bf16.xpose.msra.mxu0 0
    %527 = vmatprep.subr.bf16.mxu0 0
    %528 = vmatpush1.bf16.xpose.msra.mxu0 0
    %529 = vmatprep.subr.bf16.mxu0 0
    %530 = vmatpush1.bf16.xpose.msra.mxu0 0
    %531 = vmatprep.subr.bf16.mxu0 0
    %532 = vmatpush1.bf16.xpose.msra.mxu0 0
    %533 = vmatprep.subr.bf16.mxu0 0
    %534 = vmatpush1.bf16.xpose.msra.mxu0 0
    %535 = vmatprep.subr.bf16.mxu0 0
    %536 = vmatpush1.bf16.xpose.msra.mxu0 0
    %537 = vmatprep.subr.bf16.mxu0 0
    %538 = vmatpush1.bf16.xpose.msra.mxu0 %v521
    %539 = vmatprep.subr.bf16.mxu0 0
    %540 = vmatpush2.bf16.xpose.msra.mxu0 0
    %541 = vmatprep.subr.bf16.mxu0 0
    %542 = vmatpush2.bf16.xpose.msra.mxu0 0
    %543 = vmatprep.subr.bf16.mxu0 0
    %544 = vmatpush2.bf16.xpose.msra.mxu0 0
    %545 = vmatprep.subr.bf16.mxu0 0
    %546 = vmatpush2.bf16.xpose.msra.mxu0 0
    %547 = vmatprep.subr.bf16.mxu0 0
    %548 = vmatpush2.bf16.xpose.msra.mxu0 0
    %549 = vmatprep.subr.bf16.mxu0 0
    %550 = vmatpush2.bf16.xpose.msra.mxu0 0
    %551 = vmatprep.subr.bf16.mxu0 0
    %552 = vmatpush2.bf16.xpose.msra.mxu0 0
    %553 = vmatprep.subr.bf16.mxu0 0
    %554 = vmatpush2.bf16.xpose.msra.mxu0 0
    %555 = vmatprep.mubr.bf16.mxu0 0
    %556 = vmatmul.mubr.bf16.gmra.mxu0 %v518
    %v557 = vpop.f32.mrf.mxu0
    %v558 = vadd.f32 %v83, %v557
    %v559 = vpop.f32.mrf.mxu0
    %v560 = vpop.f32.mrf.mxu0
    %v561 = vpop.f32.mrf.mxu0
    %562 = vdwg.mxu0
    %vm563 = vcmask 64512
    %v564 = vsel %vm563, %v512, -inf
    %565 = vmax.xlane.f32.xlu0 %v564
    %v566 = vpop.xlane.xlu0 %565
    %v567 = vsel %vm563, %v558, -inf
    %568 = vmax.xlane.f32.xlu0 %v567
    %v569 = vpop.xlane.xlu0 %568
    %v570 = vsub.f32 %v512, %v566
    %v571 = vsub.f32 %v558, %v569
    %v572 = vmul.f32 %v570, 1.442695
    %v573 = vpow.pop %v572
    %v574 = vmul.f32 %v571, 1.442695
    %v575 = vpow.pop %v574
    %v576 = vsel %vm563, %v573, 0.0
    %577 = vadd.xlane.f32.xlu0 %v576
    %v578 = vpop.xlane.xlu0 %577
    %v579 = vsel %vm563, %v575, 0.0
    %580 = vadd.xlane.f32.xlu0 %v579
    %v581 = vpop.xlane.xlu0 %580
    %v582 = vrcp.pop %v578
    %v583 = vrcp.pop %v581
    %v584 = vmul.f32 %v573, %v582
    %v585 = vmul.f32 %v575, %v583
    %v586 = vpack.c.bf16 %v584, %v584
    %v587 = vpack.c.bf16 %v585, %v585
    %v589 = vsel %vm563, %v586, 0
    %vm591 = vcmask 1043456
    %v593 = vsel %vm591, %v468, 0
    %595 = vmatprep.subr.bf16.mxu0 0
    %596 = vmatpush1.bf16.msra.mxu0 0
    %597 = vmatprep.subr.bf16.mxu0 0
    %598 = vmatpush1.bf16.msra.mxu0 0
    %599 = vmatprep.subr.bf16.mxu0 0
    %600 = vmatpush1.bf16.msra.mxu0 0
    %601 = vmatprep.subr.bf16.mxu0 0
    %602 = vmatpush1.bf16.msra.mxu0 0
    %603 = vmatprep.subr.bf16.mxu0 0
    %604 = vmatpush1.bf16.msra.mxu0 0
    %605 = vmatprep.subr.bf16.mxu0 0
    %606 = vmatpush1.bf16.msra.mxu0 0
    %607 = vmatprep.subr.bf16.mxu0 0
    %608 = vmatpush1.bf16.msra.mxu0 0
    %609 = vmatprep.subr.bf16.mxu0 0
    %610 = vmatpush1.bf16.msra.mxu0 %v593
    %611 = vmatprep.subr.bf16.mxu0 0
    %612 = vmatpush2.bf16.msra.mxu0 0
    %613 = vmatprep.subr.bf16.mxu0 0
    %614 = vmatpush2.bf16.msra.mxu0 0
    %615 = vmatprep.subr.bf16.mxu0 0
    %616 = vmatpush2.bf16.msra.mxu0 0
    %617 = vmatprep.subr.bf16.mxu0 0
    %618 = vmatpush2.bf16.msra.mxu0 0
    %619 = vmatprep.subr.bf16.mxu0 0
    %620 = vmatpush2.bf16.msra.mxu0 0
    %621 = vmatprep.subr.bf16.mxu0 0
    %622 = vmatpush2.bf16.msra.mxu0 0
    %623 = vmatprep.subr.bf16.mxu0 0
    %624 = vmatpush2.bf16.msra.mxu0 0
    %625 = vmatprep.subr.bf16.mxu0 0
    %626 = vmatpush2.bf16.msra.mxu0 0
    %627 = vmatprep.mubr.bf16.mxu0 0
    %628 = vmatmul.mubr.bf16.gmra.mxu0 %v589
    %v629 = vpop.f32.mrf.mxu0
    %v630 = vadd.f32 0.0, %v629
    %v631 = vpop.f32.mrf.mxu0
    %v632 = vpop.f32.mrf.mxu0
    %v633 = vpop.f32.mrf.mxu0
    %634 = vdwg.mxu0
    %v636 = vsel %vm563, %v587, 0
    %v639 = vsel %vm591, %v469, 0
    %641 = vmatprep.subr.bf16.mxu0 0
    %642 = vmatpush1.bf16.msra.mxu0 0
    %643 = vmatprep.subr.bf16.mxu0 0
    %644 = vmatpush1.bf16.msra.mxu0 0
    %645 = vmatprep.subr.bf16.mxu0 0
    %646 = vmatpush1.bf16.msra.mxu0 0
    %647 = vmatprep.subr.bf16.mxu0 0
    %648 = vmatpush1.bf16.msra.mxu0 0
    %649 = vmatprep.subr.bf16.mxu0 0
    %650 = vmatpush1.bf16.msra.mxu0 0
    %651 = vmatprep.subr.bf16.mxu0 0
    %652 = vmatpush1.bf16.msra.mxu0 0
    %653 = vmatprep.subr.bf16.mxu0 0
    %654 = vmatpush1.bf16.msra.mxu0 0
    %655 = vmatprep.subr.bf16.mxu0 0
    %656 = vmatpush1.bf16.msra.mxu0 %v639
    %657 = vmatprep.subr.bf16.mxu0 0
    %658 = vmatpush2.bf16.msra.mxu0 0
    %659 = vmatprep.subr.bf16.mxu0 0
    %660 = vmatpush2.bf16.msra.mxu0 0
    %661 = vmatprep.subr.bf16.mxu0 0
    %662 = vmatpush2.bf16.msra.mxu0 0
    %663 = vmatprep.subr.bf16.mxu0 0
    %664 = vmatpush2.bf16.msra.mxu0 0
    %665 = vmatprep.subr.bf16.mxu0 0
    %666 = vmatpush2.bf16.msra.mxu0 0
    %667 = vmatprep.subr.bf16.mxu0 0
    %668 = vmatpush2.bf16.msra.mxu0 0
    %669 = vmatprep.subr.bf16.mxu0 0
    %670 = vmatpush2.bf16.msra.mxu0 0
    %671 = vmatprep.subr.bf16.mxu0 0
    %672 = vmatpush2.bf16.msra.mxu0 0
    %673 = vmatprep.mubr.bf16.mxu0 0
    %674 = vmatmul.mubr.bf16.gmra.mxu0 %v636
    %v675 = vpop.f32.mrf.mxu0
    %v676 = vadd.f32 0.0, %v675
    %v677 = vpop.f32.mrf.mxu0
    %v678 = vpop.f32.mrf.mxu0
    %v679 = vpop.f32.mrf.mxu0
    %680 = vdwg.mxu0
    %v681 = vpack.c.bf16 %v676, %v630
    %v682 = vld [vmem:[%s12] sm:$0xf]
    %v683 = vld [vmem:[%s12 + $0x4] sm:$0xf]
    %685 = vrot.lane.b32.xlu0 %v464, 112
    %v686 = vpop.permute.xlu0 %685
    %688 = vrot.lane.b32.xlu0 %v466, 112
    %v689 = vpop.permute.xlu0 %688
    %v691 = vsel %vm470, %v686, 0
    %v694 = vsel %vm470, %v689, 0
    %696 = vmatprep.subr.bf16.mxu0 0
    %697 = vmatpush1.bf16.xpose.msra.mxu0 0
    %698 = vmatprep.subr.bf16.mxu0 0
    %699 = vmatpush1.bf16.xpose.msra.mxu0 0
    %700 = vmatprep.subr.bf16.mxu0 0
    %701 = vmatpush1.bf16.xpose.msra.mxu0 0
    %702 = vmatprep.subr.bf16.mxu0 0
    %703 = vmatpush1.bf16.xpose.msra.mxu0 0
    %704 = vmatprep.subr.bf16.mxu0 0
    %705 = vmatpush1.bf16.xpose.msra.mxu0 0
    %706 = vmatprep.subr.bf16.mxu0 0
    %707 = vmatpush1.bf16.xpose.msra.mxu0 0
    %708 = vmatprep.subr.bf16.mxu0 0
    %709 = vmatpush1.bf16.xpose.msra.mxu0 0
    %710 = vmatprep.subr.bf16.mxu0 0
    %711 = vmatpush1.bf16.xpose.msra.mxu0 %v694
    %712 = vmatprep.subr.bf16.mxu0 0
    %713 = vmatpush2.bf16.xpose.msra.mxu0 0
    %714 = vmatprep.subr.bf16.mxu0 0
    %715 = vmatpush2.bf16.xpose.msra.mxu0 0
    %716 = vmatprep.subr.bf16.mxu0 0
    %717 = vmatpush2.bf16.xpose.msra.mxu0 0
    %718 = vmatprep.subr.bf16.mxu0 0
    %719 = vmatpush2.bf16.xpose.msra.mxu0 0
    %720 = vmatprep.subr.bf16.mxu0 0
    %721 = vmatpush2.bf16.xpose.msra.mxu0 0
    %722 = vmatprep.subr.bf16.mxu0 0
    %723 = vmatpush2.bf16.xpose.msra.mxu0 0
    %724 = vmatprep.subr.bf16.mxu0 0
    %725 = vmatpush2.bf16.xpose.msra.mxu0 0
    %726 = vmatprep.subr.bf16.mxu0 0
    %727 = vmatpush2.bf16.xpose.msra.mxu0 0
    %728 = vmatprep.mubr.bf16.mxu0 0
    %729 = vmatmul.mubr.bf16.gmra.mxu0 %v691
    %v730 = vpop.f32.mrf.mxu0
    %v731 = vadd.f32 %v83, %v730
    %v732 = vpop.f32.mrf.mxu0
    %v733 = vpop.f32.mrf.mxu0
    %v734 = vpop.f32.mrf.mxu0
    %735 = vdwg.mxu0
    %737 = vrot.lane.b32.xlu0 %v465, 112
    %v738 = vpop.permute.xlu0 %737
    %740 = vrot.lane.b32.xlu0 %v467, 112
    %v741 = vpop.permute.xlu0 %740
    %v743 = vsel %vm470, %v738, 0
    %v746 = vsel %vm470, %v741, 0
    %748 = vmatprep.subr.bf16.mxu0 0
    %749 = vmatpush1.bf16.xpose.msra.mxu0 0
    %750 = vmatprep.subr.bf16.mxu0 0
    %751 = vmatpush1.bf16.xpose.msra.mxu0 0
    %752 = vmatprep.subr.bf16.mxu0 0
    %753 = vmatpush1.bf16.xpose.msra.mxu0 0
    %754 = vmatprep.subr.bf16.mxu0 0
    %755 = vmatpush1.bf16.xpose.msra.mxu0 0
    %756 = vmatprep.subr.bf16.mxu0 0
    %757 = vmatpush1.bf16.xpose.msra.mxu0 0
    %758 = vmatprep.subr.bf16.mxu0 0
    %759 = vmatpush1.bf16.xpose.msra.mxu0 0
    %760 = vmatprep.subr.bf16.mxu0 0
    %761 = vmatpush1.bf16.xpose.msra.mxu0 0
    %762 = vmatprep.subr.bf16.mxu0 0
    %763 = vmatpush1.bf16.xpose.msra.mxu0 %v746
    %764 = vmatprep.subr.bf16.mxu0 0
    %765 = vmatpush2.bf16.xpose.msra.mxu0 0
    %766 = vmatprep.subr.bf16.mxu0 0
    %767 = vmatpush2.bf16.xpose.msra.mxu0 0
    %768 = vmatprep.subr.bf16.mxu0 0
    %769 = vmatpush2.bf16.xpose.msra.mxu0 0
    %770 = vmatprep.subr.bf16.mxu0 0
    %771 = vmatpush2.bf16.xpose.msra.mxu0 0
    %772 = vmatprep.subr.bf16.mxu0 0
    %773 = vmatpush2.bf16.xpose.msra.mxu0 0
    %774 = vmatprep.subr.bf16.mxu0 0
    %775 = vmatpush2.bf16.xpose.msra.mxu0 0
    %776 = vmatprep.subr.bf16.mxu0 0
    %777 = vmatpush2.bf16.xpose.msra.mxu0 0
    %778 = vmatprep.subr.bf16.mxu0 0
    %779 = vmatpush2.bf16.xpose.msra.mxu0 0
    %780 = vmatprep.mubr.bf16.mxu0 0
    %781 = vmatmul.mubr.bf16.gmra.mxu0 %v743
    %v782 = vpop.f32.mrf.mxu0
    %v783 = vadd.f32 %v83, %v782
    %v784 = vpop.f32.mrf.mxu0
    %v785 = vpop.f32.mrf.mxu0
    %v786 = vpop.f32.mrf.mxu0
    %787 = vdwg.mxu0
    %v788 = vsel %vm563, %v731, -inf
    %789 = vmax.xlane.f32.xlu0 %v788
    %v790 = vpop.xlane.xlu0 %789
    %v791 = vsel %vm563, %v783, -inf
    %792 = vmax.xlane.f32.xlu0 %v791
    %v793 = vpop.xlane.xlu0 %792
    %v794 = vsub.f32 %v731, %v790
    %v795 = vsub.f32 %v783, %v793
    %v796 = vmul.f32 %v794, 1.442695
    %v797 = vpow.pop %v796
    %v798 = vmul.f32 %v795, 1.442695
    %v799 = vpow.pop %v798
    %v800 = vsel %vm563, %v797, 0.0
    %801 = vadd.xlane.f32.xlu0 %v800
    %v802 = vpop.xlane.xlu0 %801
    %v803 = vsel %vm563, %v799, 0.0
    %804 = vadd.xlane.f32.xlu0 %v803
    %v805 = vpop.xlane.xlu0 %804
    %v806 = vrcp.pop %v802
    %v807 = vrcp.pop %v805
    %v808 = vmul.f32 %v797, %v806
    %v809 = vmul.f32 %v799, %v807
    %v810 = vpack.c.bf16 %v808, %v808
    %v811 = vpack.c.bf16 %v809, %v809
    %813 = vrot.lane.b32.xlu0 %v468, 112
    %v814 = vpop.permute.xlu0 %813
    %v816 = vsel %vm563, %v810, 0
    %v819 = vsel %vm591, %v814, 0
    %821 = vmatprep.subr.bf16.mxu0 0
    %822 = vmatpush1.bf16.msra.mxu0 0
    %823 = vmatprep.subr.bf16.mxu0 0
    %824 = vmatpush1.bf16.msra.mxu0 0
    %825 = vmatprep.subr.bf16.mxu0 0
    %826 = vmatpush1.bf16.msra.mxu0 0
    %827 = vmatprep.subr.bf16.mxu0 0
    %828 = vmatpush1.bf16.msra.mxu0 0
    %829 = vmatprep.subr.bf16.mxu0 0
    %830 = vmatpush1.bf16.msra.mxu0 0
    %831 = vmatprep.subr.bf16.mxu0 0
    %832 = vmatpush1.bf16.msra.mxu0 0
    %833 = vmatprep.subr.bf16.mxu0 0
    %834 = vmatpush1.bf16.msra.mxu0 0
    %835 = vmatprep.subr.bf16.mxu0 0
    %836 = vmatpush1.bf16.msra.mxu0 %v819
    %837 = vmatprep.subr.bf16.mxu0 0
    %838 = vmatpush2.bf16.msra.mxu0 0
    %839 = vmatprep.subr.bf16.mxu0 0
    %840 = vmatpush2.bf16.msra.mxu0 0
    %841 = vmatprep.subr.bf16.mxu0 0
    %842 = vmatpush2.bf16.msra.mxu0 0
    %843 = vmatprep.subr.bf16.mxu0 0
    %844 = vmatpush2.bf16.msra.mxu0 0
    %845 = vmatprep.subr.bf16.mxu0 0
    %846 = vmatpush2.bf16.msra.mxu0 0
    %847 = vmatprep.subr.bf16.mxu0 0
    %848 = vmatpush2.bf16.msra.mxu0 0
    %849 = vmatprep.subr.bf16.mxu0 0
    %850 = vmatpush2.bf16.msra.mxu0 0
    %851 = vmatprep.subr.bf16.mxu0 0
    %852 = vmatpush2.bf16.msra.mxu0 0
    %853 = vmatprep.mubr.bf16.mxu0 0
    %854 = vmatmul.mubr.bf16.gmra.mxu0 %v816
    %v855 = vpop.f32.mrf.mxu0
    %v856 = vadd.f32 0.0, %v855
    %v857 = vpop.f32.mrf.mxu0
    %v858 = vpop.f32.mrf.mxu0
    %v859 = vpop.f32.mrf.mxu0
    %860 = vdwg.mxu0
    %862 = vrot.lane.b32.xlu0 %v469, 112
    %v863 = vpop.permute.xlu0 %862
    %v865 = vsel %vm563, %v811, 0
    %v868 = vsel %vm591, %v863, 0
    %870 = vmatprep.subr.bf16.mxu0 0
    %871 = vmatpush1.bf16.msra.mxu0 0
    %872 = vmatprep.subr.bf16.mxu0 0
    %873 = vmatpush1.bf16.msra.mxu0 0
    %874 = vmatprep.subr.bf16.mxu0 0
    %875 = vmatpush1.bf16.msra.mxu0 0
    %876 = vmatprep.subr.bf16.mxu0 0
    %877 = vmatpush1.bf16.msra.mxu0 0
    %878 = vmatprep.subr.bf16.mxu0 0
    %879 = vmatpush1.bf16.msra.mxu0 0
    %880 = vmatprep.subr.bf16.mxu0 0
    %881 = vmatpush1.bf16.msra.mxu0 0
    %882 = vmatprep.subr.bf16.mxu0 0
    %883 = vmatpush1.bf16.msra.mxu0 0
    %884 = vmatprep.subr.bf16.mxu0 0
    %885 = vmatpush1.bf16.msra.mxu0 %v868
    %886 = vmatprep.subr.bf16.mxu0 0
    %887 = vmatpush2.bf16.msra.mxu0 0
    %888 = vmatprep.subr.bf16.mxu0 0
    %889 = vmatpush2.bf16.msra.mxu0 0
    %890 = vmatprep.subr.bf16.mxu0 0
    %891 = vmatpush2.bf16.msra.mxu0 0
    %892 = vmatprep.subr.bf16.mxu0 0
    %893 = vmatpush2.bf16.msra.mxu0 0
    %894 = vmatprep.subr.bf16.mxu0 0
    %895 = vmatpush2.bf16.msra.mxu0 0
    %896 = vmatprep.subr.bf16.mxu0 0
    %897 = vmatpush2.bf16.msra.mxu0 0
    %898 = vmatprep.subr.bf16.mxu0 0
    %899 = vmatpush2.bf16.msra.mxu0 0
    %900 = vmatprep.subr.bf16.mxu0 0
    %901 = vmatpush2.bf16.msra.mxu0 0
    %902 = vmatprep.mubr.bf16.mxu0 0
    %903 = vmatmul.mubr.bf16.gmra.mxu0 %v865
    %v904 = vpop.f32.mrf.mxu0
    %v905 = vadd.f32 0.0, %v904
    %v906 = vpop.f32.mrf.mxu0
    %v907 = vpop.f32.mrf.mxu0
    %v908 = vpop.f32.mrf.mxu0
    %909 = vdwg.mxu0
    %v910 = vpack.c.bf16 %v905, %v856
    %s911 = scalar_lea.vmem %s12, 8
    %v912 = vld [vmem:[%s911] sm:$0xf]
    %v913 = vld [vmem:[%s911 + $0x4] sm:$0xf]
    %v916 = vunpack.c.l.b16 %v912
    %v917 = vunpack.c.l.b16 %v913
    %v918 = vpack.c.b16 %v917, %v916
    %v921 = vsel %vm470, %v910, 0
    %923 = vmatprep.subr.bf16.mxu0 0
    %924 = vmatpush1.bf16.msra.mxu0 0
    %925 = vmatprep.subr.bf16.mxu0 0
    %926 = vmatpush1.bf16.msra.mxu0 0
    %927 = vmatprep.subr.bf16.mxu0 0
    %928 = vmatpush1.bf16.msra.mxu0 0
    %929 = vmatprep.subr.bf16.mxu0 0
    %930 = vmatpush1.bf16.msra.mxu0 0
    %931 = vmatprep.subr.bf16.mxu0 0
    %932 = vmatpush1.bf16.msra.mxu0 0
    %933 = vmatprep.subr.bf16.mxu0 0
    %934 = vmatpush1.bf16.msra.mxu0 0
    %935 = vmatprep.subr.bf16.mxu0 0
    %936 = vmatpush1.bf16.msra.mxu0 0
    %937 = vmatprep.subr.bf16.mxu0 0
    %938 = vmatpush1.bf16.msra.mxu0 %v918
    %939 = vmatprep.subr.bf16.mxu0 0
    %940 = vmatpush2.bf16.msra.mxu0 0
    %941 = vmatprep.subr.bf16.mxu0 0
    %942 = vmatpush2.bf16.msra.mxu0 0
    %943 = vmatprep.subr.bf16.mxu0 0
    %944 = vmatpush2.bf16.msra.mxu0 0
    %945 = vmatprep.subr.bf16.mxu0 0
    %946 = vmatpush2.bf16.msra.mxu0 0
    %947 = vmatprep.subr.bf16.mxu0 0
    %948 = vmatpush2.bf16.msra.mxu0 0
    %949 = vmatprep.subr.bf16.mxu0 0
    %950 = vmatpush2.bf16.msra.mxu0 0
    %951 = vmatprep.subr.bf16.mxu0 0
    %952 = vmatpush2.bf16.msra.mxu0 0
    %953 = vmatprep.subr.bf16.mxu0 0
    %954 = vmatpush2.bf16.msra.mxu0 0
    %955 = vmatprep.mubr.bf16.mxu0 0
    %956 = vmatmul.mubr.bf16.gmra.mxu0 %v921
    %v957 = vpop.f32.mrf.mxu0
    %v958 = vadd.f32 0.0, %v957
    %v959 = vpop.f32.mrf.mxu0
    %v960 = vpop.f32.mrf.mxu0
    %v961 = vadd.f32 0.0, %v960
    %v962 = vpop.f32.mrf.mxu0
    %963 = vdwg.mxu0
    %v966 = vunpack.c.l.b16 %v682
    %v967 = vunpack.c.l.b16 %v683
    %v968 = vpack.c.b16 %v967, %v966
    %v971 = vsel %vm470, %v681, 0
    %973 = vmatprep.subr.bf16.mxu0 0
    %974 = vmatpush1.bf16.msra.mxu0 0
    %975 = vmatprep.subr.bf16.mxu0 0
    %976 = vmatpush1.bf16.msra.mxu0 0
    %977 = vmatprep.subr.bf16.mxu0 0
    %978 = vmatpush1.bf16.msra.mxu0 0
    %979 = vmatprep.subr.bf16.mxu0 0
    %980 = vmatpush1.bf16.msra.mxu0 0
    %981 = vmatprep.subr.bf16.mxu0 0
    %982 = vmatpush1.bf16.msra.mxu0 0
    %983 = vmatprep.subr.bf16.mxu0 0
    %984 = vmatpush1.bf16.msra.mxu0 0
    %985 = vmatprep.subr.bf16.mxu0 0
    %986 = vmatpush1.bf16.msra.mxu0 0
    %987 = vmatprep.subr.bf16.mxu0 0
    %988 = vmatpush1.bf16.msra.mxu0 %v968
    %989 = vmatprep.subr.bf16.mxu0 0
    %990 = vmatpush2.bf16.msra.mxu0 0
    %991 = vmatprep.subr.bf16.mxu0 0
    %992 = vmatpush2.bf16.msra.mxu0 0
    %993 = vmatprep.subr.bf16.mxu0 0
    %994 = vmatpush2.bf16.msra.mxu0 0
    %995 = vmatprep.subr.bf16.mxu0 0
    %996 = vmatpush2.bf16.msra.mxu0 0
    %997 = vmatprep.subr.bf16.mxu0 0
    %998 = vmatpush2.bf16.msra.mxu0 0
    %999 = vmatprep.subr.bf16.mxu0 0
    %1000 = vmatpush2.bf16.msra.mxu0 0
    %1001 = vmatprep.subr.bf16.mxu0 0
    %1002 = vmatpush2.bf16.msra.mxu0 0
    %1003 = vmatprep.subr.bf16.mxu0 0
    %1004 = vmatpush2.bf16.msra.mxu0 0
    %1005 = vmatprep.mubr.bf16.mxu0 0
    %1006 = vmatmul.mubr.bf16.gmra.mxu0 %v971
    %v1007 = vpop.f32.mrf.mxu0
    %v1008 = vadd.f32 %v958, %v1007
    %v1009 = vpop.f32.mrf.mxu0
    %v1010 = vpop.f32.mrf.mxu0
    %v1011 = vadd.f32 %v961, %v1010
    %v1012 = vpop.f32.mrf.mxu0
    %1013 = vdwg.mxu0
    %v1014 = vld [vmem:[%s13] sm:$0x1]
    %v1016 = vlaneseq
    %v1017 = vshrl.u32 %v1016, 7
    %v1018 = vsub.s32 0, %v1017
    %v1019 = vrot.slane %v1014, %v1018
    %v1021 = vadd.f32 %v1008, %v1019
    %v1022 = vadd.f32 %v1011, %v1019
    %v1023 = vadd.f32 %v124, %v1021
    %v1024 = vadd.f32 %v125, %v1022
    %v1025 = vld [vmem:[%s14] sm:$0x1]
    %v1026 = vld [vmem:[%s15] sm:$0x1]
    %1027 = vadd.xlane.f32.xlu0 %v1023
    %v1028 = vpop.xlane.xlu0 %1027
    %1029 = vadd.xlane.f32.xlu0 %v1024
    %v1030 = vpop.xlane.xlu0 %1029
    %v1031 = vmul.f32 %v1028, 0.03125
    %v1032 = vmul.f32 %v1030, 0.03125
    %v1033 = vsub.f32 %v1023, %v1031
    %v1034 = vsub.f32 %v1024, %v1032
    %v1035 = vmul.f32 %v1033, %v82
    %v1036 = vmul.f32 %v1034, %v82
    %v1037 = vmul.f32 %v1035, %v1035
    %v1038 = vmul.f32 %v1036, %v1036
    %1039 = vadd.xlane.f32.xlu0 %v1037
    %v1040 = vpop.xlane.xlu0 %1039
    %1041 = vadd.xlane.f32.xlu0 %v1038
    %v1042 = vpop.xlane.xlu0 %1041
    %v1043 = vmul.f32 %v1040, 0.03125
    %v1044 = vmul.f32 %v1042, 0.03125
    %v1045 = vadd.f32 %v1043, 1e-08
    %v1046 = vadd.f32 %v1044, 1e-08
    %v1047 = vrsqrt.pop %v1045
    %v1048 = vrsqrt.pop %v1046
    %v1049 = vmul.f32 %v1035, %v1047
    %v1050 = vmul.f32 %v1036, %v1048
    %v1052 = vlaneseq
    %v1053 = vshrl.u32 %v1052, 7
    %v1054 = vsub.s32 0, %v1053
    %v1055 = vrot.slane %v1025, %v1054
    %v1057 = vmul.f32 %v1049, %v1055
    %v1058 = vmul.f32 %v1050, %v1055
    %v1060 = vlaneseq
    %v1061 = vshrl.u32 %v1060, 7
    %v1062 = vsub.s32 0, %v1061
    %v1063 = vrot.slane %v1026, %v1062
    %v1065 = vadd.f32 %v1057, %v1063
    %v1066 = vadd.f32 %v1058, %v1063
    %v1067 = vpack.c.bf16 %v1066, %v1065
    %v1068 = vld [vmem:[%s16] sm:$0xf]
    %v1069 = vld [vmem:[%s16 + $0x4] sm:$0xf]
    %v1070 = vld [vmem:[%s16 + $0x8] sm:$0xf]
    %v1071 = vld [vmem:[%s16 + $0xc] sm:$0xf]
    %v1072 = vld [vmem:[%s16 + $0x10] sm:$0xf]
    %v1073 = vld [vmem:[%s16 + $0x14] sm:$0xf]
    %v1074 = vld [vmem:[%s16 + $0x18] sm:$0xf]
    %v1075 = vld [vmem:[%s16 + $0x1c] sm:$0xf]
    %v1076 = vld [vmem:[%s16 + $0x20] sm:$0xf]
    %v1077 = vld [vmem:[%s16 + $0x24] sm:$0xf]
    %v1078 = vld [vmem:[%s16 + $0x28] sm:$0xf]
    %v1079 = vld [vmem:[%s16 + $0x2c] sm:$0xf]
    %v1080 = vld [vmem:[%s16 + $0x30] sm:$0xf]
    %v1081 = vld [vmem:[%s16 + $0x34] sm:$0xf]
    %v1082 = vld [vmem:[%s16 + $0x38] sm:$0xf]
    %v1083 = vld [vmem:[%s16 + $0x3c] sm:$0xf]
    %v1084 = vld [vmem:[%s17] sm:$0x1]
    %v1086 = vlaneseq
    %v1087 = vshrl.u32 %v1086, 7
    %v1088 = vsub.s32 0, %v1087
    %v1089 = vrot.slane %v1084, %v1088
    %v1107 = vunpack.c.l.b16 %v1068
    %v1108 = vunpack.c.l.b16 %v1069
    %v1109 = vunpack.c.l.b16 %v1070
    %v1110 = vunpack.c.l.b16 %v1071
    %v1111 = vunpack.c.l.b16 %v1072
    %v1112 = vunpack.c.l.b16 %v1073
    %v1113 = vunpack.c.l.b16 %v1074
    %v1114 = vunpack.c.l.b16 %v1075
    %v1115 = vunpack.c.l.b16 %v1076
    %v1116 = vunpack.c.l.b16 %v1077
    %v1117 = vunpack.c.l.b16 %v1078
    %v1118 = vunpack.c.l.b16 %v1079
    %v1119 = vunpack.c.l.b16 %v1080
    %v1120 = vunpack.c.l.b16 %v1081
    %v1121 = vunpack.c.l.b16 %v1082
    %v1122 = vunpack.c.l.b16 %v1083
    %v1123 = vpack.c.b16 %v1108, %v1107
    %v1124 = vpack.c.b16 %v1110, %v1109
    %v1125 = vpack.c.b16 %v1112, %v1111
    %v1126 = vpack.c.b16 %v1114, %v1113
    %v1127 = vpack.c.b16 %v1116, %v1115
    %v1128 = vpack.c.b16 %v1118, %v1117
    %v1129 = vpack.c.b16 %v1120, %v1119
    %v1130 = vpack.c.b16 %v1122, %v1121
    %1139 = vmatprep.subr.bf16.mxu0 0
    %1140 = vmatpush1.bf16.msra.mxu0 %v1130
    %1141 = vmatprep.subr.bf16.mxu0 0
    %1142 = vmatpush1.bf16.msra.mxu0 %v1129
    %1143 = vmatprep.subr.bf16.mxu0 0
    %1144 = vmatpush1.bf16.msra.mxu0 %v1128
    %1145 = vmatprep.subr.bf16.mxu0 0
    %1146 = vmatpush1.bf16.msra.mxu0 %v1127
    %1147 = vmatprep.subr.bf16.mxu0 0
    %1148 = vmatpush1.bf16.msra.mxu0 %v1126
    %1149 = vmatprep.subr.bf16.mxu0 0
    %1150 = vmatpush1.bf16.msra.mxu0 %v1125
    %1151 = vmatprep.subr.bf16.mxu0 0
    %1152 = vmatpush1.bf16.msra.mxu0 %v1124
    %1153 = vmatprep.subr.bf16.mxu0 0
    %1154 = vmatpush1.bf16.msra.mxu0 %v1123
    %1155 = vmatprep.subr.bf16.mxu0 0
    %1156 = vmatpush2.bf16.msra.mxu0 0
    %1157 = vmatprep.subr.bf16.mxu0 0
    %1158 = vmatpush2.bf16.msra.mxu0 0
    %1159 = vmatprep.subr.bf16.mxu0 0
    %1160 = vmatpush2.bf16.msra.mxu0 0
    %1161 = vmatprep.subr.bf16.mxu0 0
    %1162 = vmatpush2.bf16.msra.mxu0 0
    %1163 = vmatprep.subr.bf16.mxu0 0
    %1164 = vmatpush2.bf16.msra.mxu0 0
    %1165 = vmatprep.subr.bf16.mxu0 0
    %1166 = vmatpush2.bf16.msra.mxu0 0
    %1167 = vmatprep.subr.bf16.mxu0 0
    %1168 = vmatpush2.bf16.msra.mxu0 0
    %1169 = vmatprep.subr.bf16.mxu0 0
    %1170 = vmatpush2.bf16.msra.mxu0 0
    %1171 = vmatprep.mubr.bf16.mxu0 0
    %1172 = vmatmul.mubr.bf16.gmra.mxu0 %v1067
    %v1173 = vpop.f32.mrf.mxu0
    %v1174 = vadd.f32 %v1089, %v1173
    %v1175 = vpop.f32.mrf.mxu0
    %v1176 = vpop.f32.mrf.mxu0
    %v1177 = vadd.f32 %v1089, %v1176
    %v1178 = vpop.f32.mrf.mxu0
    %1179 = vdwg.mxu0
    %v1180 = vmax.f32 %v1174, 0.0
    %v1181 = vmax.f32 %v1177, 0.0
    %v1182 = vpack.c.bf16 %v1181, %v1180
    %v1183 = vld [vmem:[%s18] sm:$0xf]
    %v1184 = vld [vmem:[%s18 + $0x4] sm:$0xf]
    %v1185 = vld [vmem:[%s18 + $0x8] sm:$0xf]
    %v1186 = vld [vmem:[%s18 + $0xc] sm:$0xf]
    %v1187 = vld [vmem:[%s18 + $0x10] sm:$0xf]
    %v1188 = vld [vmem:[%s18 + $0x14] sm:$0xf]
    %v1189 = vld [vmem:[%s18 + $0x18] sm:$0xf]
    %v1190 = vld [vmem:[%s18 + $0x1c] sm:$0xf]
    %v1191 = vld [vmem:[%s18 + $0x20] sm:$0xf]
    %v1192 = vld [vmem:[%s18 + $0x24] sm:$0xf]
    %v1193 = vld [vmem:[%s18 + $0x28] sm:$0xf]
    %v1194 = vld [vmem:[%s18 + $0x2c] sm:$0xf]
    %v1195 = vld [vmem:[%s18 + $0x30] sm:$0xf]
    %v1196 = vld [vmem:[%s18 + $0x34] sm:$0xf]
    %v1197 = vld [vmem:[%s18 + $0x38] sm:$0xf]
    %v1198 = vld [vmem:[%s18 + $0x3c] sm:$0xf]
    %v1199 = vld [vmem:[%s19] sm:$0x1]
    %v1201 = vlaneseq
    %v1202 = vshrl.u32 %v1201, 7
    %v1203 = vsub.s32 0, %v1202
    %v1204 = vrot.slane %v1199, %v1203
    %v1222 = vunpack.c.l.b16 %v1183
    %v1223 = vunpack.c.l.b16 %v1184
    %v1224 = vunpack.c.l.b16 %v1185
    %v1225 = vunpack.c.l.b16 %v1186
    %v1226 = vunpack.c.l.b16 %v1187
    %v1227 = vunpack.c.l.b16 %v1188
    %v1228 = vunpack.c.l.b16 %v1189
    %v1229 = vunpack.c.l.b16 %v1190
    %v1230 = vunpack.c.l.b16 %v1191
    %v1231 = vunpack.c.l.b16 %v1192
    %v1232 = vunpack.c.l.b16 %v1193
    %v1233 = vunpack.c.l.b16 %v1194
    %v1234 = vunpack.c.l.b16 %v1195
    %v1235 = vunpack.c.l.b16 %v1196
    %v1236 = vunpack.c.l.b16 %v1197
    %v1237 = vunpack.c.l.b16 %v1198
    %v1238 = vpack.c.b16 %v1223, %v1222
    %v1239 = vpack.c.b16 %v1225, %v1224
    %v1240 = vpack.c.b16 %v1227, %v1226
    %v1241 = vpack.c.b16 %v1229, %v1228
    %v1242 = vpack.c.b16 %v1231, %v1230
    %v1243 = vpack.c.b16 %v1233, %v1232
    %v1244 = vpack.c.b16 %v1235, %v1234
    %v1245 = vpack.c.b16 %v1237, %v1236
    %1254 = vmatprep.subr.bf16.mxu0 0
    %1255 = vmatpush1.bf16.msra.mxu0 %v1245
    %1256 = vmatprep.subr.bf16.mxu0 0
    %1257 = vmatpush1.bf16.msra.mxu0 %v1244
    %1258 = vmatprep.subr.bf16.mxu0 0
    %1259 = vmatpush1.bf16.msra.mxu0 %v1243
    %1260 = vmatprep.subr.bf16.mxu0 0
    %1261 = vmatpush1.bf16.msra.mxu0 %v1242
    %1262 = vmatprep.subr.bf16.mxu0 0
    %1263 = vmatpush1.bf16.msra.mxu0 %v1241
    %1264 = vmatprep.subr.bf16.mxu0 0
    %1265 = vmatpush1.bf16.msra.mxu0 %v1240
    %1266 = vmatprep.subr.bf16.mxu0 0
    %1267 = vmatpush1.bf16.msra.mxu0 %v1239
    %1268 = vmatprep.subr.bf16.mxu0 0
    %1269 = vmatpush1.bf16.msra.mxu0 %v1238
    %1270 = vmatprep.subr.bf16.mxu0 0
    %1271 = vmatpush2.bf16.msra.mxu0 0
    %1272 = vmatprep.subr.bf16.mxu0 0
    %1273 = vmatpush2.bf16.msra.mxu0 0
    %1274 = vmatprep.subr.bf16.mxu0 0
    %1275 = vmatpush2.bf16.msra.mxu0 0
    %1276 = vmatprep.subr.bf16.mxu0 0
    %1277 = vmatpush2.bf16.msra.mxu0 0
    %1278 = vmatprep.subr.bf16.mxu0 0
    %1279 = vmatpush2.bf16.msra.mxu0 0
    %1280 = vmatprep.subr.bf16.mxu0 0
    %1281 = vmatpush2.bf16.msra.mxu0 0
    %1282 = vmatprep.subr.bf16.mxu0 0
    %1283 = vmatpush2.bf16.msra.mxu0 0
    %1284 = vmatprep.subr.bf16.mxu0 0
    %1285 = vmatpush2.bf16.msra.mxu0 0
    %1286 = vmatprep.mubr.bf16.mxu0 0
    %1287 = vmatmul.mubr.bf16.gmra.mxu0 %v1182
    %v1288 = vpop.f32.mrf.mxu0
    %v1289 = vadd.f32 %v1204, %v1288
    %v1290 = vpop.f32.mrf.mxu0
    %v1291 = vpop.f32.mrf.mxu0
    %v1292 = vadd.f32 %v1204, %v1291
    %v1293 = vpop.f32.mrf.mxu0
    %1294 = vdwg.mxu0
    %v1295 = vadd.f32 %v1289, %v1065
    %v1296 = vadd.f32 %v1292, %v1066
    %s1297 = scalar_lea.vmem %s4, 1
    %v1298 = vld [vmem:[%s1297] sm:$0x1]
    %s1299 = scalar_lea.vmem %s5, 1
    %v1300 = vld [vmem:[%s1299] sm:$0x1]
    %1301 = vadd.xlane.f32.xlu0 %v1295
    %v1302 = vpop.xlane.xlu0 %1301
    %1303 = vadd.xlane.f32.xlu0 %v1296
    %v1304 = vpop.xlane.xlu0 %1303
    %v1305 = vmul.f32 %v1302, 0.03125
    %v1306 = vmul.f32 %v1304, 0.03125
    %v1307 = vsub.f32 %v1295, %v1305
    %v1308 = vsub.f32 %v1296, %v1306
    %v1309 = vmul.f32 %v1307, %v82
    %v1310 = vmul.f32 %v1308, %v82
    %v1311 = vmul.f32 %v1309, %v1309
    %v1312 = vmul.f32 %v1310, %v1310
    %1313 = vadd.xlane.f32.xlu0 %v1311
    %v1314 = vpop.xlane.xlu0 %1313
    %1315 = vadd.xlane.f32.xlu0 %v1312
    %v1316 = vpop.xlane.xlu0 %1315
    %v1317 = vmul.f32 %v1314, 0.03125
    %v1318 = vmul.f32 %v1316, 0.03125
    %v1319 = vadd.f32 %v1317, 1e-08
    %v1320 = vadd.f32 %v1318, 1e-08
    %v1321 = vrsqrt.pop %v1319
    %v1322 = vrsqrt.pop %v1320
    %v1323 = vmul.f32 %v1309, %v1321
    %v1324 = vmul.f32 %v1310, %v1322
    %v1326 = vlaneseq
    %v1327 = vshrl.u32 %v1326, 7
    %v1328 = vsub.s32 0, %v1327
    %v1329 = vrot.slane %v1298, %v1328
    %v1331 = vmul.f32 %v1323, %v1329
    %v1332 = vmul.f32 %v1324, %v1329
    %v1334 = vlaneseq
    %v1335 = vshrl.u32 %v1334, 7
    %v1336 = vsub.s32 0, %v1335
    %v1337 = vrot.slane %v1300, %v1336
    %v1339 = vadd.f32 %v1331, %v1337
    %v1340 = vadd.f32 %v1332, %v1337
    %v1341 = vpack.c.bf16 %v1340, %v1339
    %s1342 = scalar_lea.vmem %s6, 64
    %v1343 = vld [vmem:[%s1342] sm:$0xf]
    %v1344 = vld [vmem:[%s1342 + $0x4] sm:$0xf]
    %v1345 = vld [vmem:[%s1342 + $0x8] sm:$0xf]
    %v1346 = vld [vmem:[%s1342 + $0xc] sm:$0xf]
    %v1347 = vld [vmem:[%s1342 + $0x10] sm:$0xf]
    %v1348 = vld [vmem:[%s1342 + $0x14] sm:$0xf]
    %v1349 = vld [vmem:[%s1342 + $0x18] sm:$0xf]
    %v1350 = vld [vmem:[%s1342 + $0x1c] sm:$0xf]
    %v1351 = vld [vmem:[%s1342 + $0x20] sm:$0xf]
    %v1352 = vld [vmem:[%s1342 + $0x24] sm:$0xf]
    %v1353 = vld [vmem:[%s1342 + $0x28] sm:$0xf]
    %v1354 = vld [vmem:[%s1342 + $0x2c] sm:$0xf]
    %v1355 = vld [vmem:[%s1342 + $0x30] sm:$0xf]
    %v1356 = vld [vmem:[%s1342 + $0x34] sm:$0xf]
    %v1357 = vld [vmem:[%s1342 + $0x38] sm:$0xf]
    %v1358 = vld [vmem:[%s1342 + $0x3c] sm:$0xf]
    %s1359 = scalar_lea.vmem %s9, 1
    %v1360 = vld [vmem:[%s1359] sm:$0x1]
    %v1362 = vlaneseq
    %v1363 = vshrl.u32 %v1362, 7
    %v1364 = vsub.s32 0, %v1363
    %v1365 = vrot.slane %v1360, %v1364
    %v1383 = vunpack.c.l.b16 %v1343
    %v1384 = vunpack.c.l.b16 %v1344
    %v1385 = vunpack.c.l.b16 %v1345
    %v1386 = vunpack.c.l.b16 %v1346
    %v1387 = vunpack.c.l.b16 %v1347
    %v1388 = vunpack.c.l.b16 %v1348
    %v1389 = vunpack.c.l.b16 %v1349
    %v1390 = vunpack.c.l.b16 %v1350
    %v1391 = vunpack.c.l.b16 %v1351
    %v1392 = vunpack.c.l.b16 %v1352
    %v1393 = vunpack.c.l.b16 %v1353
    %v1394 = vunpack.c.l.b16 %v1354
    %v1395 = vunpack.c.l.b16 %v1355
    %v1396 = vunpack.c.l.b16 %v1356
    %v1397 = vunpack.c.l.b16 %v1357
    %v1398 = vunpack.c.l.b16 %v1358
    %v1399 = vpack.c.b16 %v1384, %v1383
    %v1400 = vpack.c.b16 %v1386, %v1385
    %v1401 = vpack.c.b16 %v1388, %v1387
    %v1402 = vpack.c.b16 %v1390, %v1389
    %v1403 = vpack.c.b16 %v1392, %v1391
    %v1404 = vpack.c.b16 %v1394, %v1393
    %v1405 = vpack.c.b16 %v1396, %v1395
    %v1406 = vpack.c.b16 %v1398, %v1397
    %1415 = vmatprep.subr.bf16.mxu0 0
    %1416 = vmatpush1.bf16.msra.mxu0 %v1406
    %1417 = vmatprep.subr.bf16.mxu0 0
    %1418 = vmatpush1.bf16.msra.mxu0 %v1405
    %1419 = vmatprep.subr.bf16.mxu0 0
    %1420 = vmatpush1.bf16.msra.mxu0 %v1404
    %1421 = vmatprep.subr.bf16.mxu0 0
    %1422 = vmatpush1.bf16.msra.mxu0 %v1403
    %1423 = vmatprep.subr.bf16.mxu0 0
    %1424 = vmatpush1.bf16.msra.mxu0 %v1402
    %1425 = vmatprep.subr.bf16.mxu0 0
    %1426 = vmatpush1.bf16.msra.mxu0 %v1401
    %1427 = vmatprep.subr.bf16.mxu0 0
    %1428 = vmatpush1.bf16.msra.mxu0 %v1400
    %1429 = vmatprep.subr.bf16.mxu0 0
    %1430 = vmatpush1.bf16.msra.mxu0 %v1399
    %1431 = vmatprep.subr.bf16.mxu0 0
    %1432 = vmatpush2.bf16.msra.mxu0 0
    %1433 = vmatprep.subr.bf16.mxu0 0
    %1434 = vmatpush2.bf16.msra.mxu0 0
    %1435 = vmatprep.subr.bf16.mxu0 0
    %1436 = vmatpush2.bf16.msra.mxu0 0
    %1437 = vmatprep.subr.bf16.mxu0 0
    %1438 = vmatpush2.bf16.msra.mxu0 0
    %1439 = vmatprep.subr.bf16.mxu0 0
    %1440 = vmatpush2.bf16.msra.mxu0 0
    %1441 = vmatprep.subr.bf16.mxu0 0
    %1442 = vmatpush2.bf16.msra.mxu0 0
    %1443 = vmatprep.subr.bf16.mxu0 0
    %1444 = vmatpush2.bf16.msra.mxu0 0
    %1445 = vmatprep.subr.bf16.mxu0 0
    %1446 = vmatpush2.bf16.msra.mxu0 0
    %1447 = vmatprep.mubr.bf16.mxu0 0
    %1448 = vmatmul.mubr.bf16.gmra.mxu0 %v1341
    %v1449 = vpop.f32.mrf.mxu0
    %v1450 = vadd.f32 %v1365, %v1449
    %v1451 = vpop.f32.mrf.mxu0
    %v1452 = vpop.f32.mrf.mxu0
    %v1453 = vadd.f32 %v1365, %v1452
    %v1454 = vpop.f32.mrf.mxu0
    %1455 = vdwg.mxu0
    %v1456 = vpack.c.bf16 %v1296, %v1295
    %s1457 = scalar_lea.vmem %s7, 64
    %v1458 = vld [vmem:[%s1457] sm:$0xf]
    %v1459 = vld [vmem:[%s1457 + $0x4] sm:$0xf]
    %v1460 = vld [vmem:[%s1457 + $0x8] sm:$0xf]
    %v1461 = vld [vmem:[%s1457 + $0xc] sm:$0xf]
    %v1462 = vld [vmem:[%s1457 + $0x10] sm:$0xf]
    %v1463 = vld [vmem:[%s1457 + $0x14] sm:$0xf]
    %v1464 = vld [vmem:[%s1457 + $0x18] sm:$0xf]
    %v1465 = vld [vmem:[%s1457 + $0x1c] sm:$0xf]
    %v1466 = vld [vmem:[%s1457 + $0x20] sm:$0xf]
    %v1467 = vld [vmem:[%s1457 + $0x24] sm:$0xf]
    %v1468 = vld [vmem:[%s1457 + $0x28] sm:$0xf]
    %v1469 = vld [vmem:[%s1457 + $0x2c] sm:$0xf]
    %v1470 = vld [vmem:[%s1457 + $0x30] sm:$0xf]
    %v1471 = vld [vmem:[%s1457 + $0x34] sm:$0xf]
    %v1472 = vld [vmem:[%s1457 + $0x38] sm:$0xf]
    %v1473 = vld [vmem:[%s1457 + $0x3c] sm:$0xf]
    %s1474 = scalar_lea.vmem %s10, 1
    %v1475 = vld [vmem:[%s1474] sm:$0x1]
    %v1477 = vlaneseq
    %v1478 = vshrl.u32 %v1477, 7
    %v1479 = vsub.s32 0, %v1478
    %v1480 = vrot.slane %v1475, %v1479
    %v1498 = vunpack.c.l.b16 %v1458
    %v1499 = vunpack.c.l.b16 %v1459
    %v1500 = vunpack.c.l.b16 %v1460
    %v1501 = vunpack.c.l.b16 %v1461
    %v1502 = vunpack.c.l.b16 %v1462
    %v1503 = vunpack.c.l.b16 %v1463
    %v1504 = vunpack.c.l.b16 %v1464
    %v1505 = vunpack.c.l.b16 %v1465
    %v1506 = vunpack.c.l.b16 %v1466
    %v1507 = vunpack.c.l.b16 %v1467
    %v1508 = vunpack.c.l.b16 %v1468
    %v1509 = vunpack.c.l.b16 %v1469
    %v1510 = vunpack.c.l.b16 %v1470
    %v1511 = vunpack.c.l.b16 %v1471
    %v1512 = vunpack.c.l.b16 %v1472
    %v1513 = vunpack.c.l.b16 %v1473
    %v1514 = vpack.c.b16 %v1499, %v1498
    %v1515 = vpack.c.b16 %v1501, %v1500
    %v1516 = vpack.c.b16 %v1503, %v1502
    %v1517 = vpack.c.b16 %v1505, %v1504
    %v1518 = vpack.c.b16 %v1507, %v1506
    %v1519 = vpack.c.b16 %v1509, %v1508
    %v1520 = vpack.c.b16 %v1511, %v1510
    %v1521 = vpack.c.b16 %v1513, %v1512
    %1530 = vmatprep.subr.bf16.mxu0 0
    %1531 = vmatpush1.bf16.msra.mxu0 %v1521
    %1532 = vmatprep.subr.bf16.mxu0 0
    %1533 = vmatpush1.bf16.msra.mxu0 %v1520
    %1534 = vmatprep.subr.bf16.mxu0 0
    %1535 = vmatpush1.bf16.msra.mxu0 %v1519
    %1536 = vmatprep.subr.bf16.mxu0 0
    %1537 = vmatpush1.bf16.msra.mxu0 %v1518
    %1538 = vmatprep.subr.bf16.mxu0 0
    %1539 = vmatpush1.bf16.msra.mxu0 %v1517
    %1540 = vmatprep.subr.bf16.mxu0 0
    %1541 = vmatpush1.bf16.msra.mxu0 %v1516
    %1542 = vmatprep.subr.bf16.mxu0 0
    %1543 = vmatpush1.bf16.msra.mxu0 %v1515
    %1544 = vmatprep.subr.bf16.mxu0 0
    %1545 = vmatpush1.bf16.msra.mxu0 %v1514
    %1546 = vmatprep.subr.bf16.mxu0 0
    %1547 = vmatpush2.bf16.msra.mxu0 0
    %1548 = vmatprep.subr.bf16.mxu0 0
    %1549 = vmatpush2.bf16.msra.mxu0 0
    %1550 = vmatprep.subr.bf16.mxu0 0
    %1551 = vmatpush2.bf16.msra.mxu0 0
    %1552 = vmatprep.subr.bf16.mxu0 0
    %1553 = vmatpush2.bf16.msra.mxu0 0
    %1554 = vmatprep.subr.bf16.mxu0 0
    %1555 = vmatpush2.bf16.msra.mxu0 0
    %1556 = vmatprep.subr.bf16.mxu0 0
    %1557 = vmatpush2.bf16.msra.mxu0 0
    %1558 = vmatprep.subr.bf16.mxu0 0
    %1559 = vmatpush2.bf16.msra.mxu0 0
    %1560 = vmatprep.subr.bf16.mxu0 0
    %1561 = vmatpush2.bf16.msra.mxu0 0
    %1562 = vmatprep.mubr.bf16.mxu0 0
    %1563 = vmatmul.mubr.bf16.gmra.mxu0 %v1456
    %v1564 = vpop.f32.mrf.mxu0
    %v1565 = vadd.f32 %v1480, %v1564
    %v1566 = vpop.f32.mrf.mxu0
    %v1567 = vpop.f32.mrf.mxu0
    %v1568 = vadd.f32 %v1480, %v1567
    %v1569 = vpop.f32.mrf.mxu0
    %1570 = vdwg.mxu0
    %s1571 = scalar_lea.vmem %s8, 64
    %v1572 = vld [vmem:[%s1571] sm:$0xf]
    %v1573 = vld [vmem:[%s1571 + $0x4] sm:$0xf]
    %v1574 = vld [vmem:[%s1571 + $0x8] sm:$0xf]
    %v1575 = vld [vmem:[%s1571 + $0xc] sm:$0xf]
    %v1576 = vld [vmem:[%s1571 + $0x10] sm:$0xf]
    %v1577 = vld [vmem:[%s1571 + $0x14] sm:$0xf]
    %v1578 = vld [vmem:[%s1571 + $0x18] sm:$0xf]
    %v1579 = vld [vmem:[%s1571 + $0x1c] sm:$0xf]
    %v1580 = vld [vmem:[%s1571 + $0x20] sm:$0xf]
    %v1581 = vld [vmem:[%s1571 + $0x24] sm:$0xf]
    %v1582 = vld [vmem:[%s1571 + $0x28] sm:$0xf]
    %v1583 = vld [vmem:[%s1571 + $0x2c] sm:$0xf]
    %v1584 = vld [vmem:[%s1571 + $0x30] sm:$0xf]
    %v1585 = vld [vmem:[%s1571 + $0x34] sm:$0xf]
    %v1586 = vld [vmem:[%s1571 + $0x38] sm:$0xf]
    %v1587 = vld [vmem:[%s1571 + $0x3c] sm:$0xf]
    %s1588 = scalar_lea.vmem %s11, 1
    %v1589 = vld [vmem:[%s1588] sm:$0x1]
    %v1591 = vlaneseq
    %v1592 = vshrl.u32 %v1591, 7
    %v1593 = vsub.s32 0, %v1592
    %v1594 = vrot.slane %v1589, %v1593
    %v1612 = vunpack.c.l.b16 %v1572
    %v1613 = vunpack.c.l.b16 %v1573
    %v1614 = vunpack.c.l.b16 %v1574
    %v1615 = vunpack.c.l.b16 %v1575
    %v1616 = vunpack.c.l.b16 %v1576
    %v1617 = vunpack.c.l.b16 %v1577
    %v1618 = vunpack.c.l.b16 %v1578
    %v1619 = vunpack.c.l.b16 %v1579
    %v1620 = vunpack.c.l.b16 %v1580
    %v1621 = vunpack.c.l.b16 %v1581
    %v1622 = vunpack.c.l.b16 %v1582
    %v1623 = vunpack.c.l.b16 %v1583
    %v1624 = vunpack.c.l.b16 %v1584
    %v1625 = vunpack.c.l.b16 %v1585
    %v1626 = vunpack.c.l.b16 %v1586
    %v1627 = vunpack.c.l.b16 %v1587
    %v1628 = vpack.c.b16 %v1613, %v1612
    %v1629 = vpack.c.b16 %v1615, %v1614
    %v1630 = vpack.c.b16 %v1617, %v1616
    %v1631 = vpack.c.b16 %v1619, %v1618
    %v1632 = vpack.c.b16 %v1621, %v1620
    %v1633 = vpack.c.b16 %v1623, %v1622
    %v1634 = vpack.c.b16 %v1625, %v1624
    %v1635 = vpack.c.b16 %v1627, %v1626
    %1644 = vmatprep.subr.bf16.mxu0 0
    %1645 = vmatpush1.bf16.msra.mxu0 %v1635
    %1646 = vmatprep.subr.bf16.mxu0 0
    %1647 = vmatpush1.bf16.msra.mxu0 %v1634
    %1648 = vmatprep.subr.bf16.mxu0 0
    %1649 = vmatpush1.bf16.msra.mxu0 %v1633
    %1650 = vmatprep.subr.bf16.mxu0 0
    %1651 = vmatpush1.bf16.msra.mxu0 %v1632
    %1652 = vmatprep.subr.bf16.mxu0 0
    %1653 = vmatpush1.bf16.msra.mxu0 %v1631
    %1654 = vmatprep.subr.bf16.mxu0 0
    %1655 = vmatpush1.bf16.msra.mxu0 %v1630
    %1656 = vmatprep.subr.bf16.mxu0 0
    %1657 = vmatpush1.bf16.msra.mxu0 %v1629
    %1658 = vmatprep.subr.bf16.mxu0 0
    %1659 = vmatpush1.bf16.msra.mxu0 %v1628
    %1660 = vmatprep.subr.bf16.mxu0 0
    %1661 = vmatpush2.bf16.msra.mxu0 0
    %1662 = vmatprep.subr.bf16.mxu0 0
    %1663 = vmatpush2.bf16.msra.mxu0 0
    %1664 = vmatprep.subr.bf16.mxu0 0
    %1665 = vmatpush2.bf16.msra.mxu0 0
    %1666 = vmatprep.subr.bf16.mxu0 0
    %1667 = vmatpush2.bf16.msra.mxu0 0
    %1668 = vmatprep.subr.bf16.mxu0 0
    %1669 = vmatpush2.bf16.msra.mxu0 0
    %1670 = vmatprep.subr.bf16.mxu0 0
    %1671 = vmatpush2.bf16.msra.mxu0 0
    %1672 = vmatprep.subr.bf16.mxu0 0
    %1673 = vmatpush2.bf16.msra.mxu0 0
    %1674 = vmatprep.subr.bf16.mxu0 0
    %1675 = vmatpush2.bf16.msra.mxu0 0
    %1676 = vmatprep.mubr.bf16.mxu0 0
    %1677 = vmatmul.mubr.bf16.gmra.mxu0 %v1456
    %v1678 = vpop.f32.mrf.mxu0
    %v1679 = vadd.f32 %v1594, %v1678
    %v1680 = vpop.f32.mrf.mxu0
    %v1681 = vpop.f32.mrf.mxu0
    %v1682 = vadd.f32 %v1594, %v1681
    %v1683 = vpop.f32.mrf.mxu0
    %1684 = vdwg.mxu0
    %v1685 = vpack.c.bf16 %v1450, %v1450
    %v1686 = vpack.c.bf16 %v1453, %v1453
    %v1687 = vpack.c.bf16 %v1565, %v1565
    %v1688 = vpack.c.bf16 %v1568, %v1568
    %v1689 = vpack.c.bf16 %v1679, %v1679
    %v1690 = vpack.c.bf16 %v1682, %v1682
    %v1692 = vsel %vm470, %v1685, 0
    %v1695 = vsel %vm470, %v1687, 0
    %1697 = vmatprep.subr.bf16.mxu0 0
    %1698 = vmatpush1.bf16.xpose.msra.mxu0 0
    %1699 = vmatprep.subr.bf16.mxu0 0
    %1700 = vmatpush1.bf16.xpose.msra.mxu0 0
    %1701 = vmatprep.subr.bf16.mxu0 0
    %1702 = vmatpush1.bf16.xpose.msra.mxu0 0
    %1703 = vmatprep.subr.bf16.mxu0 0
    %1704 = vmatpush1.bf16.xpose.msra.mxu0 0
    %1705 = vmatprep.subr.bf16.mxu0 0
    %1706 = vmatpush1.bf16.xpose.msra.mxu0 0
    %1707 = vmatprep.subr.bf16.mxu0 0
    %1708 = vmatpush1.bf16.xpose.msra.mxu0 0
    %1709 = vmatprep.subr.bf16.mxu0 0
    %1710 = vmatpush1.bf16.xpose.msra.mxu0 0
    %1711 = vmatprep.subr.bf16.mxu0 0
    %1712 = vmatpush1.bf16.xpose.msra.mxu0 %v1695
    %1713 = vmatprep.subr.bf16.mxu0 0
    %1714 = vmatpush2.bf16.xpose.msra.mxu0 0
    %1715 = vmatprep.subr.bf16.mxu0 0
    %1716 = vmatpush2.bf16.xpose.msra.mxu0 0
    %1717 = vmatprep.subr.bf16.mxu0 0
    %1718 = vmatpush2.bf16.xpose.msra.mxu0 0
    %1719 = vmatprep.subr.bf16.mxu0 0
    %1720 = vmatpush2.bf16.xpose.msra.mxu0 0
    %1721 = vmatprep.subr.bf16.mxu0 0
    %1722 = vmatpush2.bf16.xpose.msra.mxu0 0
    %1723 = vmatprep.subr.bf16.mxu0 0
    %1724 = vmatpush2.bf16.xpose.msra.mxu0 0
    %1725 = vmatprep.subr.bf16.mxu0 0
    %1726 = vmatpush2.bf16.xpose.msra.mxu0 0
    %1727 = vmatprep.subr.bf16.mxu0 0
    %1728 = vmatpush2.bf16.xpose.msra.mxu0 0
    %1729 = vmatprep.mubr.bf16.mxu0 0
    %1730 = vmatmul.mubr.bf16.gmra.mxu0 %v1692
    %v1731 = vpop.f32.mrf.mxu0
    %v1732 = vadd.f32 %v83, %v1731
    %v1733 = vpop.f32.mrf.mxu0
    %v1734 = vpop.f32.mrf.mxu0
    %v1735 = vpop.f32.mrf.mxu0
    %1736 = vdwg.mxu0
    %v1738 = vsel %vm470, %v1686, 0
    %v1741 = vsel %vm470, %v1688, 0
    %1743 = vmatprep.subr.bf16.mxu0 0
    %1744 = vmatpush1.bf16.xpose.msra.mxu0 0
    %1745 = vmatprep.subr.bf16.mxu0 0
    %1746 = vmatpush1.bf16.xpose.msra.mxu0 0
    %1747 = vmatprep.subr.bf16.mxu0 0
    %1748 = vmatpush1.bf16.xpose.msra.mxu0 0
    %1749 = vmatprep.subr.bf16.mxu0 0
    %1750 = vmatpush1.bf16.xpose.msra.mxu0 0
    %1751 = vmatprep.subr.bf16.mxu0 0
    %1752 = vmatpush1.bf16.xpose.msra.mxu0 0
    %1753 = vmatprep.subr.bf16.mxu0 0
    %1754 = vmatpush1.bf16.xpose.msra.mxu0 0
    %1755 = vmatprep.subr.bf16.mxu0 0
    %1756 = vmatpush1.bf16.xpose.msra.mxu0 0
    %1757 = vmatprep.subr.bf16.mxu0 0
    %1758 = vmatpush1.bf16.xpose.msra.mxu0 %v1741
    %1759 = vmatprep.subr.bf16.mxu0 0
    %1760 = vmatpush2.bf16.xpose.msra.mxu0 0
    %1761 = vmatprep.subr.bf16.mxu0 0
    %1762 = vmatpush2.bf16.xpose.msra.mxu0 0
    %1763 = vmatprep.subr.bf16.mxu0 0
    %1764 = vmatpush2.bf16.xpose.msra.mxu0 0
    %1765 = vmatprep.subr.bf16.mxu0 0
    %1766 = vmatpush2.bf16.xpose.msra.mxu0 0
    %1767 = vmatprep.subr.bf16.mxu0 0
    %1768 = vmatpush2.bf16.xpose.msra.mxu0 0
    %1769 = vmatprep.subr.bf16.mxu0 0
    %1770 = vmatpush2.bf16.xpose.msra.mxu0 0
    %1771 = vmatprep.subr.bf16.mxu0 0
    %1772 = vmatpush2.bf16.xpose.msra.mxu0 0
    %1773 = vmatprep.subr.bf16.mxu0 0
    %1774 = vmatpush2.bf16.xpose.msra.mxu0 0
    %1775 = vmatprep.mubr.bf16.mxu0 0
    %1776 = vmatmul.mubr.bf16.gmra.mxu0 %v1738
    %v1777 = vpop.f32.mrf.mxu0
    %v1778 = vadd.f32 %v83, %v1777
    %v1779 = vpop.f32.mrf.mxu0
    %v1780 = vpop.f32.mrf.mxu0
    %v1781 = vpop.f32.mrf.mxu0
    %1782 = vdwg.mxu0
    %v1783 = vsel %vm563, %v1732, -inf
    %1784 = vmax.xlane.f32.xlu0 %v1783
    %v1785 = vpop.xlane.xlu0 %1784
    %v1786 = vsel %vm563, %v1778, -inf
    %1787 = vmax.xlane.f32.xlu0 %v1786
    %v1788 = vpop.xlane.xlu0 %1787
    %v1789 = vsub.f32 %v1732, %v1785
    %v1790 = vsub.f32 %v1778, %v1788
    %v1791 = vmul.f32 %v1789, 1.442695
    %v1792 = vpow.pop %v1791
    %v1793 = vmul.f32 %v1790, 1.442695
    %v1794 = vpow.pop %v1793
    %v1795 = vsel %vm563, %v1792, 0.0
    %1796 = vadd.xlane.f32.xlu0 %v1795
    %v1797 = vpop.xlane.xlu0 %1796
    %v1798 = vsel %vm563, %v1794, 0.0
    %1799 = vadd.xlane.f32.xlu0 %v1798
    %v1800 = vpop.xlane.xlu0 %1799
    %v1801 = vrcp.pop %v1797
    %v1802 = vrcp.pop %v1800
    %v1803 = vmul.f32 %v1792, %v1801
    %v1804 = vmul.f32 %v1794, %v1802
    %v1805 = vpack.c.bf16 %v1803, %v1803
    %v1806 = vpack.c.bf16 %v1804, %v1804
    %v1808 = vsel %vm563, %v1805, 0
    %v1811 = vsel %vm591, %v1689, 0
    %1813 = vmatprep.subr.bf16.mxu0 0
    %1814 = vmatpush1.bf16.msra.mxu0 0
    %1815 = vmatprep.subr.bf16.mxu0 0
    %1816 = vmatpush1.bf16.msra.mxu0 0
    %1817 = vmatprep.subr.bf16.mxu0 0
    %1818 = vmatpush1.bf16.msra.mxu0 0
    %1819 = vmatprep.subr.bf16.mxu0 0
    %1820 = vmatpush1.bf16.msra.mxu0 0
    %1821 = vmatprep.subr.bf16.mxu0 0
    %1822 = vmatpush1.bf16.msra.mxu0 0
    %1823 = vmatprep.subr.bf16.mxu0 0
    %1824 = vmatpush1.bf16.msra.mxu0 0
    %1825 = vmatprep.subr.bf16.mxu0 0
    %1826 = vmatpush1.bf16.msra.mxu0 0
    %1827 = vmatprep.subr.bf16.mxu0 0
    %1828 = vmatpush1.bf16.msra.mxu0 %v1811
    %1829 = vmatprep.subr.bf16.mxu0 0
    %1830 = vmatpush2.bf16.msra.mxu0 0
    %1831 = vmatprep.subr.bf16.mxu0 0
    %1832 = vmatpush2.bf16.msra.mxu0 0
    %1833 = vmatprep.subr.bf16.mxu0 0
    %1834 = vmatpush2.bf16.msra.mxu0 0
    %1835 = vmatprep.subr.bf16.mxu0 0
    %1836 = vmatpush2.bf16.msra.mxu0 0
    %1837 = vmatprep.subr.bf16.mxu0 0
    %1838 = vmatpush2.bf16.msra.mxu0 0
    %1839 = vmatprep.subr.bf16.mxu0 0
    %1840 = vmatpush2.bf16.msra.mxu0 0
    %1841 = vmatprep.subr.bf16.mxu0 0
    %1842 = vmatpush2.bf16.msra.mxu0 0
    %1843 = vmatprep.subr.bf16.mxu0 0
    %1844 = vmatpush2.bf16.msra.mxu0 0
    %1845 = vmatprep.mubr.bf16.mxu0 0
    %1846 = vmatmul.mubr.bf16.gmra.mxu0 %v1808
    %v1847 = vpop.f32.mrf.mxu0
    %v1848 = vadd.f32 0.0, %v1847
    %v1849 = vpop.f32.mrf.mxu0
    %v1850 = vpop.f32.mrf.mxu0
    %v1851 = vpop.f32.mrf.mxu0
    %1852 = vdwg.mxu0
    %v1854 = vsel %vm563, %v1806, 0
    %v1857 = vsel %vm591, %v1690, 0
    %1859 = vmatprep.subr.bf16.mxu0 0
    %1860 = vmatpush1.bf16.msra.mxu0 0
    %1861 = vmatprep.subr.bf16.mxu0 0
    %1862 = vmatpush1.bf16.msra.mxu0 0
    %1863 = vmatprep.subr.bf16.mxu0 0
    %1864 = vmatpush1.bf16.msra.mxu0 0
    %1865 = vmatprep.subr.bf16.mxu0 0
    %1866 = vmatpush1.bf16.msra.mxu0 0
    %1867 = vmatprep.subr.bf16.mxu0 0
    %1868 = vmatpush1.bf16.msra.mxu0 0
    %1869 = vmatprep.subr.bf16.mxu0 0
    %1870 = vmatpush1.bf16.msra.mxu0 0
    %1871 = vmatprep.subr.bf16.mxu0 0
    %1872 = vmatpush1.bf16.msra.mxu0 0
    %1873 = vmatprep.subr.bf16.mxu0 0
    %1874 = vmatpush1.bf16.msra.mxu0 %v1857
    %1875 = vmatprep.subr.bf16.mxu0 0
    %1876 = vmatpush2.bf16.msra.mxu0 0
    %1877 = vmatprep.subr.bf16.mxu0 0
    %1878 = vmatpush2.bf16.msra.mxu0 0
    %1879 = vmatprep.subr.bf16.mxu0 0
    %1880 = vmatpush2.bf16.msra.mxu0 0
    %1881 = vmatprep.subr.bf16.mxu0 0
    %1882 = vmatpush2.bf16.msra.mxu0 0
    %1883 = vmatprep.subr.bf16.mxu0 0
    %1884 = vmatpush2.bf16.msra.mxu0 0
    %1885 = vmatprep.subr.bf16.mxu0 0
    %1886 = vmatpush2.bf16.msra.mxu0 0
    %1887 = vmatprep.subr.bf16.mxu0 0
    %1888 = vmatpush2.bf16.msra.mxu0 0
    %1889 = vmatprep.subr.bf16.mxu0 0
    %1890 = vmatpush2.bf16.msra.mxu0 0
    %1891 = vmatprep.mubr.bf16.mxu0 0
    %1892 = vmatmul.mubr.bf16.gmra.mxu0 %v1854
    %v1893 = vpop.f32.mrf.mxu0
    %v1894 = vadd.f32 0.0, %v1893
    %v1895 = vpop.f32.mrf.mxu0
    %v1896 = vpop.f32.mrf.mxu0
    %v1897 = vpop.f32.mrf.mxu0
    %1898 = vdwg.mxu0
    %v1899 = vpack.c.bf16 %v1894, %v1848
    %s1900 = scalar_lea.vmem %s12, 16
    %v1901 = vld [vmem:[%s1900] sm:$0xf]
    %v1902 = vld [vmem:[%s1900 + $0x4] sm:$0xf]
    %1904 = vrot.lane.b32.xlu0 %v1685, 112
    %v1905 = vpop.permute.xlu0 %1904
    %1907 = vrot.lane.b32.xlu0 %v1687, 112
    %v1908 = vpop.permute.xlu0 %1907
    %v1910 = vsel %vm470, %v1905, 0
    %v1913 = vsel %vm470, %v1908, 0
    %1915 = vmatprep.subr.bf16.mxu0 0
    %1916 = vmatpush1.bf16.xpose.msra.mxu0 0
    %1917 = vmatprep.subr.bf16.mxu0 0
    %1918 = vmatpush1.bf16.xpose.msra.mxu0 0
    %1919 = vmatprep.subr.bf16.mxu0 0
    %1920 = vmatpush1.bf16.xpose.msra.mxu0 0
    %1921 = vmatprep.subr.bf16.mxu0 0
    %1922 = vmatpush1.bf16.xpose.msra.mxu0 0
    %1923 = vmatprep.subr.bf16.mxu0 0
    %1924 = vmatpush1.bf16.xpose.msra.mxu0 0
    %1925 = vmatprep.subr.bf16.mxu0 0
    %1926 = vmatpush1.bf16.xpose.msra.mxu0 0
    %1927 = vmatprep.subr.bf16.mxu0 0
    %1928 = vmatpush1.bf16.xpose.msra.mxu0 0
    %1929 = vmatprep.subr.bf16.mxu0 0
    %1930 = vmatpush1.bf16.xpose.msra.mxu0 %v1913
    %1931 = vmatprep.subr.bf16.mxu0 0
    %1932 = vmatpush2.bf16.xpose.msra.mxu0 0
    %1933 = vmatprep.subr.bf16.mxu0 0
    %1934 = vmatpush2.bf16.xpose.msra.mxu0 0
    %1935 = vmatprep.subr.bf16.mxu0 0
    %1936 = vmatpush2.bf16.xpose.msra.mxu0 0
    %1937 = vmatprep.subr.bf16.mxu0 0
    %1938 = vmatpush2.bf16.xpose.msra.mxu0 0
    %1939 = vmatprep.subr.bf16.mxu0 0
    %1940 = vmatpush2.bf16.xpose.msra.mxu0 0
    %1941 = vmatprep.subr.bf16.mxu0 0
    %1942 = vmatpush2.bf16.xpose.msra.mxu0 0
    %1943 = vmatprep.subr.bf16.mxu0 0
    %1944 = vmatpush2.bf16.xpose.msra.mxu0 0
    %1945 = vmatprep.subr.bf16.mxu0 0
    %1946 = vmatpush2.bf16.xpose.msra.mxu0 0
    %1947 = vmatprep.mubr.bf16.mxu0 0
    %1948 = vmatmul.mubr.bf16.gmra.mxu0 %v1910
    %v1949 = vpop.f32.mrf.mxu0
    %v1950 = vadd.f32 %v83, %v1949
    %v1951 = vpop.f32.mrf.mxu0
    %v1952 = vpop.f32.mrf.mxu0
    %v1953 = vpop.f32.mrf.mxu0
    %1954 = vdwg.mxu0
    %1956 = vrot.lane.b32.xlu0 %v1686, 112
    %v1957 = vpop.permute.xlu0 %1956
    %1959 = vrot.lane.b32.xlu0 %v1688, 112
    %v1960 = vpop.permute.xlu0 %1959
    %v1962 = vsel %vm470, %v1957, 0
    %v1965 = vsel %vm470, %v1960, 0
    %1967 = vmatprep.subr.bf16.mxu0 0
    %1968 = vmatpush1.bf16.xpose.msra.mxu0 0
    %1969 = vmatprep.subr.bf16.mxu0 0
    %1970 = vmatpush1.bf16.xpose.msra.mxu0 0
    %1971 = vmatprep.subr.bf16.mxu0 0
    %1972 = vmatpush1.bf16.xpose.msra.mxu0 0
    %1973 = vmatprep.subr.bf16.mxu0 0
    %1974 = vmatpush1.bf16.xpose.msra.mxu0 0
    %1975 = vmatprep.subr.bf16.mxu0 0
    %1976 = vmatpush1.bf16.xpose.msra.mxu0 0
    %1977 = vmatprep.subr.bf16.mxu0 0
    %1978 = vmatpush1.bf16.xpose.msra.mxu0 0
    %1979 = vmatprep.subr.bf16.mxu0 0
    %1980 = vmatpush1.bf16.xpose.msra.mxu0 0
    %1981 = vmatprep.subr.bf16.mxu0 0
    %1982 = vmatpush1.bf16.xpose.msra.mxu0 %v1965
    %1983 = vmatprep.subr.bf16.mxu0 0
    %1984 = vmatpush2.bf16.xpose.msra.mxu0 0
    %1985 = vmatprep.subr.bf16.mxu0 0
    %1986 = vmatpush2.bf16.xpose.msra.mxu0 0
    %1987 = vmatprep.subr.bf16.mxu0 0
    %1988 = vmatpush2.bf16.xpose.msra.mxu0 0
    %1989 = vmatprep.subr.bf16.mxu0 0
    %1990 = vmatpush2.bf16.xpose.msra.mxu0 0
    %1991 = vmatprep.subr.bf16.mxu0 0
    %1992 = vmatpush2.bf16.xpose.msra.mxu0 0
    %1993 = vmatprep.subr.bf16.mxu0 0
    %1994 = vmatpush2.bf16.xpose.msra.mxu0 0
    %1995 = vmatprep.subr.bf16.mxu0 0
    %1996 = vmatpush2.bf16.xpose.msra.mxu0 0
    %1997 = vmatprep.subr.bf16.mxu0 0
    %1998 = vmatpush2.bf16.xpose.msra.mxu0 0
    %1999 = vmatprep.mubr.bf16.mxu0 0
    %2000 = vmatmul.mubr.bf16.gmra.mxu0 %v1962
    %v2001 = vpop.f32.mrf.mxu0
    %v2002 = vadd.f32 %v83, %v2001
    %v2003 = vpop.f32.mrf.mxu0
    %v2004 = vpop.f32.mrf.mxu0
    %v2005 = vpop.f32.mrf.mxu0
    %2006 = vdwg.mxu0
    %v2007 = vsel %vm563, %v1950, -inf
    %2008 = vmax.xlane.f32.xlu0 %v2007
    %v2009 = vpop.xlane.xlu0 %2008
    %v2010 = vsel %vm563, %v2002, -inf
    %2011 = vmax.xlane.f32.xlu0 %v2010
    %v2012 = vpop.xlane.xlu0 %2011
    %v2013 = vsub.f32 %v1950, %v2009
    %v2014 = vsub.f32 %v2002, %v2012
    %v2015 = vmul.f32 %v2013, 1.442695
    %v2016 = vpow.pop %v2015
    %v2017 = vmul.f32 %v2014, 1.442695
    %v2018 = vpow.pop %v2017
    %v2019 = vsel %vm563, %v2016, 0.0
    %2020 = vadd.xlane.f32.xlu0 %v2019
    %v2021 = vpop.xlane.xlu0 %2020
    %v2022 = vsel %vm563, %v2018, 0.0
    %2023 = vadd.xlane.f32.xlu0 %v2022
    %v2024 = vpop.xlane.xlu0 %2023
    %v2025 = vrcp.pop %v2021
    %v2026 = vrcp.pop %v2024
    %v2027 = vmul.f32 %v2016, %v2025
    %v2028 = vmul.f32 %v2018, %v2026
    %v2029 = vpack.c.bf16 %v2027, %v2027
    %v2030 = vpack.c.bf16 %v2028, %v2028
    %2032 = vrot.lane.b32.xlu0 %v1689, 112
    %v2033 = vpop.permute.xlu0 %2032
    %v2035 = vsel %vm563, %v2029, 0
    %v2038 = vsel %vm591, %v2033, 0
    %2040 = vmatprep.subr.bf16.mxu0 0
    %2041 = vmatpush1.bf16.msra.mxu0 0
    %2042 = vmatprep.subr.bf16.mxu0 0
    %2043 = vmatpush1.bf16.msra.mxu0 0
    %2044 = vmatprep.subr.bf16.mxu0 0
    %2045 = vmatpush1.bf16.msra.mxu0 0
    %2046 = vmatprep.subr.bf16.mxu0 0
    %2047 = vmatpush1.bf16.msra.mxu0 0
    %2048 = vmatprep.subr.bf16.mxu0 0
    %2049 = vmatpush1.bf16.msra.mxu0 0
    %2050 = vmatprep.subr.bf16.mxu0 0
    %2051 = vmatpush1.bf16.msra.mxu0 0
    %2052 = vmatprep.subr.bf16.mxu0 0
    %2053 = vmatpush1.bf16.msra.mxu0 0
    %2054 = vmatprep.subr.bf16.mxu0 0
    %2055 = vmatpush1.bf16.msra.mxu0 %v2038
    %2056 = vmatprep.subr.bf16.mxu0 0
    %2057 = vmatpush2.bf16.msra.mxu0 0
    %2058 = vmatprep.subr.bf16.mxu0 0
    %2059 = vmatpush2.bf16.msra.mxu0 0
    %2060 = vmatprep.subr.bf16.mxu0 0
    %2061 = vmatpush2.bf16.msra.mxu0 0
    %2062 = vmatprep.subr.bf16.mxu0 0
    %2063 = vmatpush2.bf16.msra.mxu0 0
    %2064 = vmatprep.subr.bf16.mxu0 0
    %2065 = vmatpush2.bf16.msra.mxu0 0
    %2066 = vmatprep.subr.bf16.mxu0 0
    %2067 = vmatpush2.bf16.msra.mxu0 0
    %2068 = vmatprep.subr.bf16.mxu0 0
    %2069 = vmatpush2.bf16.msra.mxu0 0
    %2070 = vmatprep.subr.bf16.mxu0 0
    %2071 = vmatpush2.bf16.msra.mxu0 0
    %2072 = vmatprep.mubr.bf16.mxu0 0
    %2073 = vmatmul.mubr.bf16.gmra.mxu0 %v2035
    %v2074 = vpop.f32.mrf.mxu0
    %v2075 = vadd.f32 0.0, %v2074
    %v2076 = vpop.f32.mrf.mxu0
    %v2077 = vpop.f32.mrf.mxu0
    %v2078 = vpop.f32.mrf.mxu0
    %2079 = vdwg.mxu0
    %2081 = vrot.lane.b32.xlu0 %v1690, 112
    %v2082 = vpop.permute.xlu0 %2081
    %v2084 = vsel %vm563, %v2030, 0
    %v2087 = vsel %vm591, %v2082, 0
    %2089 = vmatprep.subr.bf16.mxu0 0
    %2090 = vmatpush1.bf16.msra.mxu0 0
    %2091 = vmatprep.subr.bf16.mxu0 0
    %2092 = vmatpush1.bf16.msra.mxu0 0
    %2093 = vmatprep.subr.bf16.mxu0 0
    %2094 = vmatpush1.bf16.msra.mxu0 0
    %2095 = vmatprep.subr.bf16.mxu0 0
    %2096 = vmatpush1.bf16.msra.mxu0 0
    %2097 = vmatprep.subr.bf16.mxu0 0
    %2098 = vmatpush1.bf16.msra.mxu0 0
    %2099 = vmatprep.subr.bf16.mxu0 0
    %2100 = vmatpush1.bf16.msra.mxu0 0
    %2101 = vmatprep.subr.bf16.mxu0 0
    %2102 = vmatpush1.bf16.msra.mxu0 0
    %2103 = vmatprep.subr.bf16.mxu0 0
    %2104 = vmatpush1.bf16.msra.mxu0 %v2087
    %2105 = vmatprep.subr.bf16.mxu0 0
    %2106 = vmatpush2.bf16.msra.mxu0 0
    %2107 = vmatprep.subr.bf16.mxu0 0
    %2108 = vmatpush2.bf16.msra.mxu0 0
    %2109 = vmatprep.subr.bf16.mxu0 0
    %2110 = vmatpush2.bf16.msra.mxu0 0
    %2111 = vmatprep.subr.bf16.mxu0 0
    %2112 = vmatpush2.bf16.msra.mxu0 0
    %2113 = vmatprep.subr.bf16.mxu0 0
    %2114 = vmatpush2.bf16.msra.mxu0 0
    %2115 = vmatprep.subr.bf16.mxu0 0
    %2116 = vmatpush2.bf16.msra.mxu0 0
    %2117 = vmatprep.subr.bf16.mxu0 0
    %2118 = vmatpush2.bf16.msra.mxu0 0
    %2119 = vmatprep.subr.bf16.mxu0 0
    %2120 = vmatpush2.bf16.msra.mxu0 0
    %2121 = vmatprep.mubr.bf16.mxu0 0
    %2122 = vmatmul.mubr.bf16.gmra.mxu0 %v2084
    %v2123 = vpop.f32.mrf.mxu0
    %v2124 = vadd.f32 0.0, %v2123
    %v2125 = vpop.f32.mrf.mxu0
    %v2126 = vpop.f32.mrf.mxu0
    %v2127 = vpop.f32.mrf.mxu0
    %2128 = vdwg.mxu0
    %v2129 = vpack.c.bf16 %v2124, %v2075
    %s2130 = scalar_lea.vmem %s12, 24
    %v2131 = vld [vmem:[%s2130] sm:$0xf]
    %v2132 = vld [vmem:[%s2130 + $0x4] sm:$0xf]
    %v2135 = vunpack.c.l.b16 %v2131
    %v2136 = vunpack.c.l.b16 %v2132
    %v2137 = vpack.c.b16 %v2136, %v2135
    %v2140 = vsel %vm470, %v2129, 0
    %2142 = vmatprep.subr.bf16.mxu0 0
    %2143 = vmatpush1.bf16.msra.mxu0 0
    %2144 = vmatprep.subr.bf16.mxu0 0
    %2145 = vmatpush1.bf16.msra.mxu0 0
    %2146 = vmatprep.subr.bf16.mxu0 0
    %2147 = vmatpush1.bf16.msra.mxu0 0
    %2148 = vmatprep.subr.bf16.mxu0 0
    %2149 = vmatpush1.bf16.msra.mxu0 0
    %2150 = vmatprep.subr.bf16.mxu0 0
    %2151 = vmatpush1.bf16.msra.mxu0 0
    %2152 = vmatprep.subr.bf16.mxu0 0
    %2153 = vmatpush1.bf16.msra.mxu0 0
    %2154 = vmatprep.subr.bf16.mxu0 0
    %2155 = vmatpush1.bf16.msra.mxu0 0
    %2156 = vmatprep.subr.bf16.mxu0 0
    %2157 = vmatpush1.bf16.msra.mxu0 %v2137
    %2158 = vmatprep.subr.bf16.mxu0 0
    %2159 = vmatpush2.bf16.msra.mxu0 0
    %2160 = vmatprep.subr.bf16.mxu0 0
    %2161 = vmatpush2.bf16.msra.mxu0 0
    %2162 = vmatprep.subr.bf16.mxu0 0
    %2163 = vmatpush2.bf16.msra.mxu0 0
    %2164 = vmatprep.subr.bf16.mxu0 0
    %2165 = vmatpush2.bf16.msra.mxu0 0
    %2166 = vmatprep.subr.bf16.mxu0 0
    %2167 = vmatpush2.bf16.msra.mxu0 0
    %2168 = vmatprep.subr.bf16.mxu0 0
    %2169 = vmatpush2.bf16.msra.mxu0 0
    %2170 = vmatprep.subr.bf16.mxu0 0
    %2171 = vmatpush2.bf16.msra.mxu0 0
    %2172 = vmatprep.subr.bf16.mxu0 0
    %2173 = vmatpush2.bf16.msra.mxu0 0
    %2174 = vmatprep.mubr.bf16.mxu0 0
    %2175 = vmatmul.mubr.bf16.gmra.mxu0 %v2140
    %v2176 = vpop.f32.mrf.mxu0
    %v2177 = vadd.f32 0.0, %v2176
    %v2178 = vpop.f32.mrf.mxu0
    %v2179 = vpop.f32.mrf.mxu0
    %v2180 = vadd.f32 0.0, %v2179
    %v2181 = vpop.f32.mrf.mxu0
    %2182 = vdwg.mxu0
    %v2185 = vunpack.c.l.b16 %v1901
    %v2186 = vunpack.c.l.b16 %v1902
    %v2187 = vpack.c.b16 %v2186, %v2185
    %v2190 = vsel %vm470, %v1899, 0
    %2192 = vmatprep.subr.bf16.mxu0 0
    %2193 = vmatpush1.bf16.msra.mxu0 0
    %2194 = vmatprep.subr.bf16.mxu0 0
    %2195 = vmatpush1.bf16.msra.mxu0 0
    %2196 = vmatprep.subr.bf16.mxu0 0
    %2197 = vmatpush1.bf16.msra.mxu0 0
    %2198 = vmatprep.subr.bf16.mxu0 0
    %2199 = vmatpush1.bf16.msra.mxu0 0
    %2200 = vmatprep.subr.bf16.mxu0 0
    %2201 = vmatpush1.bf16.msra.mxu0 0
    %2202 = vmatprep.subr.bf16.mxu0 0
    %2203 = vmatpush1.bf16.msra.mxu0 0
    %2204 = vmatprep.subr.bf16.mxu0 0
    %2205 = vmatpush1.bf16.msra.mxu0 0
    %2206 = vmatprep.subr.bf16.mxu0 0
    %2207 = vmatpush1.bf16.msra.mxu0 %v2187
    %2208 = vmatprep.subr.bf16.mxu0 0
    %2209 = vmatpush2.bf16.msra.mxu0 0
    %2210 = vmatprep.subr.bf16.mxu0 0
    %2211 = vmatpush2.bf16.msra.mxu0 0
    %2212 = vmatprep.subr.bf16.mxu0 0
    %2213 = vmatpush2.bf16.msra.mxu0 0
    %2214 = vmatprep.subr.bf16.mxu0 0
    %2215 = vmatpush2.bf16.msra.mxu0 0
    %2216 = vmatprep.subr.bf16.mxu0 0
    %2217 = vmatpush2.bf16.msra.mxu0 0
    %2218 = vmatprep.subr.bf16.mxu0 0
    %2219 = vmatpush2.bf16.msra.mxu0 0
    %2220 = vmatprep.subr.bf16.mxu0 0
    %2221 = vmatpush2.bf16.msra.mxu0 0
    %2222 = vmatprep.subr.bf16.mxu0 0
    %2223 = vmatpush2.bf16.msra.mxu0 0
    %2224 = vmatprep.mubr.bf16.mxu0 0
    %2225 = vmatmul.mubr.bf16.gmra.mxu0 %v2190
    %v2226 = vpop.f32.mrf.mxu0
    %v2227 = vadd.f32 %v2177, %v2226
    %v2228 = vpop.f32.mrf.mxu0
    %v2229 = vpop.f32.mrf.mxu0
    %v2230 = vadd.f32 %v2180, %v2229
    %v2231 = vpop.f32.mrf.mxu0
    %2232 = vdwg.mxu0
    %s2233 = scalar_lea.vmem %s13, 1
    %v2234 = vld [vmem:[%s2233] sm:$0x1]
    %v2236 = vlaneseq
    %v2237 = vshrl.u32 %v2236, 7
    %v2238 = vsub.s32 0, %v2237
    %v2239 = vrot.slane %v2234, %v2238
    %v2241 = vadd.f32 %v2227, %v2239
    %v2242 = vadd.f32 %v2230, %v2239
    %v2243 = vadd.f32 %v1339, %v2241
    %v2244 = vadd.f32 %v1340, %v2242
    %s2245 = scalar_lea.vmem %s14, 1
    %v2246 = vld [vmem:[%s2245] sm:$0x1]
    %s2247 = scalar_lea.vmem %s15, 1
    %v2248 = vld [vmem:[%s2247] sm:$0x1]
    %2249 = vadd.xlane.f32.xlu0 %v2243
    %v2250 = vpop.xlane.xlu0 %2249
    %2251 = vadd.xlane.f32.xlu0 %v2244
    %v2252 = vpop.xlane.xlu0 %2251
    %v2253 = vmul.f32 %v2250, 0.03125
    %v2254 = vmul.f32 %v2252, 0.03125
    %v2255 = vsub.f32 %v2243, %v2253
    %v2256 = vsub.f32 %v2244, %v2254
    %v2257 = vmul.f32 %v2255, %v82
    %v2258 = vmul.f32 %v2256, %v82
    %v2259 = vmul.f32 %v2257, %v2257
    %v2260 = vmul.f32 %v2258, %v2258
    %2261 = vadd.xlane.f32.xlu0 %v2259
    %v2262 = vpop.xlane.xlu0 %2261
    %2263 = vadd.xlane.f32.xlu0 %v2260
    %v2264 = vpop.xlane.xlu0 %2263
    %v2265 = vmul.f32 %v2262, 0.03125
    %v2266 = vmul.f32 %v2264, 0.03125
    %v2267 = vadd.f32 %v2265, 1e-08
    %v2268 = vadd.f32 %v2266, 1e-08
    %v2269 = vrsqrt.pop %v2267
    %v2270 = vrsqrt.pop %v2268
    %v2271 = vmul.f32 %v2257, %v2269
    %v2272 = vmul.f32 %v2258, %v2270
    %v2274 = vlaneseq
    %v2275 = vshrl.u32 %v2274, 7
    %v2276 = vsub.s32 0, %v2275
    %v2277 = vrot.slane %v2246, %v2276
    %v2279 = vmul.f32 %v2271, %v2277
    %v2280 = vmul.f32 %v2272, %v2277
    %v2282 = vlaneseq
    %v2283 = vshrl.u32 %v2282, 7
    %v2284 = vsub.s32 0, %v2283
    %v2285 = vrot.slane %v2248, %v2284
    %v2287 = vadd.f32 %v2279, %v2285
    %v2288 = vadd.f32 %v2280, %v2285
    %v2289 = vpack.c.bf16 %v2288, %v2287
    %s2290 = scalar_lea.vmem %s16, 64
    %v2291 = vld [vmem:[%s2290] sm:$0xf]
    %v2292 = vld [vmem:[%s2290 + $0x4] sm:$0xf]
    %v2293 = vld [vmem:[%s2290 + $0x8] sm:$0xf]
    %v2294 = vld [vmem:[%s2290 + $0xc] sm:$0xf]
    %v2295 = vld [vmem:[%s2290 + $0x10] sm:$0xf]
    %v2296 = vld [vmem:[%s2290 + $0x14] sm:$0xf]
    %v2297 = vld [vmem:[%s2290 + $0x18] sm:$0xf]
    %v2298 = vld [vmem:[%s2290 + $0x1c] sm:$0xf]
    %v2299 = vld [vmem:[%s2290 + $0x20] sm:$0xf]
    %v2300 = vld [vmem:[%s2290 + $0x24] sm:$0xf]
    %v2301 = vld [vmem:[%s2290 + $0x28] sm:$0xf]
    %v2302 = vld [vmem:[%s2290 + $0x2c] sm:$0xf]
    %v2303 = vld [vmem:[%s2290 + $0x30] sm:$0xf]
    %v2304 = vld [vmem:[%s2290 + $0x34] sm:$0xf]
    %v2305 = vld [vmem:[%s2290 + $0x38] sm:$0xf]
    %v2306 = vld [vmem:[%s2290 + $0x3c] sm:$0xf]
    %s2307 = scalar_lea.vmem %s17, 1
    %v2308 = vld [vmem:[%s2307] sm:$0x1]
    %v2310 = vlaneseq
    %v2311 = vshrl.u32 %v2310, 7
    %v2312 = vsub.s32 0, %v2311
    %v2313 = vrot.slane %v2308, %v2312
    %v2331 = vunpack.c.l.b16 %v2291
    %v2332 = vunpack.c.l.b16 %v2292
    %v2333 = vunpack.c.l.b16 %v2293
    %v2334 = vunpack.c.l.b16 %v2294
    %v2335 = vunpack.c.l.b16 %v2295
    %v2336 = vunpack.c.l.b16 %v2296
    %v2337 = vunpack.c.l.b16 %v2297
    %v2338 = vunpack.c.l.b16 %v2298
    %v2339 = vunpack.c.l.b16 %v2299
    %v2340 = vunpack.c.l.b16 %v2300
    %v2341 = vunpack.c.l.b16 %v2301
    %v2342 = vunpack.c.l.b16 %v2302
    %v2343 = vunpack.c.l.b16 %v2303
    %v2344 = vunpack.c.l.b16 %v2304
    %v2345 = vunpack.c.l.b16 %v2305
    %v2346 = vunpack.c.l.b16 %v2306
    %v2347 = vpack.c.b16 %v2332, %v2331
    %v2348 = vpack.c.b16 %v2334, %v2333
    %v2349 = vpack.c.b16 %v2336, %v2335
    %v2350 = vpack.c.b16 %v2338, %v2337
    %v2351 = vpack.c.b16 %v2340, %v2339
    %v2352 = vpack.c.b16 %v2342, %v2341
    %v2353 = vpack.c.b16 %v2344, %v2343
    %v2354 = vpack.c.b16 %v2346, %v2345
    %2363 = vmatprep.subr.bf16.mxu0 0
    %2364 = vmatpush1.bf16.msra.mxu0 %v2354
    %2365 = vmatprep.subr.bf16.mxu0 0
    %2366 = vmatpush1.bf16.msra.mxu0 %v2353
    %2367 = vmatprep.subr.bf16.mxu0 0
    %2368 = vmatpush1.bf16.msra.mxu0 %v2352
    %2369 = vmatprep.subr.bf16.mxu0 0
    %2370 = vmatpush1.bf16.msra.mxu0 %v2351
    %2371 = vmatprep.subr.bf16.mxu0 0
    %2372 = vmatpush1.bf16.msra.mxu0 %v2350
    %2373 = vmatprep.subr.bf16.mxu0 0
    %2374 = vmatpush1.bf16.msra.mxu0 %v2349
    %2375 = vmatprep.subr.bf16.mxu0 0
    %2376 = vmatpush1.bf16.msra.mxu0 %v2348
    %2377 = vmatprep.subr.bf16.mxu0 0
    %2378 = vmatpush1.bf16.msra.mxu0 %v2347
    %2379 = vmatprep.subr.bf16.mxu0 0
    %2380 = vmatpush2.bf16.msra.mxu0 0
    %2381 = vmatprep.subr.bf16.mxu0 0
    %2382 = vmatpush2.bf16.msra.mxu0 0
    %2383 = vmatprep.subr.bf16.mxu0 0
    %2384 = vmatpush2.bf16.msra.mxu0 0
    %2385 = vmatprep.subr.bf16.mxu0 0
    %2386 = vmatpush2.bf16.msra.mxu0 0
    %2387 = vmatprep.subr.bf16.mxu0 0
    %2388 = vmatpush2.bf16.msra.mxu0 0
    %2389 = vmatprep.subr.bf16.mxu0 0
    %2390 = vmatpush2.bf16.msra.mxu0 0
    %2391 = vmatprep.subr.bf16.mxu0 0
    %2392 = vmatpush2.bf16.msra.mxu0 0
    %2393 = vmatprep.subr.bf16.mxu0 0
    %2394 = vmatpush2.bf16.msra.mxu0 0
    %2395 = vmatprep.mubr.bf16.mxu0 0
    %2396 = vmatmul.mubr.bf16.gmra.mxu0 %v2289
    %v2397 = vpop.f32.mrf.mxu0
    %v2398 = vadd.f32 %v2313, %v2397
    %v2399 = vpop.f32.mrf.mxu0
    %v2400 = vpop.f32.mrf.mxu0
    %v2401 = vadd.f32 %v2313, %v2400
    %v2402 = vpop.f32.mrf.mxu0
    %2403 = vdwg.mxu0
    %v2404 = vmax.f32 %v2398, 0.0
    %v2405 = vmax.f32 %v2401, 0.0
    %v2406 = vpack.c.bf16 %v2405, %v2404
    %s2407 = scalar_lea.vmem %s18, 64
    %v2408 = vld [vmem:[%s2407] sm:$0xf]
    %v2409 = vld [vmem:[%s2407 + $0x4] sm:$0xf]
    %v2410 = vld [vmem:[%s2407 + $0x8] sm:$0xf]
    %v2411 = vld [vmem:[%s2407 + $0xc] sm:$0xf]
    %v2412 = vld [vmem:[%s2407 + $0x10] sm:$0xf]
    %v2413 = vld [vmem:[%s2407 + $0x14] sm:$0xf]
    %v2414 = vld [vmem:[%s2407 + $0x18] sm:$0xf]
    %v2415 = vld [vmem:[%s2407 + $0x1c] sm:$0xf]
    %v2416 = vld [vmem:[%s2407 + $0x20] sm:$0xf]
    %v2417 = vld [vmem:[%s2407 + $0x24] sm:$0xf]
    %v2418 = vld [vmem:[%s2407 + $0x28] sm:$0xf]
    %v2419 = vld [vmem:[%s2407 + $0x2c] sm:$0xf]
    %v2420 = vld [vmem:[%s2407 + $0x30] sm:$0xf]
    %v2421 = vld [vmem:[%s2407 + $0x34] sm:$0xf]
    %v2422 = vld [vmem:[%s2407 + $0x38] sm:$0xf]
    %v2423 = vld [vmem:[%s2407 + $0x3c] sm:$0xf]
    %s2424 = scalar_lea.vmem %s19, 1
    %v2425 = vld [vmem:[%s2424] sm:$0x1]
    %v2427 = vlaneseq
    %v2428 = vshrl.u32 %v2427, 7
    %v2429 = vsub.s32 0, %v2428
    %v2430 = vrot.slane %v2425, %v2429
    %v2448 = vunpack.c.l.b16 %v2408
    %v2449 = vunpack.c.l.b16 %v2409
    %v2450 = vunpack.c.l.b16 %v2410
    %v2451 = vunpack.c.l.b16 %v2411
    %v2452 = vunpack.c.l.b16 %v2412
    %v2453 = vunpack.c.l.b16 %v2413
    %v2454 = vunpack.c.l.b16 %v2414
    %v2455 = vunpack.c.l.b16 %v2415
    %v2456 = vunpack.c.l.b16 %v2416
    %v2457 = vunpack.c.l.b16 %v2417
    %v2458 = vunpack.c.l.b16 %v2418
    %v2459 = vunpack.c.l.b16 %v2419
    %v2460 = vunpack.c.l.b16 %v2420
    %v2461 = vunpack.c.l.b16 %v2421
    %v2462 = vunpack.c.l.b16 %v2422
    %v2463 = vunpack.c.l.b16 %v2423
    %v2464 = vpack.c.b16 %v2449, %v2448
    %v2465 = vpack.c.b16 %v2451, %v2450
    %v2466 = vpack.c.b16 %v2453, %v2452
    %v2467 = vpack.c.b16 %v2455, %v2454
    %v2468 = vpack.c.b16 %v2457, %v2456
    %v2469 = vpack.c.b16 %v2459, %v2458
    %v2470 = vpack.c.b16 %v2461, %v2460
    %v2471 = vpack.c.b16 %v2463, %v2462
    %2480 = vmatprep.subr.bf16.mxu0 0
    %2481 = vmatpush1.bf16.msra.mxu0 %v2471
    %2482 = vmatprep.subr.bf16.mxu0 0
    %2483 = vmatpush1.bf16.msra.mxu0 %v2470
    %2484 = vmatprep.subr.bf16.mxu0 0
    %2485 = vmatpush1.bf16.msra.mxu0 %v2469
    %2486 = vmatprep.subr.bf16.mxu0 0
    %2487 = vmatpush1.bf16.msra.mxu0 %v2468
    %2488 = vmatprep.subr.bf16.mxu0 0
    %2489 = vmatpush1.bf16.msra.mxu0 %v2467
    %2490 = vmatprep.subr.bf16.mxu0 0
    %2491 = vmatpush1.bf16.msra.mxu0 %v2466
    %2492 = vmatprep.subr.bf16.mxu0 0
    %2493 = vmatpush1.bf16.msra.mxu0 %v2465
    %2494 = vmatprep.subr.bf16.mxu0 0
    %2495 = vmatpush1.bf16.msra.mxu0 %v2464
    %2496 = vmatprep.subr.bf16.mxu0 0
    %2497 = vmatpush2.bf16.msra.mxu0 0
    %2498 = vmatprep.subr.bf16.mxu0 0
    %2499 = vmatpush2.bf16.msra.mxu0 0
    %2500 = vmatprep.subr.bf16.mxu0 0
    %2501 = vmatpush2.bf16.msra.mxu0 0
    %2502 = vmatprep.subr.bf16.mxu0 0
    %2503 = vmatpush2.bf16.msra.mxu0 0
    %2504 = vmatprep.subr.bf16.mxu0 0
    %2505 = vmatpush2.bf16.msra.mxu0 0
    %2506 = vmatprep.subr.bf16.mxu0 0
    %2507 = vmatpush2.bf16.msra.mxu0 0
    %2508 = vmatprep.subr.bf16.mxu0 0
    %2509 = vmatpush2.bf16.msra.mxu0 0
    %2510 = vmatprep.subr.bf16.mxu0 0
    %2511 = vmatpush2.bf16.msra.mxu0 0
    %2512 = vmatprep.mubr.bf16.mxu0 0
    %2513 = vmatmul.mubr.bf16.gmra.mxu0 %v2406
    %v2514 = vpop.f32.mrf.mxu0
    %v2515 = vadd.f32 %v2430, %v2514
    %v2516 = vpop.f32.mrf.mxu0
    %v2517 = vpop.f32.mrf.mxu0
    %v2518 = vadd.f32 %v2430, %v2517
    %v2519 = vpop.f32.mrf.mxu0
    %2520 = vdwg.mxu0
    %v2521 = vadd.f32 %v2515, %v2287
    %v2522 = vadd.f32 %v2518, %v2288
    %v2523 = vld [vmem:[%s20] sm:$0x1]
    %v2524 = vld [vmem:[%s21] sm:$0x1]
    %2525 = vadd.xlane.f32.xlu0 %v2521
    %v2526 = vpop.xlane.xlu0 %2525
    %2527 = vadd.xlane.f32.xlu0 %v2522
    %v2528 = vpop.xlane.xlu0 %2527
    %v2529 = vmul.f32 %v2526, 0.03125
    %v2530 = vmul.f32 %v2528, 0.03125
    %v2531 = vsub.f32 %v2521, %v2529
    %v2532 = vsub.f32 %v2522, %v2530
    %v2533 = vmul.f32 %v2531, %v82
    %v2534 = vmul.f32 %v2532, %v82
    %v2535 = vmul.f32 %v2533, %v2533
    %v2536 = vmul.f32 %v2534, %v2534
    %2537 = vadd.xlane.f32.xlu0 %v2535
    %v2538 = vpop.xlane.xlu0 %2537
    %2539 = vadd.xlane.f32.xlu0 %v2536
    %v2540 = vpop.xlane.xlu0 %2539
    %v2541 = vmul.f32 %v2538, 0.03125
    %v2542 = vmul.f32 %v2540, 0.03125
    %v2543 = vadd.f32 %v2541, 1e-08
    %v2544 = vadd.f32 %v2542, 1e-08
    %v2545 = vrsqrt.pop %v2543
    %v2546 = vrsqrt.pop %v2544
    %v2547 = vmul.f32 %v2533, %v2545
    %v2548 = vmul.f32 %v2534, %v2546
    %v2550 = vlaneseq
    %v2551 = vshrl.u32 %v2550, 7
    %v2552 = vsub.s32 0, %v2551
    %v2553 = vrot.slane %v2523, %v2552
    %v2555 = vmul.f32 %v2547, %v2553
    %v2556 = vmul.f32 %v2548, %v2553
    %v2558 = vlaneseq
    %v2559 = vshrl.u32 %v2558, 7
    %v2560 = vsub.s32 0, %v2559
    %v2561 = vrot.slane %v2524, %v2560
    %v2563 = vadd.f32 %v2555, %v2561
    %v2564 = vadd.f32 %v2556, %v2561
    %v2565 = vld [vmem:[%s1] sm:$0xff]
    %v2566 = vld [vmem:[%s1 + $0x8] sm:$0xff]
    %v2567 = vmul.f32 %v2563, %v2565
    %v2568 = vmul.f32 %v2564, %v2566
    %2569 = vadd.xlane.f32.xlu0 %v2567
    %v2570 = vpop.xlane.xlu0 %2569
    %2571 = vadd.xlane.f32.xlu0 %v2568
    %v2572 = vpop.xlane.xlu0 %2571
    %v2575 = vlaneseq
    %v2576 = vshrl.u32 %v2575, 7
    %v2577 = vsub.s32 %v79, %v2576
    %v2578 = vrot.slane %v2570, %v2577
    %v2579 = vlaneseq
    %v2580 = vshrl.u32 %v2579, 7
    %v2581 = vsub.s32 %v79, %v2580
    %v2582 = vrot.slane %v2572, %v2581
    %vm2583 = vcmask 1041409
    %v2584 = vsel %vm2583, %v2582, %v2578
    %vm2586 = vcmask 58368
    %2587 = vst.msk [vmem:[#allocation2] sm:$0x3] %vm2586, %v2584
    %v2588 = vld [vmem:[%s2] sm:$0xff]
    %v2589 = vld [vmem:[%s2 + $0x8] sm:$0xff]
    %v2590 = vmul.f32 %v2563, %v2588
    %v2591 = vmul.f32 %v2564, %v2589
    %2592 = vadd.xlane.f32.xlu0 %v2590
    %v2593 = vpop.xlane.xlu0 %2592
    %2594 = vadd.xlane.f32.xlu0 %v2591
    %v2595 = vpop.xlane.xlu0 %2594
    %v2598 = vlaneseq
    %v2599 = vshrl.u32 %v2598, 7
    %v2600 = vsub.s32 %v79, %v2599
    %v2601 = vrot.slane %v2593, %v2600
    %v2602 = vlaneseq
    %v2603 = vshrl.u32 %v2602, 7
    %v2604 = vsub.s32 %v79, %v2603
    %v2605 = vrot.slane %v2595, %v2604
    %v2606 = vsel %vm2583, %v2605, %v2601
    %2608 = vst.msk [vmem:[#allocation4] sm:$0x3] %vm2586, %v2606
    // Predicated region
    $region90: #{sasrec_forward.1} parent=1 // pred_check
      _
    $region91: #{sasrec_forward.1} parent=1 // pred_check_branch
      %2610 = sbr.rel (0) target = $region93
    $region92: #{sasrec_forward.1} parent=1 // pred_region
      %s2612 = ssub.s32 32, 32
      %2613 = vsyncadd [#allocation3], %s2612
      %s2615 = sshll.u32 [#allocation2], 4
      %s2616 = int_to_ptr.vmem [resolvable:$true] %s2615
      %2618 = dma.vmem_to_hbm [thread:$0]  %s2616, 32, %s22, [#allocation3]
    $region93: #{sasrec_forward.1} parent=1 // pred_fallthru
      _
    // Predicated region
    $region94: #{sasrec_forward.1} parent=1 // pred_check
      _
    $region95: #{sasrec_forward.1} parent=1 // pred_check_branch
      %2620 = sbr.rel (0) target = $region97
    $region96: #{sasrec_forward.1} parent=1 // pred_region
      %s2622 = ssub.s32 32, 32
      %2623 = vsyncadd [#allocation5], %s2622
      %s2625 = sshll.u32 [#allocation4], 4
      %s2626 = int_to_ptr.vmem [resolvable:$true] %s2625
      %2628 = dma.vmem_to_hbm [thread:$0]  %s2626, 32, %s23, [#allocation5]
    $region97: #{sasrec_forward.1} parent=1 // pred_fallthru
      _
    // Predicated region
    $region98: #{sasrec_forward.1} parent=1 // pred_check
      _
    $region99: #{sasrec_forward.1} parent=1 // pred_check_branch
      %2630 = sbr.rel (0) target = $region101
    $region100: #{sasrec_forward.1} parent=1 // pred_region
      %2631 = dma.done [#allocation3], 32
    $region101: #{sasrec_forward.1} parent=1 // pred_fallthru
      _
    // Predicated region
    $region102: #{sasrec_forward.1} parent=1 // pred_check
      _
    $region103: #{sasrec_forward.1} parent=1 // pred_check_branch
      %2633 = sbr.rel (0) target = $region105
    $region104: #{sasrec_forward.1} parent=1 // pred_region
      %2634 = dma.done [#allocation5], 32
    $region105: #{sasrec_forward.1} parent=1 // pred_fallthru
      _
    %2635 = vsyncpa [#allocation3], 1
    %2636 = vsyncpa [#allocation5], 1

</llo_original>
